<compile_context>
chip_gen: v7x
topology: tpu7x:2x2x1
jax: 0.10.0
libtpu: 0.0.40
codegen_flags: <defaults>
</compile_context>

<pallas_src>
import functools

import numpy as np

import jax
import jax.numpy as jnp
from jax.experimental import pallas as pl
from jax.experimental.pallas import tpu as pltpu

_BN_EPS = 1e-5
_SLOPE = 0.2


# ----------------------------------------------------------------------------
# Static helpers (run at trace time)
# ----------------------------------------------------------------------------
def _tap_geometry(k):
    # input coordinate needed by tap k of a 4-wide stride-2 pad-1 conv:
    #   2*o + k - 1 = 2*(o + f) + p   with parity p and half-grid shift f.
    p = (k + 1) % 2
    f = (k - 1 - p) // 2          # k=0 -> -1, k=1 -> 0, k=2 -> 0, k=3 -> +1
    return p, f


def _group_perm_np(batch, h, w):
    """Q (M, M) with Y_plain @ Q = Y parity-grouped.

    plain col   = (b*h + y)*w + x
    grouped col = (((ph*2+pw)*batch + b)*(h//2) + iy)*(w//2) + ix,
                  y = 2*iy + ph, x = 2*ix + pw.
    """
    m = batch * h * w
    q = np.zeros((m, m), np.float32)
    hh, wh = h // 2, w // 2
    for ph in range(2):
        for pw in range(2):
            for b in range(batch):
                for iy in range(hh):
                    for ix in range(wh):
                        gcol = (((ph * 2 + pw) * batch + b) * hh + iy) * wh + ix
                        pcol = (b * h + 2 * iy + ph) * w + 2 * ix + pw
                        q[pcol, gcol] = 1.0
    return q


# ----------------------------------------------------------------------------
# In-kernel building blocks
# ----------------------------------------------------------------------------
def _conv_taps(planes, batch, ho, wo):
    """Patch matrix (16*Cin, batch*ho*wo) of a 4x4 / stride-2 / pad-1 conv.

    planes[ph][pw]: (Cin, batch*ho*wo) bf16 parity plane of the layer input
    (input grid (2*ho)x(2*wo)); plane columns are ordered (b, ih, jw).
    A tap is a constant lane shift of one plane plus a border mask.
    """
    mq = batch * ho * wo
    lwo = wo.bit_length() - 1
    col = jax.lax.broadcasted_iota(jnp.int32, (1, mq), 1)
    wo_idx = col & (wo - 1)
    ho_idx = (col >> lwo) & (ho - 1)

    taps = []
    for kh in range(4):
        ph, fh = _tap_geometry(kh)
        for kw in range(4):
            pw, fw = _tap_geometry(kw)
            plane = planes[ph][pw]
            s = (fh * wo + fw) % mq
            if s:
                rolled = jnp.concatenate([plane[:, s:], plane[:, :s]], axis=1)
            else:
                rolled = plane
            if fh == 0 and fw == 0:
                taps.append(rolled)
                continue
            valid = None
            if fh != 0:
                h = ho_idx + fh
                valid = (h >= 0) & (h < ho)
            if fw != 0:
                w = wo_idx + fw
                vw = (w >= 0) & (w < wo)
                valid = vw if valid is None else (valid & vw)
            taps.append(jnp.where(valid, rolled, jnp.zeros_like(rolled)))
    return jnp.concatenate(taps, axis=0)


def _bn_lrelu(acc, gb_ref):
    # Training-mode BatchNorm (biased batch stats over the lane axis) + LReLU.
    mean = jnp.mean(acc, axis=1, keepdims=True)
    ex2 = jnp.mean(acc * acc, axis=1, keepdims=True)
    var = jnp.maximum(ex2 - mean * mean, 0.0)
    gamma = gb_ref[:, 0:1]
    beta = gb_ref[:, 1:2]
    y = (acc - mean) * jax.lax.rsqrt(var + _BN_EPS) * gamma + beta
    return jnp.maximum(y, _SLOPE * y)


# ----------------------------------------------------------------------------
# The fused discriminator kernel (64x64 input, 5 layers, 1 pallas_call)
# ----------------------------------------------------------------------------
def _disc_kernel(p1_ref, w1_ref, w2_ref, w3_ref, w4_ref, w5_ref,
                 gb2_ref, gb3_ref, gb4_ref, q2_ref, q3_ref, o_ref, *, batch):
    f32 = jnp.float32
    bf16 = jnp.bfloat16

    # ---- layer 1: conv(1 -> nh) + LeakyReLU; p1 columns are parity-grouped.
    a1 = jnp.dot(w1_ref[...], p1_ref[...], preferred_element_type=f32)
    a1 = jnp.maximum(a1, _SLOPE * a1).astype(bf16)          # (nh, 4*B*256)

    # ---- layer 2: conv(nh -> 2nh) + BN + LReLU (input grid 32x32)
    mq2 = batch * 16 * 16
    planes = [[a1[:, (2 * ph + pw) * mq2:(2 * ph + pw + 1) * mq2]
               for pw in range(2)] for ph in range(2)]
    p2 = _conv_taps(planes, batch, 16, 16)                   # (16nh, B*256)
    a2 = jnp.dot(w2_ref[...], p2, preferred_element_type=f32)
    a2 = _bn_lrelu(a2, gb2_ref).astype(bf16)                 # (2nh, B*256)
    a2g = jnp.dot(a2, q2_ref[...],
                  preferred_element_type=f32).astype(bf16)   # parity-grouped

    # ---- layer 3: conv(2nh -> 4nh) + BN + LReLU (input grid 16x16)
    mq3 = batch * 8 * 8
    planes = [[a2g[:, (2 * ph + pw) * mq3:(2 * ph + pw + 1) * mq3]
               for pw in range(2)] for ph in range(2)]
    p3 = _conv_taps(planes, batch, 8, 8)                     # (32nh, B*64)
    a3 = jnp.dot(w3_ref[...], p3, preferred_element_type=f32)
    a3 = _bn_lrelu(a3, gb3_ref).astype(bf16)                 # (4nh, B*64)
    a3g = jnp.dot(a3, q3_ref[...],
                  preferred_element_type=f32).astype(bf16)   # parity-grouped

    # ---- layer 4: conv(4nh -> 8nh) + BN + LReLU (input grid 8x8)
    mq4 = batch * 4 * 4
    planes = [[a3g[:, (2 * ph + pw) * mq4:(2 * ph + pw + 1) * mq4]
               for pw in range(2)] for ph in range(2)]
    p4 = _conv_taps(planes, batch, 4, 4)                     # (64nh, B*16)
    a4 = jnp.dot(w4_ref[...], p4, preferred_element_type=f32)
    a4 = _bn_lrelu(a4, gb4_ref)                              # (8nh, B*16) f32

    # ---- layer 5: 4x4 valid conv (8nh -> 1) + Sigmoid, per-sample reduce.
    w5 = w5_ref[...]                                         # (8nh, 16) f32
    logits = []
    for b in range(batch):
        chunk = a4[:, b * 16:(b + 1) * 16]                   # (8nh, 16)
        s = jnp.sum(chunk * w5, axis=0, keepdims=True)       # (1, 16)
        logits.append(jnp.sum(s, axis=1, keepdims=True))     # (1, 1)
    logit = jnp.concatenate(logits, axis=1)                  # (1, B)
    o_ref[...] = 1.0 / (1.0 + jnp.exp(-logit))


def _disc_call(p1, w1m, w2m, w3m, w4m, w5m, gb2, gb3, gb4, q2, q3, batch):
    def full(arr):
        shape = arr.shape
        return pl.BlockSpec(shape, lambda i, _s=shape: tuple(0 for _ in _s))

    args = [p1, w1m, w2m, w3m, w4m, w5m, gb2, gb3, gb4, q2, q3]
    return pl.pallas_call(
        functools.partial(_disc_kernel, batch=batch),
        out_shape=jax.ShapeDtypeStruct((1, batch), jnp.float32),
        grid=(1,),
        in_specs=[full(a) for a in args],
        out_specs=pl.BlockSpec((1, batch), lambda i: (0, 0)),
        compiler_params=pltpu.CompilerParams(
            dimension_semantics=("arbitrary",)),
    )(*args)


# ----------------------------------------------------------------------------
# Parameters & forward wrapper
# ----------------------------------------------------------------------------
def init_params(key, hidden_size):
    nh = hidden_size
    shapes = [
        (nh, 1, 4, 4),
        (nh * 2, nh, 4, 4),
        (nh * 4, nh * 2, 4, 4),
        (nh * 8, nh * 4, 4, 4),
        (1, nh * 8, 4, 4),
    ]
    keys = jax.random.split(key, 3 * len(shapes))
    params = {"w": [jax.random.normal(k, s, jnp.float32) * 0.02
                    for k, s in zip(keys[:5], shapes)]}
    # BatchNorm affine params (only layers 2..4 are used); slightly perturbed
    # from the PyTorch defaults so the affine path is actually exercised.
    params["gamma"] = [1.0 + 0.05 * jax.random.normal(k, (s[0],), jnp.float32)
                       for k, s in zip(keys[5:10], shapes)]
    params["beta"] = [0.05 * jax.random.normal(k, (s[0],), jnp.float32)
                      for k, s in zip(keys[10:], shapes)]
    return params


@jax.jit
def discriminator_forward(params, x):
    # x: (B, 1, 64, 64) float32 NCHW -> (B,) probabilities.
    w, g, b = params["w"], params["gamma"], params["beta"]
    assert x.shape[1:] == (1, 64, 64), x.shape
    batch = x.shape[0]
    nh = w[0].shape[0]

    def wmat(wi):
        # torch (Cout, Cin, kh, kw) -> (Cout, (kh, kw, ci)) matching the tap
        # concat order used inside the kernel.
        return jnp.transpose(wi, (0, 2, 3, 1)).reshape(
            wi.shape[0], -1).astype(jnp.bfloat16)

    def gb(i):
        return jnp.stack([g[i], b[i]], axis=1).astype(jnp.float32)  # (C, 2)

    # Layer-1 im2col (1-channel input) with parity-grouped column order
    # (qh, qw, b, oh, ow) so the kernel never has to regroup layer-1's output.
    xp = jnp.pad(x[:, 0], ((0, 0), (1, 1), (1, 1)))            # (B, 66, 66)
    cols = []
    for kh in range(4):
        for kw in range(4):
            cols.append(xp[:, kh:kh + 63:2, kw:kw + 63:2])     # (B, 32, 32)
    p1 = jnp.stack(cols, axis=0)                               # (16, B, 32, 32)
    p1 = p1.reshape(16, batch, 16, 2, 16, 2)
    p1 = jnp.transpose(p1, (0, 3, 5, 1, 2, 4)).reshape(16, 4 * batch * 256)
    p1 = p1.astype(jnp.bfloat16)

    # Constant parity-regroup permutations for the outputs of layers 2 and 3
    # (exact 0/1 matrices, applied on the MXU inside the kernel).
    q2 = jnp.asarray(_group_perm_np(batch, 16, 16), jnp.bfloat16)
    q3 = jnp.asarray(_group_perm_np(batch, 8, 8), jnp.bfloat16)

    out = _disc_call(
        p1, wmat(w[0]), wmat(w[1]), wmat(w[2]), wmat(w[3]),
        w[4].reshape(nh * 8, 16).astype(jnp.float32),
        gb(1), gb(2), gb(3), q2, q3, batch)
    # main(input).view(-1, 1).squeeze(1) -> (B,)
    return out.reshape(-1)


# ----------------------------------------------------------------------------
# Pure-JAX reference (f32) for a correctness check
# ----------------------------------------------------------------------------
def _reference_forward(params, x):
    w, g, b = params["w"], params["gamma"], params["beta"]
    a = x
    for i in range(4):
        a = jax.lax.conv_general_dilated(
            a, w[i], window_strides=(2, 2), padding=((1, 1), (1, 1)),
            dimension_numbers=("NCHW", "OIHW", "NCHW"))
        if i > 0:
            mean = jnp.mean(a, axis=(0, 2, 3), keepdims=True)
            var = jnp.mean((a - mean) ** 2, axis=(0, 2, 3), keepdims=True)
            a = (a - mean) / jnp.sqrt(var + _BN_EPS)
            a = a * g[i].reshape(1, -1, 1, 1) + b[i].reshape(1, -1, 1, 1)
        a = jnp.maximum(a, _SLOPE * a)
    a = jax.lax.conv_general_dilated(
        a, w[4], window_strides=(1, 1), padding="VALID",
        dimension_numbers=("NCHW", "OIHW", "NCHW"))
    return jax.nn.sigmoid(a).reshape(-1)


if __name__ == "__main__":
    key = jax.random.PRNGKey(0)
    k_params, k_x = jax.random.split(key)

    hidden_size = 8
    batch = 2
    # The final 4x4 valid conv requires a 64x64 input (64->32->16->8->4->1).
    x = jax.random.normal(k_x, (batch, 1, 64, 64), jnp.float32)

    params = init_params(k_params, hidden_size)
    out = jax.block_until_ready(discriminator_forward(params, x))

    assert out.shape == (batch,), out.shape
    assert bool(jnp.all(jnp.isfinite(out)))
    assert bool(jnp.all((out >= 0.0) & (out <= 1.0)))

    ref = _reference_forward(params, x)
    err = float(jnp.max(jnp.abs(out - ref)))
    assert err < 3e-2, f"mismatch vs f32 reference: max abs err = {err}"

    print("KERNEL_OK")
</pallas_src>

<mosaic_0001>
module attributes {stable_mosaic.version = 11 : i64} {
  func.func @_disc_kernel(%arg0: i32, %arg1: memref<16x2048xbf16, #tpu.memory_space<vmem>>, %arg2: memref<8x16xbf16, #tpu.memory_space<vmem>>, %arg3: memref<16x128xbf16, #tpu.memory_space<vmem>>, %arg4: memref<32x256xbf16, #tpu.memory_space<vmem>>, %arg5: memref<64x512xbf16, #tpu.memory_space<vmem>>, %arg6: memref<64x16xf32, #tpu.memory_space<vmem>>, %arg7: memref<16x2xf32, #tpu.memory_space<vmem>>, %arg8: memref<32x2xf32, #tpu.memory_space<vmem>>, %arg9: memref<64x2xf32, #tpu.memory_space<vmem>>, %arg10: memref<512x512xbf16, #tpu.memory_space<vmem>>, %arg11: memref<128x128xbf16, #tpu.memory_space<vmem>>, %arg12: memref<1x2xf32, #tpu.memory_space<vmem>>) attributes {dimension_semantics = [#tpu.dimension_semantics<arbitrary>], iteration_bounds = array<i64: 1>, scalar_prefetch = 0 : i64, scratch_operands = 0 : i64, tpu.core_type = #tpu.core_type<tc>, window_params = [{pipeline_mode = #tpu.pipeline_mode<synchronous>, transform_indices = @transform_0, window_bounds = array<i64: 16, 2048>}, {pipeline_mode = #tpu.pipeline_mode<synchronous>, transform_indices = @transform_1, window_bounds = array<i64: 8, 16>}, {pipeline_mode = #tpu.pipeline_mode<synchronous>, transform_indices = @transform_2, window_bounds = array<i64: 16, 128>}, {pipeline_mode = #tpu.pipeline_mode<synchronous>, transform_indices = @transform_3, window_bounds = array<i64: 32, 256>}, {pipeline_mode = #tpu.pipeline_mode<synchronous>, transform_indices = @transform_4, window_bounds = array<i64: 64, 512>}, {pipeline_mode = #tpu.pipeline_mode<synchronous>, transform_indices = @transform_5, window_bounds = array<i64: 64, 16>}, {pipeline_mode = #tpu.pipeline_mode<synchronous>, transform_indices = @transform_6, window_bounds = array<i64: 16, 2>}, {pipeline_mode = #tpu.pipeline_mode<synchronous>, transform_indices = @transform_7, window_bounds = array<i64: 32, 2>}, {pipeline_mode = #tpu.pipeline_mode<synchronous>, transform_indices = @transform_8, window_bounds = array<i64: 64, 2>}, {pipeline_mode = #tpu.pipeline_mode<synchronous>, transform_indices = @transform_9, window_bounds = array<i64: 512, 512>}, {pipeline_mode = #tpu.pipeline_mode<synchronous>, transform_indices = @transform_10, window_bounds = array<i64: 128, 128>}, {pipeline_mode = #tpu.pipeline_mode<synchronous>, transform_indices = @transform_11, window_bounds = array<i64: 1, 2>}]} {
    %c0 = arith.constant 0 : index
    %c0_0 = arith.constant 0 : index
    %0 = vector.load %arg2[%c0, %c0_0] : memref<8x16xbf16, #tpu.memory_space<vmem>>, vector<8x16xbf16>
    %c0_1 = arith.constant 0 : index
    %c0_2 = arith.constant 0 : index
    %1 = vector.load %arg1[%c0_1, %c0_2] : memref<16x2048xbf16, #tpu.memory_space<vmem>>, vector<16x2048xbf16>
    %cst = arith.constant dense<0.000000e+00> : vector<8x2048xf32>
    %2 = tpu.matmul %0, %1, %cst {dimension_numbers = #tpu.dot_dimension_numbers<[1], [0], [0], [1], [0, 0, 1, 1], [], []>} : vector<8x16xbf16>, vector<16x2048xbf16>, vector<8x2048xf32> -> vector<8x2048xf32>
    %cst_3 = arith.constant 2.000000e-01 : f32
    %3 = vector.broadcast %cst_3 : f32 to vector<8x2048xf32>
    %4 = arith.mulf %3, %2 : vector<8x2048xf32>
    %5 = arith.maximumf %2, %4 : vector<8x2048xf32>
    %6 = arith.truncf %5 : vector<8x2048xf32> to vector<8x2048xbf16>
    %7 = vector.extract_strided_slice %6 {offsets = [0, 0], sizes = [8, 512], strides = [1, 1]} : vector<8x2048xbf16> to vector<8x512xbf16>
    %8 = vector.extract_strided_slice %6 {offsets = [0, 512], sizes = [8, 512], strides = [1, 1]} : vector<8x2048xbf16> to vector<8x512xbf16>
    %9 = vector.extract_strided_slice %6 {offsets = [0, 1024], sizes = [8, 512], strides = [1, 1]} : vector<8x2048xbf16> to vector<8x512xbf16>
    %10 = vector.extract_strided_slice %6 {offsets = [0, 1536], sizes = [8, 512], strides = [1, 1]} : vector<8x2048xbf16> to vector<8x512xbf16>
    %11 = tpu.iota {dimensions = array<i32: 1>} : vector<1x512xi32>
    %c15_i32 = arith.constant 15 : i32
    %12 = vector.broadcast %c15_i32 : i32 to vector<1x512xi32>
    %13 = arith.andi %11, %12 : vector<1x512xi32>
    %c4_i32 = arith.constant 4 : i32
    %14 = vector.broadcast %c4_i32 : i32 to vector<1x512xi32>
    %15 = arith.shrsi %11, %14 : vector<1x512xi32>
    %c15_i32_4 = arith.constant 15 : i32
    %16 = vector.broadcast %c15_i32_4 : i32 to vector<1x512xi32>
    %17 = arith.andi %15, %16 : vector<1x512xi32>
    %18 = vector.extract_strided_slice %10 {offsets = [0, 495], sizes = [8, 17], strides = [1, 1]} : vector<8x512xbf16> to vector<8x17xbf16>
    %19 = vector.extract_strided_slice %10 {offsets = [0, 0], sizes = [8, 495], strides = [1, 1]} : vector<8x512xbf16> to vector<8x495xbf16>
    %20 = tpu.concatenate %18, %19 in 1 : vector<8x17xbf16>, vector<8x495xbf16> -> vector<8x512xbf16>
    %c-1_i32 = arith.constant -1 : i32
    %21 = vector.broadcast %c-1_i32 : i32 to vector<1x512xi32>
    %22 = arith.addi %17, %21 : vector<1x512xi32>
    %c0_i32 = arith.constant 0 : i32
    %23 = vector.broadcast %c0_i32 : i32 to vector<1x512xi32>
    %24 = arith.cmpi sge, %22, %23 : vector<1x512xi32>
    %c16_i32 = arith.constant 16 : i32
    %25 = vector.broadcast %c16_i32 : i32 to vector<1x512xi32>
    %26 = arith.cmpi slt, %22, %25 : vector<1x512xi32>
    %27 = arith.andi %24, %26 : vector<1x512xi1>
    %c-1_i32_5 = arith.constant -1 : i32
    %28 = vector.broadcast %c-1_i32_5 : i32 to vector<1x512xi32>
    %29 = arith.addi %13, %28 : vector<1x512xi32>
    %c0_i32_6 = arith.constant 0 : i32
    %30 = vector.broadcast %c0_i32_6 : i32 to vector<1x512xi32>
    %31 = arith.cmpi sge, %29, %30 : vector<1x512xi32>
    %c16_i32_7 = arith.constant 16 : i32
    %32 = vector.broadcast %c16_i32_7 : i32 to vector<1x512xi32>
    %33 = arith.cmpi slt, %29, %32 : vector<1x512xi32>
    %34 = arith.andi %31, %33 : vector<1x512xi1>
    %35 = arith.andi %27, %34 : vector<1x512xi1>
    %cst_8 = arith.constant 0.000000e+00 : bf16
    %36 = vector.broadcast %cst_8 : bf16 to vector<8x512xbf16>
    %37 = vector.shape_cast %35 : vector<1x512xi1> to vector<1x512xi1>
    %38 = vector.broadcast %37 : vector<1x512xi1> to vector<8x512xi1>
    %39 = arith.select %38, %20, %36 : vector<8x512xi1>, vector<8x512xbf16>
    %40 = vector.extract_strided_slice %9 {offsets = [0, 496], sizes = [8, 16], strides = [1, 1]} : vector<8x512xbf16> to vector<8x16xbf16>
    %41 = vector.extract_strided_slice %9 {offsets = [0, 0], sizes = [8, 496], strides = [1, 1]} : vector<8x512xbf16> to vector<8x496xbf16>
    %42 = tpu.concatenate %40, %41 in 1 : vector<8x16xbf16>, vector<8x496xbf16> -> vector<8x512xbf16>
    %c-1_i32_9 = arith.constant -1 : i32
    %43 = vector.broadcast %c-1_i32_9 : i32 to vector<1x512xi32>
    %44 = arith.addi %17, %43 : vector<1x512xi32>
    %c0_i32_10 = arith.constant 0 : i32
    %45 = vector.broadcast %c0_i32_10 : i32 to vector<1x512xi32>
    %46 = arith.cmpi sge, %44, %45 : vector<1x512xi32>
    %c16_i32_11 = arith.constant 16 : i32
    %47 = vector.broadcast %c16_i32_11 : i32 to vector<1x512xi32>
    %48 = arith.cmpi slt, %44, %47 : vector<1x512xi32>
    %49 = arith.andi %46, %48 : vector<1x512xi1>
    %cst_12 = arith.constant 0.000000e+00 : bf16
    %50 = vector.broadcast %cst_12 : bf16 to vector<8x512xbf16>
    %51 = vector.shape_cast %49 : vector<1x512xi1> to vector<1x512xi1>
    %52 = vector.broadcast %51 : vector<1x512xi1> to vector<8x512xi1>
    %53 = arith.select %52, %42, %50 : vector<8x512xi1>, vector<8x512xbf16>
    %54 = vector.extract_strided_slice %10 {offsets = [0, 496], sizes = [8, 16], strides = [1, 1]} : vector<8x512xbf16> to vector<8x16xbf16>
    %55 = vector.extract_strided_slice %10 {offsets = [0, 0], sizes = [8, 496], strides = [1, 1]} : vector<8x512xbf16> to vector<8x496xbf16>
    %56 = tpu.concatenate %54, %55 in 1 : vector<8x16xbf16>, vector<8x496xbf16> -> vector<8x512xbf16>
    %c-1_i32_13 = arith.constant -1 : i32
    %57 = vector.broadcast %c-1_i32_13 : i32 to vector<1x512xi32>
    %58 = arith.addi %17, %57 : vector<1x512xi32>
    %c0_i32_14 = arith.constant 0 : i32
    %59 = vector.broadcast %c0_i32_14 : i32 to vector<1x512xi32>
    %60 = arith.cmpi sge, %58, %59 : vector<1x512xi32>
    %c16_i32_15 = arith.constant 16 : i32
    %61 = vector.broadcast %c16_i32_15 : i32 to vector<1x512xi32>
    %62 = arith.cmpi slt, %58, %61 : vector<1x512xi32>
    %63 = arith.andi %60, %62 : vector<1x512xi1>
    %cst_16 = arith.constant 0.000000e+00 : bf16
    %64 = vector.broadcast %cst_16 : bf16 to vector<8x512xbf16>
    %65 = vector.shape_cast %63 : vector<1x512xi1> to vector<1x512xi1>
    %66 = vector.broadcast %65 : vector<1x512xi1> to vector<8x512xi1>
    %67 = arith.select %66, %56, %64 : vector<8x512xi1>, vector<8x512xbf16>
    %68 = vector.extract_strided_slice %9 {offsets = [0, 497], sizes = [8, 15], strides = [1, 1]} : vector<8x512xbf16> to vector<8x15xbf16>
    %69 = vector.extract_strided_slice %9 {offsets = [0, 0], sizes = [8, 497], strides = [1, 1]} : vector<8x512xbf16> to vector<8x497xbf16>
    %70 = tpu.concatenate %68, %69 in 1 : vector<8x15xbf16>, vector<8x497xbf16> -> vector<8x512xbf16>
    %c-1_i32_17 = arith.constant -1 : i32
    %71 = vector.broadcast %c-1_i32_17 : i32 to vector<1x512xi32>
    %72 = arith.addi %17, %71 : vector<1x512xi32>
    %c0_i32_18 = arith.constant 0 : i32
    %73 = vector.broadcast %c0_i32_18 : i32 to vector<1x512xi32>
    %74 = arith.cmpi sge, %72, %73 : vector<1x512xi32>
    %c16_i32_19 = arith.constant 16 : i32
    %75 = vector.broadcast %c16_i32_19 : i32 to vector<1x512xi32>
    %76 = arith.cmpi slt, %72, %75 : vector<1x512xi32>
    %77 = arith.andi %74, %76 : vector<1x512xi1>
    %c1_i32 = arith.constant 1 : i32
    %78 = vector.broadcast %c1_i32 : i32 to vector<1x512xi32>
    %79 = arith.addi %13, %78 : vector<1x512xi32>
    %c0_i32_20 = arith.constant 0 : i32
    %80 = vector.broadcast %c0_i32_20 : i32 to vector<1x512xi32>
    %81 = arith.cmpi sge, %79, %80 : vector<1x512xi32>
    %c16_i32_21 = arith.constant 16 : i32
    %82 = vector.broadcast %c16_i32_21 : i32 to vector<1x512xi32>
    %83 = arith.cmpi slt, %79, %82 : vector<1x512xi32>
    %84 = arith.andi %81, %83 : vector<1x512xi1>
    %85 = arith.andi %77, %84 : vector<1x512xi1>
    %cst_22 = arith.constant 0.000000e+00 : bf16
    %86 = vector.broadcast %cst_22 : bf16 to vector<8x512xbf16>
    %87 = vector.shape_cast %85 : vector<1x512xi1> to vector<1x512xi1>
    %88 = vector.broadcast %87 : vector<1x512xi1> to vector<8x512xi1>
    %89 = arith.select %88, %70, %86 : vector<8x512xi1>, vector<8x512xbf16>
    %90 = vector.extract_strided_slice %8 {offsets = [0, 511], sizes = [8, 1], strides = [1, 1]} : vector<8x512xbf16> to vector<8x1xbf16>
    %91 = vector.extract_strided_slice %8 {offsets = [0, 0], sizes = [8, 511], strides = [1, 1]} : vector<8x512xbf16> to vector<8x511xbf16>
    %92 = tpu.concatenate %90, %91 in 1 : vector<8x1xbf16>, vector<8x511xbf16> -> vector<8x512xbf16>
    %c-1_i32_23 = arith.constant -1 : i32
    %93 = vector.broadcast %c-1_i32_23 : i32 to vector<1x512xi32>
    %94 = arith.addi %13, %93 : vector<1x512xi32>
    %c0_i32_24 = arith.constant 0 : i32
    %95 = vector.broadcast %c0_i32_24 : i32 to vector<1x512xi32>
    %96 = arith.cmpi sge, %94, %95 : vector<1x512xi32>
    %c16_i32_25 = arith.constant 16 : i32
    %97 = vector.broadcast %c16_i32_25 : i32 to vector<1x512xi32>
    %98 = arith.cmpi slt, %94, %97 : vector<1x512xi32>
    %99 = arith.andi %96, %98 : vector<1x512xi1>
    %cst_26 = arith.constant 0.000000e+00 : bf16
    %100 = vector.broadcast %cst_26 : bf16 to vector<8x512xbf16>
    %101 = vector.shape_cast %99 : vector<1x512xi1> to vector<1x512xi1>
    %102 = vector.broadcast %101 : vector<1x512xi1> to vector<8x512xi1>
    %103 = arith.select %102, %92, %100 : vector<8x512xi1>, vector<8x512xbf16>
    %104 = vector.extract_strided_slice %7 {offsets = [0, 1], sizes = [8, 511], strides = [1, 1]} : vector<8x512xbf16> to vector<8x511xbf16>
    %105 = vector.extract_strided_slice %7 {offsets = [0, 0], sizes = [8, 1], strides = [1, 1]} : vector<8x512xbf16> to vector<8x1xbf16>
    %106 = tpu.concatenate %104, %105 in 1 : vector<8x511xbf16>, vector<8x1xbf16> -> vector<8x512xbf16>
    %c1_i32_27 = arith.constant 1 : i32
    %107 = vector.broadcast %c1_i32_27 : i32 to vector<1x512xi32>
    %108 = arith.addi %13, %107 : vector<1x512xi32>
    %c0_i32_28 = arith.constant 0 : i32
    %109 = vector.broadcast %c0_i32_28 : i32 to vector<1x512xi32>
    %110 = arith.cmpi sge, %108, %109 : vector<1x512xi32>
    %c16_i32_29 = arith.constant 16 : i32
    %111 = vector.broadcast %c16_i32_29 : i32 to vector<1x512xi32>
    %112 = arith.cmpi slt, %108, %111 : vector<1x512xi32>
    %113 = arith.andi %110, %112 : vector<1x512xi1>
    %cst_30 = arith.constant 0.000000e+00 : bf16
    %114 = vector.broadcast %cst_30 : bf16 to vector<8x512xbf16>
    %115 = vector.shape_cast %113 : vector<1x512xi1> to vector<1x512xi1>
    %116 = vector.broadcast %115 : vector<1x512xi1> to vector<8x512xi1>
    %117 = arith.select %116, %106, %114 : vector<8x512xi1>, vector<8x512xbf16>
    %118 = vector.extract_strided_slice %10 {offsets = [0, 511], sizes = [8, 1], strides = [1, 1]} : vector<8x512xbf16> to vector<8x1xbf16>
    %119 = vector.extract_strided_slice %10 {offsets = [0, 0], sizes = [8, 511], strides = [1, 1]} : vector<8x512xbf16> to vector<8x511xbf16>
    %120 = tpu.concatenate %118, %119 in 1 : vector<8x1xbf16>, vector<8x511xbf16> -> vector<8x512xbf16>
    %c-1_i32_31 = arith.constant -1 : i32
    %121 = vector.broadcast %c-1_i32_31 : i32 to vector<1x512xi32>
    %122 = arith.addi %13, %121 : vector<1x512xi32>
    %c0_i32_32 = arith.constant 0 : i32
    %123 = vector.broadcast %c0_i32_32 : i32 to vector<1x512xi32>
    %124 = arith.cmpi sge, %122, %123 : vector<1x512xi32>
    %c16_i32_33 = arith.constant 16 : i32
    %125 = vector.broadcast %c16_i32_33 : i32 to vector<1x512xi32>
    %126 = arith.cmpi slt, %122, %125 : vector<1x512xi32>
    %127 = arith.andi %124, %126 : vector<1x512xi1>
    %cst_34 = arith.constant 0.000000e+00 : bf16
    %128 = vector.broadcast %cst_34 : bf16 to vector<8x512xbf16>
    %129 = vector.shape_cast %127 : vector<1x512xi1> to vector<1x512xi1>
    %130 = vector.broadcast %129 : vector<1x512xi1> to vector<8x512xi1>
    %131 = arith.select %130, %120, %128 : vector<8x512xi1>, vector<8x512xbf16>
    %132 = vector.extract_strided_slice %9 {offsets = [0, 1], sizes = [8, 511], strides = [1, 1]} : vector<8x512xbf16> to vector<8x511xbf16>
    %133 = vector.extract_strided_slice %9 {offsets = [0, 0], sizes = [8, 1], strides = [1, 1]} : vector<8x512xbf16> to vector<8x1xbf16>
    %134 = tpu.concatenate %132, %133 in 1 : vector<8x511xbf16>, vector<8x1xbf16> -> vector<8x512xbf16>
    %c1_i32_35 = arith.constant 1 : i32
    %135 = vector.broadcast %c1_i32_35 : i32 to vector<1x512xi32>
    %136 = arith.addi %13, %135 : vector<1x512xi32>
    %c0_i32_36 = arith.constant 0 : i32
    %137 = vector.broadcast %c0_i32_36 : i32 to vector<1x512xi32>
    %138 = arith.cmpi sge, %136, %137 : vector<1x512xi32>
    %c16_i32_37 = arith.constant 16 : i32
    %139 = vector.broadcast %c16_i32_37 : i32 to vector<1x512xi32>
    %140 = arith.cmpi slt, %136, %139 : vector<1x512xi32>
    %141 = arith.andi %138, %140 : vector<1x512xi1>
    %cst_38 = arith.constant 0.000000e+00 : bf16
    %142 = vector.broadcast %cst_38 : bf16 to vector<8x512xbf16>
    %143 = vector.shape_cast %141 : vector<1x512xi1> to vector<1x512xi1>
    %144 = vector.broadcast %143 : vector<1x512xi1> to vector<8x512xi1>
    %145 = arith.select %144, %134, %142 : vector<8x512xi1>, vector<8x512xbf16>
    %146 = vector.extract_strided_slice %8 {offsets = [0, 15], sizes = [8, 497], strides = [1, 1]} : vector<8x512xbf16> to vector<8x497xbf16>
    %147 = vector.extract_strided_slice %8 {offsets = [0, 0], sizes = [8, 15], strides = [1, 1]} : vector<8x512xbf16> to vector<8x15xbf16>
    %148 = tpu.concatenate %146, %147 in 1 : vector<8x497xbf16>, vector<8x15xbf16> -> vector<8x512xbf16>
    %c1_i32_39 = arith.constant 1 : i32
    %149 = vector.broadcast %c1_i32_39 : i32 to vector<1x512xi32>
    %150 = arith.addi %17, %149 : vector<1x512xi32>
    %c0_i32_40 = arith.constant 0 : i32
    %151 = vector.broadcast %c0_i32_40 : i32 to vector<1x512xi32>
    %152 = arith.cmpi sge, %150, %151 : vector<1x512xi32>
    %c16_i32_41 = arith.constant 16 : i32
    %153 = vector.broadcast %c16_i32_41 : i32 to vector<1x512xi32>
    %154 = arith.cmpi slt, %150, %153 : vector<1x512xi32>
    %155 = arith.andi %152, %154 : vector<1x512xi1>
    %c-1_i32_42 = arith.constant -1 : i32
    %156 = vector.broadcast %c-1_i32_42 : i32 to vector<1x512xi32>
    %157 = arith.addi %13, %156 : vector<1x512xi32>
    %c0_i32_43 = arith.constant 0 : i32
    %158 = vector.broadcast %c0_i32_43 : i32 to vector<1x512xi32>
    %159 = arith.cmpi sge, %157, %158 : vector<1x512xi32>
    %c16_i32_44 = arith.constant 16 : i32
    %160 = vector.broadcast %c16_i32_44 : i32 to vector<1x512xi32>
    %161 = arith.cmpi slt, %157, %160 : vector<1x512xi32>
    %162 = arith.andi %159, %161 : vector<1x512xi1>
    %163 = arith.andi %155, %162 : vector<1x512xi1>
    %cst_45 = arith.constant 0.000000e+00 : bf16
    %164 = vector.broadcast %cst_45 : bf16 to vector<8x512xbf16>
    %165 = vector.shape_cast %163 : vector<1x512xi1> to vector<1x512xi1>
    %166 = vector.broadcast %165 : vector<1x512xi1> to vector<8x512xi1>
    %167 = arith.select %166, %148, %164 : vector<8x512xi1>, vector<8x512xbf16>
    %168 = vector.extract_strided_slice %7 {offsets = [0, 16], sizes = [8, 496], strides = [1, 1]} : vector<8x512xbf16> to vector<8x496xbf16>
    %169 = vector.extract_strided_slice %7 {offsets = [0, 0], sizes = [8, 16], strides = [1, 1]} : vector<8x512xbf16> to vector<8x16xbf16>
    %170 = tpu.concatenate %168, %169 in 1 : vector<8x496xbf16>, vector<8x16xbf16> -> vector<8x512xbf16>
    %c1_i32_46 = arith.constant 1 : i32
    %171 = vector.broadcast %c1_i32_46 : i32 to vector<1x512xi32>
    %172 = arith.addi %17, %171 : vector<1x512xi32>
    %c0_i32_47 = arith.constant 0 : i32
    %173 = vector.broadcast %c0_i32_47 : i32 to vector<1x512xi32>
    %174 = arith.cmpi sge, %172, %173 : vector<1x512xi32>
    %c16_i32_48 = arith.constant 16 : i32
    %175 = vector.broadcast %c16_i32_48 : i32 to vector<1x512xi32>
    %176 = arith.cmpi slt, %172, %175 : vector<1x512xi32>
    %177 = arith.andi %174, %176 : vector<1x512xi1>
    %cst_49 = arith.constant 0.000000e+00 : bf16
    %178 = vector.broadcast %cst_49 : bf16 to vector<8x512xbf16>
    %179 = vector.shape_cast %177 : vector<1x512xi1> to vector<1x512xi1>
    %180 = vector.broadcast %179 : vector<1x512xi1> to vector<8x512xi1>
    %181 = arith.select %180, %170, %178 : vector<8x512xi1>, vector<8x512xbf16>
    %182 = vector.extract_strided_slice %8 {offsets = [0, 16], sizes = [8, 496], strides = [1, 1]} : vector<8x512xbf16> to vector<8x496xbf16>
    %183 = vector.extract_strided_slice %8 {offsets = [0, 0], sizes = [8, 16], strides = [1, 1]} : vector<8x512xbf16> to vector<8x16xbf16>
    %184 = tpu.concatenate %182, %183 in 1 : vector<8x496xbf16>, vector<8x16xbf16> -> vector<8x512xbf16>
    %c1_i32_50 = arith.constant 1 : i32
    %185 = vector.broadcast %c1_i32_50 : i32 to vector<1x512xi32>
    %186 = arith.addi %17, %185 : vector<1x512xi32>
    %c0_i32_51 = arith.constant 0 : i32
    %187 = vector.broadcast %c0_i32_51 : i32 to vector<1x512xi32>
    %188 = arith.cmpi sge, %186, %187 : vector<1x512xi32>
    %c16_i32_52 = arith.constant 16 : i32
    %189 = vector.broadcast %c16_i32_52 : i32 to vector<1x512xi32>
    %190 = arith.cmpi slt, %186, %189 : vector<1x512xi32>
    %191 = arith.andi %188, %190 : vector<1x512xi1>
    %cst_53 = arith.constant 0.000000e+00 : bf16
    %192 = vector.broadcast %cst_53 : bf16 to vector<8x512xbf16>
    %193 = vector.shape_cast %191 : vector<1x512xi1> to vector<1x512xi1>
    %194 = vector.broadcast %193 : vector<1x512xi1> to vector<8x512xi1>
    %195 = arith.select %194, %184, %192 : vector<8x512xi1>, vector<8x512xbf16>
    %196 = vector.extract_strided_slice %7 {offsets = [0, 17], sizes = [8, 495], strides = [1, 1]} : vector<8x512xbf16> to vector<8x495xbf16>
    %197 = vector.extract_strided_slice %7 {offsets = [0, 0], sizes = [8, 17], strides = [1, 1]} : vector<8x512xbf16> to vector<8x17xbf16>
    %198 = tpu.concatenate %196, %197 in 1 : vector<8x495xbf16>, vector<8x17xbf16> -> vector<8x512xbf16>
    %c1_i32_54 = arith.constant 1 : i32
    %199 = vector.broadcast %c1_i32_54 : i32 to vector<1x512xi32>
    %200 = arith.addi %17, %199 : vector<1x512xi32>
    %c0_i32_55 = arith.constant 0 : i32
    %201 = vector.broadcast %c0_i32_55 : i32 to vector<1x512xi32>
    %202 = arith.cmpi sge, %200, %201 : vector<1x512xi32>
    %c16_i32_56 = arith.constant 16 : i32
    %203 = vector.broadcast %c16_i32_56 : i32 to vector<1x512xi32>
    %204 = arith.cmpi slt, %200, %203 : vector<1x512xi32>
    %205 = arith.andi %202, %204 : vector<1x512xi1>
    %c1_i32_57 = arith.constant 1 : i32
    %206 = vector.broadcast %c1_i32_57 : i32 to vector<1x512xi32>
    %207 = arith.addi %13, %206 : vector<1x512xi32>
    %c0_i32_58 = arith.constant 0 : i32
    %208 = vector.broadcast %c0_i32_58 : i32 to vector<1x512xi32>
    %209 = arith.cmpi sge, %207, %208 : vector<1x512xi32>
    %c16_i32_59 = arith.constant 16 : i32
    %210 = vector.broadcast %c16_i32_59 : i32 to vector<1x512xi32>
    %211 = arith.cmpi slt, %207, %210 : vector<1x512xi32>
    %212 = arith.andi %209, %211 : vector<1x512xi1>
    %213 = arith.andi %205, %212 : vector<1x512xi1>
    %cst_60 = arith.constant 0.000000e+00 : bf16
    %214 = vector.broadcast %cst_60 : bf16 to vector<8x512xbf16>
    %215 = vector.shape_cast %213 : vector<1x512xi1> to vector<1x512xi1>
    %216 = vector.broadcast %215 : vector<1x512xi1> to vector<8x512xi1>
    %217 = arith.select %216, %198, %214 : vector<8x512xi1>, vector<8x512xbf16>
    %218 = tpu.concatenate %39, %53, %67, %89, %103, %7, %8, %117, %131, %9, %10, %145, %167, %181, %195, %217 in 0 : vector<8x512xbf16>, vector<8x512xbf16>, vector<8x512xbf16>, vector<8x512xbf16>, vector<8x512xbf16>, vector<8x512xbf16>, vector<8x512xbf16>, vector<8x512xbf16>, vector<8x512xbf16>, vector<8x512xbf16>, vector<8x512xbf16>, vector<8x512xbf16>, vector<8x512xbf16>, vector<8x512xbf16>, vector<8x512xbf16>, vector<8x512xbf16> -> vector<128x512xbf16>
    %c0_61 = arith.constant 0 : index
    %c0_62 = arith.constant 0 : index
    %219 = vector.load %arg3[%c0_61, %c0_62] : memref<16x128xbf16, #tpu.memory_space<vmem>>, vector<16x128xbf16>
    %cst_63 = arith.constant dense<0.000000e+00> : vector<16x512xf32>
    %220 = tpu.matmul %219, %218, %cst_63 {dimension_numbers = #tpu.dot_dimension_numbers<[1], [0], [0], [1], [0, 0, 1, 1], [], []>} : vector<16x128xbf16>, vector<128x512xbf16>, vector<16x512xf32> -> vector<16x512xf32>
    %cst_64 = arith.constant dense<0.000000e+00> : vector<16xf32>
    %221 = vector.multi_reduction <add>, %220, %cst_64 [1] : vector<16x512xf32> to vector<16xf32>
    %222 = vector.shape_cast %221 : vector<16xf32> to vector<16x1xf32>
    %cst_65 = arith.constant 5.120000e+02 : f32
    %223 = vector.broadcast %cst_65 : f32 to vector<16x1xf32>
    %224 = arith.divf %222, %223 : vector<16x1xf32>
    %225 = arith.mulf %220, %220 : vector<16x512xf32>
    %cst_66 = arith.constant dense<0.000000e+00> : vector<16xf32>
    %226 = vector.multi_reduction <add>, %225, %cst_66 [1] : vector<16x512xf32> to vector<16xf32>
    %227 = vector.shape_cast %226 : vector<16xf32> to vector<16x1xf32>
    %cst_67 = arith.constant 5.120000e+02 : f32
    %228 = vector.broadcast %cst_67 : f32 to vector<16x1xf32>
    %229 = arith.divf %227, %228 : vector<16x1xf32>
    %230 = arith.mulf %224, %224 : vector<16x1xf32>
    %231 = arith.subf %229, %230 : vector<16x1xf32>
    %cst_68 = arith.constant 0.000000e+00 : f32
    %232 = vector.broadcast %cst_68 : f32 to vector<16x1xf32>
    %233 = arith.maximumf %231, %232 : vector<16x1xf32>
    %c0_69 = arith.constant 0 : index
    %c0_70 = arith.constant 0 : index
    %234 = vector.load %arg7[%c0_69, %c0_70] : memref<16x2xf32, #tpu.memory_space<vmem>>, vector<16x1xf32>
    %c0_71 = arith.constant 0 : index
    %c1 = arith.constant 1 : index
    %235 = vector.load %arg7[%c0_71, %c1] : memref<16x2xf32, #tpu.memory_space<vmem>>, vector<16x1xf32>
    %236 = vector.broadcast %224 : vector<16x1xf32> to vector<16x512xf32>
    %237 = arith.subf %220, %236 : vector<16x512xf32>
    %cst_72 = arith.constant 9.99999974E-6 : f32
    %238 = vector.broadcast %cst_72 : f32 to vector<16x1xf32>
    %239 = arith.addf %233, %238 : vector<16x1xf32>
    %240 = math.rsqrt %239 : vector<16x1xf32>
    %241 = vector.broadcast %240 : vector<16x1xf32> to vector<16x512xf32>
    %242 = arith.mulf %237, %241 : vector<16x512xf32>
    %243 = vector.broadcast %234 : vector<16x1xf32> to vector<16x512xf32>
    %244 = arith.mulf %242, %243 : vector<16x512xf32>
    %245 = vector.broadcast %235 : vector<16x1xf32> to vector<16x512xf32>
    %246 = arith.addf %244, %245 : vector<16x512xf32>
    %cst_73 = arith.constant 2.000000e-01 : f32
    %247 = vector.broadcast %cst_73 : f32 to vector<16x512xf32>
    %248 = arith.mulf %247, %246 : vector<16x512xf32>
    %249 = arith.maximumf %246, %248 : vector<16x512xf32>
    %250 = arith.truncf %249 : vector<16x512xf32> to vector<16x512xbf16>
    %c0_74 = arith.constant 0 : index
    %c0_75 = arith.constant 0 : index
    %251 = vector.load %arg10[%c0_74, %c0_75] : memref<512x512xbf16, #tpu.memory_space<vmem>>, vector<512x512xbf16>
    %cst_76 = arith.constant dense<0.000000e+00> : vector<16x512xf32>
    %252 = tpu.matmul %250, %251, %cst_76 {dimension_numbers = #tpu.dot_dimension_numbers<[1], [0], [0], [1], [0, 0, 1, 1], [], []>} : vector<16x512xbf16>, vector<512x512xbf16>, vector<16x512xf32> -> vector<16x512xf32>
    %253 = arith.truncf %252 : vector<16x512xf32> to vector<16x512xbf16>
    %254 = vector.extract_strided_slice %253 {offsets = [0, 0], sizes = [16, 128], strides = [1, 1]} : vector<16x512xbf16> to vector<16x128xbf16>
    %255 = vector.extract_strided_slice %253 {offsets = [0, 128], sizes = [16, 128], strides = [1, 1]} : vector<16x512xbf16> to vector<16x128xbf16>
    %256 = vector.extract_strided_slice %253 {offsets = [0, 256], sizes = [16, 128], strides = [1, 1]} : vector<16x512xbf16> to vector<16x128xbf16>
    %257 = vector.extract_strided_slice %253 {offsets = [0, 384], sizes = [16, 128], strides = [1, 1]} : vector<16x512xbf16> to vector<16x128xbf16>
    %258 = tpu.iota {dimensions = array<i32: 1>} : vector<1x128xi32>
    %c7_i32 = arith.constant 7 : i32
    %259 = vector.broadcast %c7_i32 : i32 to vector<1x128xi32>
    %260 = arith.andi %258, %259 : vector<1x128xi32>
    %c3_i32 = arith.constant 3 : i32
    %261 = vector.broadcast %c3_i32 : i32 to vector<1x128xi32>
    %262 = arith.shrsi %258, %261 : vector<1x128xi32>
    %c7_i32_77 = arith.constant 7 : i32
    %263 = vector.broadcast %c7_i32_77 : i32 to vector<1x128xi32>
    %264 = arith.andi %262, %263 : vector<1x128xi32>
    %265 = vector.extract_strided_slice %257 {offsets = [0, 119], sizes = [16, 9], strides = [1, 1]} : vector<16x128xbf16> to vector<16x9xbf16>
    %266 = vector.extract_strided_slice %257 {offsets = [0, 0], sizes = [16, 119], strides = [1, 1]} : vector<16x128xbf16> to vector<16x119xbf16>
    %267 = tpu.concatenate %265, %266 in 1 : vector<16x9xbf16>, vector<16x119xbf16> -> vector<16x128xbf16>
    %c-1_i32_78 = arith.constant -1 : i32
    %268 = vector.broadcast %c-1_i32_78 : i32 to vector<1x128xi32>
    %269 = arith.addi %264, %268 : vector<1x128xi32>
    %c0_i32_79 = arith.constant 0 : i32
    %270 = vector.broadcast %c0_i32_79 : i32 to vector<1x128xi32>
    %271 = arith.cmpi sge, %269, %270 : vector<1x128xi32>
    %c8_i32 = arith.constant 8 : i32
    %272 = vector.broadcast %c8_i32 : i32 to vector<1x128xi32>
    %273 = arith.cmpi slt, %269, %272 : vector<1x128xi32>
    %274 = arith.andi %271, %273 : vector<1x128xi1>
    %c-1_i32_80 = arith.constant -1 : i32
    %275 = vector.broadcast %c-1_i32_80 : i32 to vector<1x128xi32>
    %276 = arith.addi %260, %275 : vector<1x128xi32>
    %c0_i32_81 = arith.constant 0 : i32
    %277 = vector.broadcast %c0_i32_81 : i32 to vector<1x128xi32>
    %278 = arith.cmpi sge, %276, %277 : vector<1x128xi32>
    %c8_i32_82 = arith.constant 8 : i32
    %279 = vector.broadcast %c8_i32_82 : i32 to vector<1x128xi32>
    %280 = arith.cmpi slt, %276, %279 : vector<1x128xi32>
    %281 = arith.andi %278, %280 : vector<1x128xi1>
    %282 = arith.andi %274, %281 : vector<1x128xi1>
    %cst_83 = arith.constant 0.000000e+00 : bf16
    %283 = vector.broadcast %cst_83 : bf16 to vector<16x128xbf16>
    %284 = vector.shape_cast %282 : vector<1x128xi1> to vector<1x128xi1>
    %285 = vector.broadcast %284 : vector<1x128xi1> to vector<16x128xi1>
    %286 = arith.select %285, %267, %283 : vector<16x128xi1>, vector<16x128xbf16>
    %287 = vector.extract_strided_slice %256 {offsets = [0, 120], sizes = [16, 8], strides = [1, 1]} : vector<16x128xbf16> to vector<16x8xbf16>
    %288 = vector.extract_strided_slice %256 {offsets = [0, 0], sizes = [16, 120], strides = [1, 1]} : vector<16x128xbf16> to vector<16x120xbf16>
    %289 = tpu.concatenate %287, %288 in 1 : vector<16x8xbf16>, vector<16x120xbf16> -> vector<16x128xbf16>
    %c-1_i32_84 = arith.constant -1 : i32
    %290 = vector.broadcast %c-1_i32_84 : i32 to vector<1x128xi32>
    %291 = arith.addi %264, %290 : vector<1x128xi32>
    %c0_i32_85 = arith.constant 0 : i32
    %292 = vector.broadcast %c0_i32_85 : i32 to vector<1x128xi32>
    %293 = arith.cmpi sge, %291, %292 : vector<1x128xi32>
    %c8_i32_86 = arith.constant 8 : i32
    %294 = vector.broadcast %c8_i32_86 : i32 to vector<1x128xi32>
    %295 = arith.cmpi slt, %291, %294 : vector<1x128xi32>
    %296 = arith.andi %293, %295 : vector<1x128xi1>
    %cst_87 = arith.constant 0.000000e+00 : bf16
    %297 = vector.broadcast %cst_87 : bf16 to vector<16x128xbf16>
    %298 = vector.shape_cast %296 : vector<1x128xi1> to vector<1x128xi1>
    %299 = vector.broadcast %298 : vector<1x128xi1> to vector<16x128xi1>
    %300 = arith.select %299, %289, %297 : vector<16x128xi1>, vector<16x128xbf16>
    %301 = vector.extract_strided_slice %257 {offsets = [0, 120], sizes = [16, 8], strides = [1, 1]} : vector<16x128xbf16> to vector<16x8xbf16>
    %302 = vector.extract_strided_slice %257 {offsets = [0, 0], sizes = [16, 120], strides = [1, 1]} : vector<16x128xbf16> to vector<16x120xbf16>
    %303 = tpu.concatenate %301, %302 in 1 : vector<16x8xbf16>, vector<16x120xbf16> -> vector<16x128xbf16>
    %c-1_i32_88 = arith.constant -1 : i32
    %304 = vector.broadcast %c-1_i32_88 : i32 to vector<1x128xi32>
    %305 = arith.addi %264, %304 : vector<1x128xi32>
    %c0_i32_89 = arith.constant 0 : i32
    %306 = vector.broadcast %c0_i32_89 : i32 to vector<1x128xi32>
    %307 = arith.cmpi sge, %305, %306 : vector<1x128xi32>
    %c8_i32_90 = arith.constant 8 : i32
    %308 = vector.broadcast %c8_i32_90 : i32 to vector<1x128xi32>
    %309 = arith.cmpi slt, %305, %308 : vector<1x128xi32>
    %310 = arith.andi %307, %309 : vector<1x128xi1>
    %cst_91 = arith.constant 0.000000e+00 : bf16
    %311 = vector.broadcast %cst_91 : bf16 to vector<16x128xbf16>
    %312 = vector.shape_cast %310 : vector<1x128xi1> to vector<1x128xi1>
    %313 = vector.broadcast %312 : vector<1x128xi1> to vector<16x128xi1>
    %314 = arith.select %313, %303, %311 : vector<16x128xi1>, vector<16x128xbf16>
    %315 = vector.extract_strided_slice %256 {offsets = [0, 121], sizes = [16, 7], strides = [1, 1]} : vector<16x128xbf16> to vector<16x7xbf16>
    %316 = vector.extract_strided_slice %256 {offsets = [0, 0], sizes = [16, 121], strides = [1, 1]} : vector<16x128xbf16> to vector<16x121xbf16>
    %317 = tpu.concatenate %315, %316 in 1 : vector<16x7xbf16>, vector<16x121xbf16> -> vector<16x128xbf16>
    %c-1_i32_92 = arith.constant -1 : i32
    %318 = vector.broadcast %c-1_i32_92 : i32 to vector<1x128xi32>
    %319 = arith.addi %264, %318 : vector<1x128xi32>
    %c0_i32_93 = arith.constant 0 : i32
    %320 = vector.broadcast %c0_i32_93 : i32 to vector<1x128xi32>
    %321 = arith.cmpi sge, %319, %320 : vector<1x128xi32>
    %c8_i32_94 = arith.constant 8 : i32
    %322 = vector.broadcast %c8_i32_94 : i32 to vector<1x128xi32>
    %323 = arith.cmpi slt, %319, %322 : vector<1x128xi32>
    %324 = arith.andi %321, %323 : vector<1x128xi1>
    %c1_i32_95 = arith.constant 1 : i32
    %325 = vector.broadcast %c1_i32_95 : i32 to vector<1x128xi32>
    %326 = arith.addi %260, %325 : vector<1x128xi32>
    %c0_i32_96 = arith.constant 0 : i32
    %327 = vector.broadcast %c0_i32_96 : i32 to vector<1x128xi32>
    %328 = arith.cmpi sge, %326, %327 : vector<1x128xi32>
    %c8_i32_97 = arith.constant 8 : i32
    %329 = vector.broadcast %c8_i32_97 : i32 to vector<1x128xi32>
    %330 = arith.cmpi slt, %326, %329 : vector<1x128xi32>
    %331 = arith.andi %328, %330 : vector<1x128xi1>
    %332 = arith.andi %324, %331 : vector<1x128xi1>
    %cst_98 = arith.constant 0.000000e+00 : bf16
    %333 = vector.broadcast %cst_98 : bf16 to vector<16x128xbf16>
    %334 = vector.shape_cast %332 : vector<1x128xi1> to vector<1x128xi1>
    %335 = vector.broadcast %334 : vector<1x128xi1> to vector<16x128xi1>
    %336 = arith.select %335, %317, %333 : vector<16x128xi1>, vector<16x128xbf16>
    %337 = vector.extract_strided_slice %255 {offsets = [0, 127], sizes = [16, 1], strides = [1, 1]} : vector<16x128xbf16> to vector<16x1xbf16>
    %338 = vector.extract_strided_slice %255 {offsets = [0, 0], sizes = [16, 127], strides = [1, 1]} : vector<16x128xbf16> to vector<16x127xbf16>
    %339 = tpu.concatenate %337, %338 in 1 : vector<16x1xbf16>, vector<16x127xbf16> -> vector<16x128xbf16>
    %c-1_i32_99 = arith.constant -1 : i32
    %340 = vector.broadcast %c-1_i32_99 : i32 to vector<1x128xi32>
    %341 = arith.addi %260, %340 : vector<1x128xi32>
    %c0_i32_100 = arith.constant 0 : i32
    %342 = vector.broadcast %c0_i32_100 : i32 to vector<1x128xi32>
    %343 = arith.cmpi sge, %341, %342 : vector<1x128xi32>
    %c8_i32_101 = arith.constant 8 : i32
    %344 = vector.broadcast %c8_i32_101 : i32 to vector<1x128xi32>
    %345 = arith.cmpi slt, %341, %344 : vector<1x128xi32>
    %346 = arith.andi %343, %345 : vector<1x128xi1>
    %cst_102 = arith.constant 0.000000e+00 : bf16
    %347 = vector.broadcast %cst_102 : bf16 to vector<16x128xbf16>
    %348 = vector.shape_cast %346 : vector<1x128xi1> to vector<1x128xi1>
    %349 = vector.broadcast %348 : vector<1x128xi1> to vector<16x128xi1>
    %350 = arith.select %349, %339, %347 : vector<16x128xi1>, vector<16x128xbf16>
    %351 = vector.extract_strided_slice %254 {offsets = [0, 1], sizes = [16, 127], strides = [1, 1]} : vector<16x128xbf16> to vector<16x127xbf16>
    %352 = vector.extract_strided_slice %254 {offsets = [0, 0], sizes = [16, 1], strides = [1, 1]} : vector<16x128xbf16> to vector<16x1xbf16>
    %353 = tpu.concatenate %351, %352 in 1 : vector<16x127xbf16>, vector<16x1xbf16> -> vector<16x128xbf16>
    %c1_i32_103 = arith.constant 1 : i32
    %354 = vector.broadcast %c1_i32_103 : i32 to vector<1x128xi32>
    %355 = arith.addi %260, %354 : vector<1x128xi32>
    %c0_i32_104 = arith.constant 0 : i32
    %356 = vector.broadcast %c0_i32_104 : i32 to vector<1x128xi32>
    %357 = arith.cmpi sge, %355, %356 : vector<1x128xi32>
    %c8_i32_105 = arith.constant 8 : i32
    %358 = vector.broadcast %c8_i32_105 : i32 to vector<1x128xi32>
    %359 = arith.cmpi slt, %355, %358 : vector<1x128xi32>
    %360 = arith.andi %357, %359 : vector<1x128xi1>
    %cst_106 = arith.constant 0.000000e+00 : bf16
    %361 = vector.broadcast %cst_106 : bf16 to vector<16x128xbf16>
    %362 = vector.shape_cast %360 : vector<1x128xi1> to vector<1x128xi1>
    %363 = vector.broadcast %362 : vector<1x128xi1> to vector<16x128xi1>
    %364 = arith.select %363, %353, %361 : vector<16x128xi1>, vector<16x128xbf16>
    %365 = vector.extract_strided_slice %257 {offsets = [0, 127], sizes = [16, 1], strides = [1, 1]} : vector<16x128xbf16> to vector<16x1xbf16>
    %366 = vector.extract_strided_slice %257 {offsets = [0, 0], sizes = [16, 127], strides = [1, 1]} : vector<16x128xbf16> to vector<16x127xbf16>
    %367 = tpu.concatenate %365, %366 in 1 : vector<16x1xbf16>, vector<16x127xbf16> -> vector<16x128xbf16>
    %c-1_i32_107 = arith.constant -1 : i32
    %368 = vector.broadcast %c-1_i32_107 : i32 to vector<1x128xi32>
    %369 = arith.addi %260, %368 : vector<1x128xi32>
    %c0_i32_108 = arith.constant 0 : i32
    %370 = vector.broadcast %c0_i32_108 : i32 to vector<1x128xi32>
    %371 = arith.cmpi sge, %369, %370 : vector<1x128xi32>
    %c8_i32_109 = arith.constant 8 : i32
    %372 = vector.broadcast %c8_i32_109 : i32 to vector<1x128xi32>
    %373 = arith.cmpi slt, %369, %372 : vector<1x128xi32>
    %374 = arith.andi %371, %373 : vector<1x128xi1>
    %cst_110 = arith.constant 0.000000e+00 : bf16
    %375 = vector.broadcast %cst_110 : bf16 to vector<16x128xbf16>
    %376 = vector.shape_cast %374 : vector<1x128xi1> to vector<1x128xi1>
    %377 = vector.broadcast %376 : vector<1x128xi1> to vector<16x128xi1>
    %378 = arith.select %377, %367, %375 : vector<16x128xi1>, vector<16x128xbf16>
    %379 = vector.extract_strided_slice %256 {offsets = [0, 1], sizes = [16, 127], strides = [1, 1]} : vector<16x128xbf16> to vector<16x127xbf16>
    %380 = vector.extract_strided_slice %256 {offsets = [0, 0], sizes = [16, 1], strides = [1, 1]} : vector<16x128xbf16> to vector<16x1xbf16>
    %381 = tpu.concatenate %379, %380 in 1 : vector<16x127xbf16>, vector<16x1xbf16> -> vector<16x128xbf16>
    %c1_i32_111 = arith.constant 1 : i32
    %382 = vector.broadcast %c1_i32_111 : i32 to vector<1x128xi32>
    %383 = arith.addi %260, %382 : vector<1x128xi32>
    %c0_i32_112 = arith.constant 0 : i32
    %384 = vector.broadcast %c0_i32_112 : i32 to vector<1x128xi32>
    %385 = arith.cmpi sge, %383, %384 : vector<1x128xi32>
    %c8_i32_113 = arith.constant 8 : i32
    %386 = vector.broadcast %c8_i32_113 : i32 to vector<1x128xi32>
    %387 = arith.cmpi slt, %383, %386 : vector<1x128xi32>
    %388 = arith.andi %385, %387 : vector<1x128xi1>
    %cst_114 = arith.constant 0.000000e+00 : bf16
    %389 = vector.broadcast %cst_114 : bf16 to vector<16x128xbf16>
    %390 = vector.shape_cast %388 : vector<1x128xi1> to vector<1x128xi1>
    %391 = vector.broadcast %390 : vector<1x128xi1> to vector<16x128xi1>
    %392 = arith.select %391, %381, %389 : vector<16x128xi1>, vector<16x128xbf16>
    %393 = vector.extract_strided_slice %255 {offsets = [0, 7], sizes = [16, 121], strides = [1, 1]} : vector<16x128xbf16> to vector<16x121xbf16>
    %394 = vector.extract_strided_slice %255 {offsets = [0, 0], sizes = [16, 7], strides = [1, 1]} : vector<16x128xbf16> to vector<16x7xbf16>
    %395 = tpu.concatenate %393, %394 in 1 : vector<16x121xbf16>, vector<16x7xbf16> -> vector<16x128xbf16>
    %c1_i32_115 = arith.constant 1 : i32
    %396 = vector.broadcast %c1_i32_115 : i32 to vector<1x128xi32>
    %397 = arith.addi %264, %396 : vector<1x128xi32>
    %c0_i32_116 = arith.constant 0 : i32
    %398 = vector.broadcast %c0_i32_116 : i32 to vector<1x128xi32>
    %399 = arith.cmpi sge, %397, %398 : vector<1x128xi32>
    %c8_i32_117 = arith.constant 8 : i32
    %400 = vector.broadcast %c8_i32_117 : i32 to vector<1x128xi32>
    %401 = arith.cmpi slt, %397, %400 : vector<1x128xi32>
    %402 = arith.andi %399, %401 : vector<1x128xi1>
    %c-1_i32_118 = arith.constant -1 : i32
    %403 = vector.broadcast %c-1_i32_118 : i32 to vector<1x128xi32>
    %404 = arith.addi %260, %403 : vector<1x128xi32>
    %c0_i32_119 = arith.constant 0 : i32
    %405 = vector.broadcast %c0_i32_119 : i32 to vector<1x128xi32>
    %406 = arith.cmpi sge, %404, %405 : vector<1x128xi32>
    %c8_i32_120 = arith.constant 8 : i32
    %407 = vector.broadcast %c8_i32_120 : i32 to vector<1x128xi32>
    %408 = arith.cmpi slt, %404, %407 : vector<1x128xi32>
    %409 = arith.andi %406, %408 : vector<1x128xi1>
    %410 = arith.andi %402, %409 : vector<1x128xi1>
    %cst_121 = arith.constant 0.000000e+00 : bf16
    %411 = vector.broadcast %cst_121 : bf16 to vector<16x128xbf16>
    %412 = vector.shape_cast %410 : vector<1x128xi1> to vector<1x128xi1>
    %413 = vector.broadcast %412 : vector<1x128xi1> to vector<16x128xi1>
    %414 = arith.select %413, %395, %411 : vector<16x128xi1>, vector<16x128xbf16>
    %415 = vector.extract_strided_slice %254 {offsets = [0, 8], sizes = [16, 120], strides = [1, 1]} : vector<16x128xbf16> to vector<16x120xbf16>
    %416 = vector.extract_strided_slice %254 {offsets = [0, 0], sizes = [16, 8], strides = [1, 1]} : vector<16x128xbf16> to vector<16x8xbf16>
    %417 = tpu.concatenate %415, %416 in 1 : vector<16x120xbf16>, vector<16x8xbf16> -> vector<16x128xbf16>
    %c1_i32_122 = arith.constant 1 : i32
    %418 = vector.broadcast %c1_i32_122 : i32 to vector<1x128xi32>
    %419 = arith.addi %264, %418 : vector<1x128xi32>
    %c0_i32_123 = arith.constant 0 : i32
    %420 = vector.broadcast %c0_i32_123 : i32 to vector<1x128xi32>
    %421 = arith.cmpi sge, %419, %420 : vector<1x128xi32>
    %c8_i32_124 = arith.constant 8 : i32
    %422 = vector.broadcast %c8_i32_124 : i32 to vector<1x128xi32>
    %423 = arith.cmpi slt, %419, %422 : vector<1x128xi32>
    %424 = arith.andi %421, %423 : vector<1x128xi1>
    %cst_125 = arith.constant 0.000000e+00 : bf16
    %425 = vector.broadcast %cst_125 : bf16 to vector<16x128xbf16>
    %426 = vector.shape_cast %424 : vector<1x128xi1> to vector<1x128xi1>
    %427 = vector.broadcast %426 : vector<1x128xi1> to vector<16x128xi1>
    %428 = arith.select %427, %417, %425 : vector<16x128xi1>, vector<16x128xbf16>
    %429 = vector.extract_strided_slice %255 {offsets = [0, 8], sizes = [16, 120], strides = [1, 1]} : vector<16x128xbf16> to vector<16x120xbf16>
    %430 = vector.extract_strided_slice %255 {offsets = [0, 0], sizes = [16, 8], strides = [1, 1]} : vector<16x128xbf16> to vector<16x8xbf16>
    %431 = tpu.concatenate %429, %430 in 1 : vector<16x120xbf16>, vector<16x8xbf16> -> vector<16x128xbf16>
    %c1_i32_126 = arith.constant 1 : i32
    %432 = vector.broadcast %c1_i32_126 : i32 to vector<1x128xi32>
    %433 = arith.addi %264, %432 : vector<1x128xi32>
    %c0_i32_127 = arith.constant 0 : i32
    %434 = vector.broadcast %c0_i32_127 : i32 to vector<1x128xi32>
    %435 = arith.cmpi sge, %433, %434 : vector<1x128xi32>
    %c8_i32_128 = arith.constant 8 : i32
    %436 = vector.broadcast %c8_i32_128 : i32 to vector<1x128xi32>
    %437 = arith.cmpi slt, %433, %436 : vector<1x128xi32>
    %438 = arith.andi %435, %437 : vector<1x128xi1>
    %cst_129 = arith.constant 0.000000e+00 : bf16
    %439 = vector.broadcast %cst_129 : bf16 to vector<16x128xbf16>
    %440 = vector.shape_cast %438 : vector<1x128xi1> to vector<1x128xi1>
    %441 = vector.broadcast %440 : vector<1x128xi1> to vector<16x128xi1>
    %442 = arith.select %441, %431, %439 : vector<16x128xi1>, vector<16x128xbf16>
    %443 = vector.extract_strided_slice %254 {offsets = [0, 9], sizes = [16, 119], strides = [1, 1]} : vector<16x128xbf16> to vector<16x119xbf16>
    %444 = vector.extract_strided_slice %254 {offsets = [0, 0], sizes = [16, 9], strides = [1, 1]} : vector<16x128xbf16> to vector<16x9xbf16>
    %445 = tpu.concatenate %443, %444 in 1 : vector<16x119xbf16>, vector<16x9xbf16> -> vector<16x128xbf16>
    %c1_i32_130 = arith.constant 1 : i32
    %446 = vector.broadcast %c1_i32_130 : i32 to vector<1x128xi32>
    %447 = arith.addi %264, %446 : vector<1x128xi32>
    %c0_i32_131 = arith.constant 0 : i32
    %448 = vector.broadcast %c0_i32_131 : i32 to vector<1x128xi32>
    %449 = arith.cmpi sge, %447, %448 : vector<1x128xi32>
    %c8_i32_132 = arith.constant 8 : i32
    %450 = vector.broadcast %c8_i32_132 : i32 to vector<1x128xi32>
    %451 = arith.cmpi slt, %447, %450 : vector<1x128xi32>
    %452 = arith.andi %449, %451 : vector<1x128xi1>
    %c1_i32_133 = arith.constant 1 : i32
    %453 = vector.broadcast %c1_i32_133 : i32 to vector<1x128xi32>
    %454 = arith.addi %260, %453 : vector<1x128xi32>
    %c0_i32_134 = arith.constant 0 : i32
    %455 = vector.broadcast %c0_i32_134 : i32 to vector<1x128xi32>
    %456 = arith.cmpi sge, %454, %455 : vector<1x128xi32>
    %c8_i32_135 = arith.constant 8 : i32
    %457 = vector.broadcast %c8_i32_135 : i32 to vector<1x128xi32>
    %458 = arith.cmpi slt, %454, %457 : vector<1x128xi32>
    %459 = arith.andi %456, %458 : vector<1x128xi1>
    %460 = arith.andi %452, %459 : vector<1x128xi1>
    %cst_136 = arith.constant 0.000000e+00 : bf16
    %461 = vector.broadcast %cst_136 : bf16 to vector<16x128xbf16>
    %462 = vector.shape_cast %460 : vector<1x128xi1> to vector<1x128xi1>
    %463 = vector.broadcast %462 : vector<1x128xi1> to vector<16x128xi1>
    %464 = arith.select %463, %445, %461 : vector<16x128xi1>, vector<16x128xbf16>
    %465 = tpu.concatenate %286, %300, %314, %336, %350, %254, %255, %364, %378, %256, %257, %392, %414, %428, %442, %464 in 0 : vector<16x128xbf16>, vector<16x128xbf16>, vector<16x128xbf16>, vector<16x128xbf16>, vector<16x128xbf16>, vector<16x128xbf16>, vector<16x128xbf16>, vector<16x128xbf16>, vector<16x128xbf16>, vector<16x128xbf16>, vector<16x128xbf16>, vector<16x128xbf16>, vector<16x128xbf16>, vector<16x128xbf16>, vector<16x128xbf16>, vector<16x128xbf16> -> vector<256x128xbf16>
    %c0_137 = arith.constant 0 : index
    %c0_138 = arith.constant 0 : index
    %466 = vector.load %arg4[%c0_137, %c0_138] : memref<32x256xbf16, #tpu.memory_space<vmem>>, vector<32x256xbf16>
    %cst_139 = arith.constant dense<0.000000e+00> : vector<32x128xf32>
    %467 = tpu.matmul %466, %465, %cst_139 {dimension_numbers = #tpu.dot_dimension_numbers<[1], [0], [0], [1], [0, 0, 1, 1], [], []>} : vector<32x256xbf16>, vector<256x128xbf16>, vector<32x128xf32> -> vector<32x128xf32>
    %cst_140 = arith.constant dense<0.000000e+00> : vector<32xf32>
    %468 = vector.multi_reduction <add>, %467, %cst_140 [1] : vector<32x128xf32> to vector<32xf32>
    %469 = vector.shape_cast %468 : vector<32xf32> to vector<32x1xf32>
    %cst_141 = arith.constant 1.280000e+02 : f32
    %470 = vector.broadcast %cst_141 : f32 to vector<32x1xf32>
    %471 = arith.divf %469, %470 : vector<32x1xf32>
    %472 = arith.mulf %467, %467 : vector<32x128xf32>
    %cst_142 = arith.constant dense<0.000000e+00> : vector<32xf32>
    %473 = vector.multi_reduction <add>, %472, %cst_142 [1] : vector<32x128xf32> to vector<32xf32>
    %474 = vector.shape_cast %473 : vector<32xf32> to vector<32x1xf32>
    %cst_143 = arith.constant 1.280000e+02 : f32
    %475 = vector.broadcast %cst_143 : f32 to vector<32x1xf32>
    %476 = arith.divf %474, %475 : vector<32x1xf32>
    %477 = arith.mulf %471, %471 : vector<32x1xf32>
    %478 = arith.subf %476, %477 : vector<32x1xf32>
    %cst_144 = arith.constant 0.000000e+00 : f32
    %479 = vector.broadcast %cst_144 : f32 to vector<32x1xf32>
    %480 = arith.maximumf %478, %479 : vector<32x1xf32>
    %c0_145 = arith.constant 0 : index
    %c0_146 = arith.constant 0 : index
    %481 = vector.load %arg8[%c0_145, %c0_146] : memref<32x2xf32, #tpu.memory_space<vmem>>, vector<32x1xf32>
    %c0_147 = arith.constant 0 : index
    %c1_148 = arith.constant 1 : index
    %482 = vector.load %arg8[%c0_147, %c1_148] : memref<32x2xf32, #tpu.memory_space<vmem>>, vector<32x1xf32>
    %483 = vector.broadcast %471 : vector<32x1xf32> to vector<32x128xf32>
    %484 = arith.subf %467, %483 : vector<32x128xf32>
    %cst_149 = arith.constant 9.99999974E-6 : f32
    %485 = vector.broadcast %cst_149 : f32 to vector<32x1xf32>
    %486 = arith.addf %480, %485 : vector<32x1xf32>
    %487 = math.rsqrt %486 : vector<32x1xf32>
    %488 = vector.broadcast %487 : vector<32x1xf32> to vector<32x128xf32>
    %489 = arith.mulf %484, %488 : vector<32x128xf32>
    %490 = vector.broadcast %481 : vector<32x1xf32> to vector<32x128xf32>
    %491 = arith.mulf %489, %490 : vector<32x128xf32>
    %492 = vector.broadcast %482 : vector<32x1xf32> to vector<32x128xf32>
    %493 = arith.addf %491, %492 : vector<32x128xf32>
    %cst_150 = arith.constant 2.000000e-01 : f32
    %494 = vector.broadcast %cst_150 : f32 to vector<32x128xf32>
    %495 = arith.mulf %494, %493 : vector<32x128xf32>
    %496 = arith.maximumf %493, %495 : vector<32x128xf32>
    %497 = arith.truncf %496 : vector<32x128xf32> to vector<32x128xbf16>
    %c0_151 = arith.constant 0 : index
    %c0_152 = arith.constant 0 : index
    %498 = vector.load %arg11[%c0_151, %c0_152] : memref<128x128xbf16, #tpu.memory_space<vmem>>, vector<128x128xbf16>
    %cst_153 = arith.constant dense<0.000000e+00> : vector<32x128xf32>
    %499 = tpu.matmul %497, %498, %cst_153 {dimension_numbers = #tpu.dot_dimension_numbers<[1], [0], [0], [1], [0, 0, 1, 1], [], []>} : vector<32x128xbf16>, vector<128x128xbf16>, vector<32x128xf32> -> vector<32x128xf32>
    %500 = arith.truncf %499 : vector<32x128xf32> to vector<32x128xbf16>
    %501 = vector.extract_strided_slice %500 {offsets = [0, 0], sizes = [32, 32], strides = [1, 1]} : vector<32x128xbf16> to vector<32x32xbf16>
    %502 = vector.extract_strided_slice %500 {offsets = [0, 32], sizes = [32, 32], strides = [1, 1]} : vector<32x128xbf16> to vector<32x32xbf16>
    %503 = vector.extract_strided_slice %500 {offsets = [0, 64], sizes = [32, 32], strides = [1, 1]} : vector<32x128xbf16> to vector<32x32xbf16>
    %504 = vector.extract_strided_slice %500 {offsets = [0, 96], sizes = [32, 32], strides = [1, 1]} : vector<32x128xbf16> to vector<32x32xbf16>
    %505 = tpu.iota {dimensions = array<i32: 1>} : vector<1x32xi32>
    %c3_i32_154 = arith.constant 3 : i32
    %506 = vector.broadcast %c3_i32_154 : i32 to vector<1x32xi32>
    %507 = arith.andi %505, %506 : vector<1x32xi32>
    %c2_i32 = arith.constant 2 : i32
    %508 = vector.broadcast %c2_i32 : i32 to vector<1x32xi32>
    %509 = arith.shrsi %505, %508 : vector<1x32xi32>
    %c3_i32_155 = arith.constant 3 : i32
    %510 = vector.broadcast %c3_i32_155 : i32 to vector<1x32xi32>
    %511 = arith.andi %509, %510 : vector<1x32xi32>
    %512 = vector.extract_strided_slice %504 {offsets = [0, 27], sizes = [32, 5], strides = [1, 1]} : vector<32x32xbf16> to vector<32x5xbf16>
    %513 = vector.extract_strided_slice %504 {offsets = [0, 0], sizes = [32, 27], strides = [1, 1]} : vector<32x32xbf16> to vector<32x27xbf16>
    %514 = tpu.concatenate %512, %513 in 1 : vector<32x5xbf16>, vector<32x27xbf16> -> vector<32x32xbf16>
    %c-1_i32_156 = arith.constant -1 : i32
    %515 = vector.broadcast %c-1_i32_156 : i32 to vector<1x32xi32>
    %516 = arith.addi %511, %515 : vector<1x32xi32>
    %c0_i32_157 = arith.constant 0 : i32
    %517 = vector.broadcast %c0_i32_157 : i32 to vector<1x32xi32>
    %518 = arith.cmpi sge, %516, %517 : vector<1x32xi32>
    %c4_i32_158 = arith.constant 4 : i32
    %519 = vector.broadcast %c4_i32_158 : i32 to vector<1x32xi32>
    %520 = arith.cmpi slt, %516, %519 : vector<1x32xi32>
    %521 = arith.andi %518, %520 : vector<1x32xi1>
    %c-1_i32_159 = arith.constant -1 : i32
    %522 = vector.broadcast %c-1_i32_159 : i32 to vector<1x32xi32>
    %523 = arith.addi %507, %522 : vector<1x32xi32>
    %c0_i32_160 = arith.constant 0 : i32
    %524 = vector.broadcast %c0_i32_160 : i32 to vector<1x32xi32>
    %525 = arith.cmpi sge, %523, %524 : vector<1x32xi32>
    %c4_i32_161 = arith.constant 4 : i32
    %526 = vector.broadcast %c4_i32_161 : i32 to vector<1x32xi32>
    %527 = arith.cmpi slt, %523, %526 : vector<1x32xi32>
    %528 = arith.andi %525, %527 : vector<1x32xi1>
    %529 = arith.andi %521, %528 : vector<1x32xi1>
    %cst_162 = arith.constant 0.000000e+00 : bf16
    %530 = vector.broadcast %cst_162 : bf16 to vector<32x32xbf16>
    %531 = vector.shape_cast %529 : vector<1x32xi1> to vector<1x32xi1>
    %532 = vector.broadcast %531 : vector<1x32xi1> to vector<32x32xi1>
    %533 = arith.select %532, %514, %530 : vector<32x32xi1>, vector<32x32xbf16>
    %534 = vector.extract_strided_slice %503 {offsets = [0, 28], sizes = [32, 4], strides = [1, 1]} : vector<32x32xbf16> to vector<32x4xbf16>
    %535 = vector.extract_strided_slice %503 {offsets = [0, 0], sizes = [32, 28], strides = [1, 1]} : vector<32x32xbf16> to vector<32x28xbf16>
    %536 = tpu.concatenate %534, %535 in 1 : vector<32x4xbf16>, vector<32x28xbf16> -> vector<32x32xbf16>
    %c-1_i32_163 = arith.constant -1 : i32
    %537 = vector.broadcast %c-1_i32_163 : i32 to vector<1x32xi32>
    %538 = arith.addi %511, %537 : vector<1x32xi32>
    %c0_i32_164 = arith.constant 0 : i32
    %539 = vector.broadcast %c0_i32_164 : i32 to vector<1x32xi32>
    %540 = arith.cmpi sge, %538, %539 : vector<1x32xi32>
    %c4_i32_165 = arith.constant 4 : i32
    %541 = vector.broadcast %c4_i32_165 : i32 to vector<1x32xi32>
    %542 = arith.cmpi slt, %538, %541 : vector<1x32xi32>
    %543 = arith.andi %540, %542 : vector<1x32xi1>
    %cst_166 = arith.constant 0.000000e+00 : bf16
    %544 = vector.broadcast %cst_166 : bf16 to vector<32x32xbf16>
    %545 = vector.shape_cast %543 : vector<1x32xi1> to vector<1x32xi1>
    %546 = vector.broadcast %545 : vector<1x32xi1> to vector<32x32xi1>
    %547 = arith.select %546, %536, %544 : vector<32x32xi1>, vector<32x32xbf16>
    %548 = vector.extract_strided_slice %504 {offsets = [0, 28], sizes = [32, 4], strides = [1, 1]} : vector<32x32xbf16> to vector<32x4xbf16>
    %549 = vector.extract_strided_slice %504 {offsets = [0, 0], sizes = [32, 28], strides = [1, 1]} : vector<32x32xbf16> to vector<32x28xbf16>
    %550 = tpu.concatenate %548, %549 in 1 : vector<32x4xbf16>, vector<32x28xbf16> -> vector<32x32xbf16>
    %c-1_i32_167 = arith.constant -1 : i32
    %551 = vector.broadcast %c-1_i32_167 : i32 to vector<1x32xi32>
    %552 = arith.addi %511, %551 : vector<1x32xi32>
    %c0_i32_168 = arith.constant 0 : i32
    %553 = vector.broadcast %c0_i32_168 : i32 to vector<1x32xi32>
    %554 = arith.cmpi sge, %552, %553 : vector<1x32xi32>
    %c4_i32_169 = arith.constant 4 : i32
    %555 = vector.broadcast %c4_i32_169 : i32 to vector<1x32xi32>
    %556 = arith.cmpi slt, %552, %555 : vector<1x32xi32>
    %557 = arith.andi %554, %556 : vector<1x32xi1>
    %cst_170 = arith.constant 0.000000e+00 : bf16
    %558 = vector.broadcast %cst_170 : bf16 to vector<32x32xbf16>
    %559 = vector.shape_cast %557 : vector<1x32xi1> to vector<1x32xi1>
    %560 = vector.broadcast %559 : vector<1x32xi1> to vector<32x32xi1>
    %561 = arith.select %560, %550, %558 : vector<32x32xi1>, vector<32x32xbf16>
    %562 = vector.extract_strided_slice %503 {offsets = [0, 29], sizes = [32, 3], strides = [1, 1]} : vector<32x32xbf16> to vector<32x3xbf16>
    %563 = vector.extract_strided_slice %503 {offsets = [0, 0], sizes = [32, 29], strides = [1, 1]} : vector<32x32xbf16> to vector<32x29xbf16>
    %564 = tpu.concatenate %562, %563 in 1 : vector<32x3xbf16>, vector<32x29xbf16> -> vector<32x32xbf16>
    %c-1_i32_171 = arith.constant -1 : i32
    %565 = vector.broadcast %c-1_i32_171 : i32 to vector<1x32xi32>
    %566 = arith.addi %511, %565 : vector<1x32xi32>
    %c0_i32_172 = arith.constant 0 : i32
    %567 = vector.broadcast %c0_i32_172 : i32 to vector<1x32xi32>
    %568 = arith.cmpi sge, %566, %567 : vector<1x32xi32>
    %c4_i32_173 = arith.constant 4 : i32
    %569 = vector.broadcast %c4_i32_173 : i32 to vector<1x32xi32>
    %570 = arith.cmpi slt, %566, %569 : vector<1x32xi32>
    %571 = arith.andi %568, %570 : vector<1x32xi1>
    %c1_i32_174 = arith.constant 1 : i32
    %572 = vector.broadcast %c1_i32_174 : i32 to vector<1x32xi32>
    %573 = arith.addi %507, %572 : vector<1x32xi32>
    %c0_i32_175 = arith.constant 0 : i32
    %574 = vector.broadcast %c0_i32_175 : i32 to vector<1x32xi32>
    %575 = arith.cmpi sge, %573, %574 : vector<1x32xi32>
    %c4_i32_176 = arith.constant 4 : i32
    %576 = vector.broadcast %c4_i32_176 : i32 to vector<1x32xi32>
    %577 = arith.cmpi slt, %573, %576 : vector<1x32xi32>
    %578 = arith.andi %575, %577 : vector<1x32xi1>
    %579 = arith.andi %571, %578 : vector<1x32xi1>
    %cst_177 = arith.constant 0.000000e+00 : bf16
    %580 = vector.broadcast %cst_177 : bf16 to vector<32x32xbf16>
    %581 = vector.shape_cast %579 : vector<1x32xi1> to vector<1x32xi1>
    %582 = vector.broadcast %581 : vector<1x32xi1> to vector<32x32xi1>
    %583 = arith.select %582, %564, %580 : vector<32x32xi1>, vector<32x32xbf16>
    %584 = vector.extract_strided_slice %502 {offsets = [0, 31], sizes = [32, 1], strides = [1, 1]} : vector<32x32xbf16> to vector<32x1xbf16>
    %585 = vector.extract_strided_slice %502 {offsets = [0, 0], sizes = [32, 31], strides = [1, 1]} : vector<32x32xbf16> to vector<32x31xbf16>
    %586 = tpu.concatenate %584, %585 in 1 : vector<32x1xbf16>, vector<32x31xbf16> -> vector<32x32xbf16>
    %c-1_i32_178 = arith.constant -1 : i32
    %587 = vector.broadcast %c-1_i32_178 : i32 to vector<1x32xi32>
    %588 = arith.addi %507, %587 : vector<1x32xi32>
    %c0_i32_179 = arith.constant 0 : i32
    %589 = vector.broadcast %c0_i32_179 : i32 to vector<1x32xi32>
    %590 = arith.cmpi sge, %588, %589 : vector<1x32xi32>
    %c4_i32_180 = arith.constant 4 : i32
    %591 = vector.broadcast %c4_i32_180 : i32 to vector<1x32xi32>
    %592 = arith.cmpi slt, %588, %591 : vector<1x32xi32>
    %593 = arith.andi %590, %592 : vector<1x32xi1>
    %cst_181 = arith.constant 0.000000e+00 : bf16
    %594 = vector.broadcast %cst_181 : bf16 to vector<32x32xbf16>
    %595 = vector.shape_cast %593 : vector<1x32xi1> to vector<1x32xi1>
    %596 = vector.broadcast %595 : vector<1x32xi1> to vector<32x32xi1>
    %597 = arith.select %596, %586, %594 : vector<32x32xi1>, vector<32x32xbf16>
    %598 = vector.extract_strided_slice %501 {offsets = [0, 1], sizes = [32, 31], strides = [1, 1]} : vector<32x32xbf16> to vector<32x31xbf16>
    %599 = vector.extract_strided_slice %501 {offsets = [0, 0], sizes = [32, 1], strides = [1, 1]} : vector<32x32xbf16> to vector<32x1xbf16>
    %600 = tpu.concatenate %598, %599 in 1 : vector<32x31xbf16>, vector<32x1xbf16> -> vector<32x32xbf16>
    %c1_i32_182 = arith.constant 1 : i32
    %601 = vector.broadcast %c1_i32_182 : i32 to vector<1x32xi32>
    %602 = arith.addi %507, %601 : vector<1x32xi32>
    %c0_i32_183 = arith.constant 0 : i32
    %603 = vector.broadcast %c0_i32_183 : i32 to vector<1x32xi32>
    %604 = arith.cmpi sge, %602, %603 : vector<1x32xi32>
    %c4_i32_184 = arith.constant 4 : i32
    %605 = vector.broadcast %c4_i32_184 : i32 to vector<1x32xi32>
    %606 = arith.cmpi slt, %602, %605 : vector<1x32xi32>
    %607 = arith.andi %604, %606 : vector<1x32xi1>
    %cst_185 = arith.constant 0.000000e+00 : bf16
    %608 = vector.broadcast %cst_185 : bf16 to vector<32x32xbf16>
    %609 = vector.shape_cast %607 : vector<1x32xi1> to vector<1x32xi1>
    %610 = vector.broadcast %609 : vector<1x32xi1> to vector<32x32xi1>
    %611 = arith.select %610, %600, %608 : vector<32x32xi1>, vector<32x32xbf16>
    %612 = vector.extract_strided_slice %504 {offsets = [0, 31], sizes = [32, 1], strides = [1, 1]} : vector<32x32xbf16> to vector<32x1xbf16>
    %613 = vector.extract_strided_slice %504 {offsets = [0, 0], sizes = [32, 31], strides = [1, 1]} : vector<32x32xbf16> to vector<32x31xbf16>
    %614 = tpu.concatenate %612, %613 in 1 : vector<32x1xbf16>, vector<32x31xbf16> -> vector<32x32xbf16>
    %c-1_i32_186 = arith.constant -1 : i32
    %615 = vector.broadcast %c-1_i32_186 : i32 to vector<1x32xi32>
    %616 = arith.addi %507, %615 : vector<1x32xi32>
    %c0_i32_187 = arith.constant 0 : i32
    %617 = vector.broadcast %c0_i32_187 : i32 to vector<1x32xi32>
    %618 = arith.cmpi sge, %616, %617 : vector<1x32xi32>
    %c4_i32_188 = arith.constant 4 : i32
    %619 = vector.broadcast %c4_i32_188 : i32 to vector<1x32xi32>
    %620 = arith.cmpi slt, %616, %619 : vector<1x32xi32>
    %621 = arith.andi %618, %620 : vector<1x32xi1>
    %cst_189 = arith.constant 0.000000e+00 : bf16
    %622 = vector.broadcast %cst_189 : bf16 to vector<32x32xbf16>
    %623 = vector.shape_cast %621 : vector<1x32xi1> to vector<1x32xi1>
    %624 = vector.broadcast %623 : vector<1x32xi1> to vector<32x32xi1>
    %625 = arith.select %624, %614, %622 : vector<32x32xi1>, vector<32x32xbf16>
    %626 = vector.extract_strided_slice %503 {offsets = [0, 1], sizes = [32, 31], strides = [1, 1]} : vector<32x32xbf16> to vector<32x31xbf16>
    %627 = vector.extract_strided_slice %503 {offsets = [0, 0], sizes = [32, 1], strides = [1, 1]} : vector<32x32xbf16> to vector<32x1xbf16>
    %628 = tpu.concatenate %626, %627 in 1 : vector<32x31xbf16>, vector<32x1xbf16> -> vector<32x32xbf16>
    %c1_i32_190 = arith.constant 1 : i32
    %629 = vector.broadcast %c1_i32_190 : i32 to vector<1x32xi32>
    %630 = arith.addi %507, %629 : vector<1x32xi32>
    %c0_i32_191 = arith.constant 0 : i32
    %631 = vector.broadcast %c0_i32_191 : i32 to vector<1x32xi32>
    %632 = arith.cmpi sge, %630, %631 : vector<1x32xi32>
    %c4_i32_192 = arith.constant 4 : i32
    %633 = vector.broadcast %c4_i32_192 : i32 to vector<1x32xi32>
    %634 = arith.cmpi slt, %630, %633 : vector<1x32xi32>
    %635 = arith.andi %632, %634 : vector<1x32xi1>
    %cst_193 = arith.constant 0.000000e+00 : bf16
    %636 = vector.broadcast %cst_193 : bf16 to vector<32x32xbf16>
    %637 = vector.shape_cast %635 : vector<1x32xi1> to vector<1x32xi1>
    %638 = vector.broadcast %637 : vector<1x32xi1> to vector<32x32xi1>
    %639 = arith.select %638, %628, %636 : vector<32x32xi1>, vector<32x32xbf16>
    %640 = vector.extract_strided_slice %502 {offsets = [0, 3], sizes = [32, 29], strides = [1, 1]} : vector<32x32xbf16> to vector<32x29xbf16>
    %641 = vector.extract_strided_slice %502 {offsets = [0, 0], sizes = [32, 3], strides = [1, 1]} : vector<32x32xbf16> to vector<32x3xbf16>
    %642 = tpu.concatenate %640, %641 in 1 : vector<32x29xbf16>, vector<32x3xbf16> -> vector<32x32xbf16>
    %c1_i32_194 = arith.constant 1 : i32
    %643 = vector.broadcast %c1_i32_194 : i32 to vector<1x32xi32>
    %644 = arith.addi %511, %643 : vector<1x32xi32>
    %c0_i32_195 = arith.constant 0 : i32
    %645 = vector.broadcast %c0_i32_195 : i32 to vector<1x32xi32>
    %646 = arith.cmpi sge, %644, %645 : vector<1x32xi32>
    %c4_i32_196 = arith.constant 4 : i32
    %647 = vector.broadcast %c4_i32_196 : i32 to vector<1x32xi32>
    %648 = arith.cmpi slt, %644, %647 : vector<1x32xi32>
    %649 = arith.andi %646, %648 : vector<1x32xi1>
    %c-1_i32_197 = arith.constant -1 : i32
    %650 = vector.broadcast %c-1_i32_197 : i32 to vector<1x32xi32>
    %651 = arith.addi %507, %650 : vector<1x32xi32>
    %c0_i32_198 = arith.constant 0 : i32
    %652 = vector.broadcast %c0_i32_198 : i32 to vector<1x32xi32>
    %653 = arith.cmpi sge, %651, %652 : vector<1x32xi32>
    %c4_i32_199 = arith.constant 4 : i32
    %654 = vector.broadcast %c4_i32_199 : i32 to vector<1x32xi32>
    %655 = arith.cmpi slt, %651, %654 : vector<1x32xi32>
    %656 = arith.andi %653, %655 : vector<1x32xi1>
    %657 = arith.andi %649, %656 : vector<1x32xi1>
    %cst_200 = arith.constant 0.000000e+00 : bf16
    %658 = vector.broadcast %cst_200 : bf16 to vector<32x32xbf16>
    %659 = vector.shape_cast %657 : vector<1x32xi1> to vector<1x32xi1>
    %660 = vector.broadcast %659 : vector<1x32xi1> to vector<32x32xi1>
    %661 = arith.select %660, %642, %658 : vector<32x32xi1>, vector<32x32xbf16>
    %662 = vector.extract_strided_slice %501 {offsets = [0, 4], sizes = [32, 28], strides = [1, 1]} : vector<32x32xbf16> to vector<32x28xbf16>
    %663 = vector.extract_strided_slice %501 {offsets = [0, 0], sizes = [32, 4], strides = [1, 1]} : vector<32x32xbf16> to vector<32x4xbf16>
    %664 = tpu.concatenate %662, %663 in 1 : vector<32x28xbf16>, vector<32x4xbf16> -> vector<32x32xbf16>
    %c1_i32_201 = arith.constant 1 : i32
    %665 = vector.broadcast %c1_i32_201 : i32 to vector<1x32xi32>
    %666 = arith.addi %511, %665 : vector<1x32xi32>
    %c0_i32_202 = arith.constant 0 : i32
    %667 = vector.broadcast %c0_i32_202 : i32 to vector<1x32xi32>
    %668 = arith.cmpi sge, %666, %667 : vector<1x32xi32>
    %c4_i32_203 = arith.constant 4 : i32
    %669 = vector.broadcast %c4_i32_203 : i32 to vector<1x32xi32>
    %670 = arith.cmpi slt, %666, %669 : vector<1x32xi32>
    %671 = arith.andi %668, %670 : vector<1x32xi1>
    %cst_204 = arith.constant 0.000000e+00 : bf16
    %672 = vector.broadcast %cst_204 : bf16 to vector<32x32xbf16>
    %673 = vector.shape_cast %671 : vector<1x32xi1> to vector<1x32xi1>
    %674 = vector.broadcast %673 : vector<1x32xi1> to vector<32x32xi1>
    %675 = arith.select %674, %664, %672 : vector<32x32xi1>, vector<32x32xbf16>
    %676 = vector.extract_strided_slice %502 {offsets = [0, 4], sizes = [32, 28], strides = [1, 1]} : vector<32x32xbf16> to vector<32x28xbf16>
    %677 = vector.extract_strided_slice %502 {offsets = [0, 0], sizes = [32, 4], strides = [1, 1]} : vector<32x32xbf16> to vector<32x4xbf16>
    %678 = tpu.concatenate %676, %677 in 1 : vector<32x28xbf16>, vector<32x4xbf16> -> vector<32x32xbf16>
    %c1_i32_205 = arith.constant 1 : i32
    %679 = vector.broadcast %c1_i32_205 : i32 to vector<1x32xi32>
    %680 = arith.addi %511, %679 : vector<1x32xi32>
    %c0_i32_206 = arith.constant 0 : i32
    %681 = vector.broadcast %c0_i32_206 : i32 to vector<1x32xi32>
    %682 = arith.cmpi sge, %680, %681 : vector<1x32xi32>
    %c4_i32_207 = arith.constant 4 : i32
    %683 = vector.broadcast %c4_i32_207 : i32 to vector<1x32xi32>
    %684 = arith.cmpi slt, %680, %683 : vector<1x32xi32>
    %685 = arith.andi %682, %684 : vector<1x32xi1>
    %cst_208 = arith.constant 0.000000e+00 : bf16
    %686 = vector.broadcast %cst_208 : bf16 to vector<32x32xbf16>
    %687 = vector.shape_cast %685 : vector<1x32xi1> to vector<1x32xi1>
    %688 = vector.broadcast %687 : vector<1x32xi1> to vector<32x32xi1>
    %689 = arith.select %688, %678, %686 : vector<32x32xi1>, vector<32x32xbf16>
    %690 = vector.extract_strided_slice %501 {offsets = [0, 5], sizes = [32, 27], strides = [1, 1]} : vector<32x32xbf16> to vector<32x27xbf16>
    %691 = vector.extract_strided_slice %501 {offsets = [0, 0], sizes = [32, 5], strides = [1, 1]} : vector<32x32xbf16> to vector<32x5xbf16>
    %692 = tpu.concatenate %690, %691 in 1 : vector<32x27xbf16>, vector<32x5xbf16> -> vector<32x32xbf16>
    %c1_i32_209 = arith.constant 1 : i32
    %693 = vector.broadcast %c1_i32_209 : i32 to vector<1x32xi32>
    %694 = arith.addi %511, %693 : vector<1x32xi32>
    %c0_i32_210 = arith.constant 0 : i32
    %695 = vector.broadcast %c0_i32_210 : i32 to vector<1x32xi32>
    %696 = arith.cmpi sge, %694, %695 : vector<1x32xi32>
    %c4_i32_211 = arith.constant 4 : i32
    %697 = vector.broadcast %c4_i32_211 : i32 to vector<1x32xi32>
    %698 = arith.cmpi slt, %694, %697 : vector<1x32xi32>
    %699 = arith.andi %696, %698 : vector<1x32xi1>
    %c1_i32_212 = arith.constant 1 : i32
    %700 = vector.broadcast %c1_i32_212 : i32 to vector<1x32xi32>
    %701 = arith.addi %507, %700 : vector<1x32xi32>
    %c0_i32_213 = arith.constant 0 : i32
    %702 = vector.broadcast %c0_i32_213 : i32 to vector<1x32xi32>
    %703 = arith.cmpi sge, %701, %702 : vector<1x32xi32>
    %c4_i32_214 = arith.constant 4 : i32
    %704 = vector.broadcast %c4_i32_214 : i32 to vector<1x32xi32>
    %705 = arith.cmpi slt, %701, %704 : vector<1x32xi32>
    %706 = arith.andi %703, %705 : vector<1x32xi1>
    %707 = arith.andi %699, %706 : vector<1x32xi1>
    %cst_215 = arith.constant 0.000000e+00 : bf16
    %708 = vector.broadcast %cst_215 : bf16 to vector<32x32xbf16>
    %709 = vector.shape_cast %707 : vector<1x32xi1> to vector<1x32xi1>
    %710 = vector.broadcast %709 : vector<1x32xi1> to vector<32x32xi1>
    %711 = arith.select %710, %692, %708 : vector<32x32xi1>, vector<32x32xbf16>
    %712 = tpu.concatenate %533, %547, %561, %583, %597, %501, %502, %611, %625, %503, %504, %639, %661, %675, %689, %711 in 0 : vector<32x32xbf16>, vector<32x32xbf16>, vector<32x32xbf16>, vector<32x32xbf16>, vector<32x32xbf16>, vector<32x32xbf16>, vector<32x32xbf16>, vector<32x32xbf16>, vector<32x32xbf16>, vector<32x32xbf16>, vector<32x32xbf16>, vector<32x32xbf16>, vector<32x32xbf16>, vector<32x32xbf16>, vector<32x32xbf16>, vector<32x32xbf16> -> vector<512x32xbf16>
    %c0_216 = arith.constant 0 : index
    %c0_217 = arith.constant 0 : index
    %713 = vector.load %arg5[%c0_216, %c0_217] : memref<64x512xbf16, #tpu.memory_space<vmem>>, vector<64x512xbf16>
    %cst_218 = arith.constant dense<0.000000e+00> : vector<64x32xf32>
    %714 = tpu.matmul %713, %712, %cst_218 {dimension_numbers = #tpu.dot_dimension_numbers<[1], [0], [0], [1], [0, 0, 1, 1], [], []>} : vector<64x512xbf16>, vector<512x32xbf16>, vector<64x32xf32> -> vector<64x32xf32>
    %cst_219 = arith.constant dense<0.000000e+00> : vector<64xf32>
    %715 = vector.multi_reduction <add>, %714, %cst_219 [1] : vector<64x32xf32> to vector<64xf32>
    %716 = vector.shape_cast %715 : vector<64xf32> to vector<64x1xf32>
    %cst_220 = arith.constant 3.200000e+01 : f32
    %717 = vector.broadcast %cst_220 : f32 to vector<64x1xf32>
    %718 = arith.divf %716, %717 : vector<64x1xf32>
    %719 = arith.mulf %714, %714 : vector<64x32xf32>
    %cst_221 = arith.constant dense<0.000000e+00> : vector<64xf32>
    %720 = vector.multi_reduction <add>, %719, %cst_221 [1] : vector<64x32xf32> to vector<64xf32>
    %721 = vector.shape_cast %720 : vector<64xf32> to vector<64x1xf32>
    %cst_222 = arith.constant 3.200000e+01 : f32
    %722 = vector.broadcast %cst_222 : f32 to vector<64x1xf32>
    %723 = arith.divf %721, %722 : vector<64x1xf32>
    %724 = arith.mulf %718, %718 : vector<64x1xf32>
    %725 = arith.subf %723, %724 : vector<64x1xf32>
    %cst_223 = arith.constant 0.000000e+00 : f32
    %726 = vector.broadcast %cst_223 : f32 to vector<64x1xf32>
    %727 = arith.maximumf %725, %726 : vector<64x1xf32>
    %c0_224 = arith.constant 0 : index
    %c0_225 = arith.constant 0 : index
    %728 = vector.load %arg9[%c0_224, %c0_225] : memref<64x2xf32, #tpu.memory_space<vmem>>, vector<64x1xf32>
    %c0_226 = arith.constant 0 : index
    %c1_227 = arith.constant 1 : index
    %729 = vector.load %arg9[%c0_226, %c1_227] : memref<64x2xf32, #tpu.memory_space<vmem>>, vector<64x1xf32>
    %730 = vector.broadcast %718 : vector<64x1xf32> to vector<64x32xf32>
    %731 = arith.subf %714, %730 : vector<64x32xf32>
    %cst_228 = arith.constant 9.99999974E-6 : f32
    %732 = vector.broadcast %cst_228 : f32 to vector<64x1xf32>
    %733 = arith.addf %727, %732 : vector<64x1xf32>
    %734 = math.rsqrt %733 : vector<64x1xf32>
    %735 = vector.broadcast %734 : vector<64x1xf32> to vector<64x32xf32>
    %736 = arith.mulf %731, %735 : vector<64x32xf32>
    %737 = vector.broadcast %728 : vector<64x1xf32> to vector<64x32xf32>
    %738 = arith.mulf %736, %737 : vector<64x32xf32>
    %739 = vector.broadcast %729 : vector<64x1xf32> to vector<64x32xf32>
    %740 = arith.addf %738, %739 : vector<64x32xf32>
    %cst_229 = arith.constant 2.000000e-01 : f32
    %741 = vector.broadcast %cst_229 : f32 to vector<64x32xf32>
    %742 = arith.mulf %741, %740 : vector<64x32xf32>
    %743 = arith.maximumf %740, %742 : vector<64x32xf32>
    %c0_230 = arith.constant 0 : index
    %c0_231 = arith.constant 0 : index
    %744 = vector.load %arg6[%c0_230, %c0_231] : memref<64x16xf32, #tpu.memory_space<vmem>>, vector<64x16xf32>
    %745 = vector.extract_strided_slice %743 {offsets = [0, 0], sizes = [64, 16], strides = [1, 1]} : vector<64x32xf32> to vector<64x16xf32>
    %746 = arith.mulf %745, %744 : vector<64x16xf32>
    %cst_232 = arith.constant dense<0.000000e+00> : vector<16xf32>
    %747 = vector.multi_reduction <add>, %746, %cst_232 [0] : vector<64x16xf32> to vector<16xf32>
    %748 = vector.shape_cast %747 : vector<16xf32> to vector<1x16xf32>
    %cst_233 = arith.constant dense<0.000000e+00> : vector<1xf32>
    %749 = vector.multi_reduction <add>, %748, %cst_233 [1] : vector<1x16xf32> to vector<1xf32>
    %750 = vector.shape_cast %749 : vector<1xf32> to vector<1x1xf32>
    %751 = vector.extract_strided_slice %743 {offsets = [0, 16], sizes = [64, 16], strides = [1, 1]} : vector<64x32xf32> to vector<64x16xf32>
    %752 = arith.mulf %751, %744 : vector<64x16xf32>
    %cst_234 = arith.constant dense<0.000000e+00> : vector<16xf32>
    %753 = vector.multi_reduction <add>, %752, %cst_234 [0] : vector<64x16xf32> to vector<16xf32>
    %754 = vector.shape_cast %753 : vector<16xf32> to vector<1x16xf32>
    %cst_235 = arith.constant dense<0.000000e+00> : vector<1xf32>
    %755 = vector.multi_reduction <add>, %754, %cst_235 [1] : vector<1x16xf32> to vector<1xf32>
    %756 = vector.shape_cast %755 : vector<1xf32> to vector<1x1xf32>
    %757 = tpu.concatenate %750, %756 in 1 : vector<1x1xf32>, vector<1x1xf32> -> vector<1x2xf32>
    %cst_236 = arith.constant 0.000000e+00 : f32
    %758 = vector.broadcast %cst_236 : f32 to vector<1x2xf32>
    %759 = arith.subf %758, %757 : vector<1x2xf32>
    %760 = math.exp %759 : vector<1x2xf32>
    %cst_237 = arith.constant 1.000000e+00 : f32
    %761 = vector.broadcast %cst_237 : f32 to vector<1x2xf32>
    %762 = arith.addf %761, %760 : vector<1x2xf32>
    %cst_238 = arith.constant 1.000000e+00 : f32
    %763 = vector.broadcast %cst_238 : f32 to vector<1x2xf32>
    %764 = arith.divf %763, %762 : vector<1x2xf32>
    %c0_239 = arith.constant 0 : index
    %c0_240 = arith.constant 0 : index
    %765 = vector.load %arg12[%c0_239, %c0_240] : memref<1x2xf32, #tpu.memory_space<vmem>>, vector<1x2xf32>
    tpu.vector_store %arg12[%c0_239, %c0_240], %764 {strides = array<i32>} : memref<1x2xf32, #tpu.memory_space<vmem>>, vector<1x2xf32>,
    return
  }
  func.func @transform_0(%arg0: i32) -> (i32, i32) {
    %c0_i32 = arith.constant 0 : i32
    %c0_i32_0 = arith.constant 0 : i32
    %c0_i32_1 = arith.constant 0 : i32
    return %c0_i32, %c0_i32_0 : i32, i32
  }
  func.func @transform_1(%arg0: i32) -> (i32, i32) {
    %c0_i32 = arith.constant 0 : i32
    %c0_i32_0 = arith.constant 0 : i32
    %c0_i32_1 = arith.constant 0 : i32
    return %c0_i32, %c0_i32_0 : i32, i32
  }
  func.func @transform_2(%arg0: i32) -> (i32, i32) {
    %c0_i32 = arith.constant 0 : i32
    %c0_i32_0 = arith.constant 0 : i32
    %c0_i32_1 = arith.constant 0 : i32
    return %c0_i32, %c0_i32_0 : i32, i32
  }
  func.func @transform_3(%arg0: i32) -> (i32, i32) {
    %c0_i32 = arith.constant 0 : i32
    %c0_i32_0 = arith.constant 0 : i32
    %c0_i32_1 = arith.constant 0 : i32
    return %c0_i32, %c0_i32_0 : i32, i32
  }
  func.func @transform_4(%arg0: i32) -> (i32, i32) {
    %c0_i32 = arith.constant 0 : i32
    %c0_i32_0 = arith.constant 0 : i32
    %c0_i32_1 = arith.constant 0 : i32
    return %c0_i32, %c0_i32_0 : i32, i32
  }
  func.func @transform_5(%arg0: i32) -> (i32, i32) {
    %c0_i32 = arith.constant 0 : i32
    %c0_i32_0 = arith.constant 0 : i32
    %c0_i32_1 = arith.constant 0 : i32
    return %c0_i32, %c0_i32_0 : i32, i32
  }
  func.func @transform_6(%arg0: i32) -> (i32, i32) {
    %c0_i32 = arith.constant 0 : i32
    %c0_i32_0 = arith.constant 0 : i32
    %c0_i32_1 = arith.constant 0 : i32
    return %c0_i32, %c0_i32_0 : i32, i32
  }
  func.func @transform_7(%arg0: i32) -> (i32, i32) {
    %c0_i32 = arith.constant 0 : i32
    %c0_i32_0 = arith.constant 0 : i32
    %c0_i32_1 = arith.constant 0 : i32
    return %c0_i32, %c0_i32_0 : i32, i32
  }
  func.func @transform_8(%arg0: i32) -> (i32, i32) {
    %c0_i32 = arith.constant 0 : i32
    %c0_i32_0 = arith.constant 0 : i32
    %c0_i32_1 = arith.constant 0 : i32
    return %c0_i32, %c0_i32_0 : i32, i32
  }
  func.func @transform_9(%arg0: i32) -> (i32, i32) {
    %c0_i32 = arith.constant 0 : i32
    %c0_i32_0 = arith.constant 0 : i32
    %c0_i32_1 = arith.constant 0 : i32
    return %c0_i32, %c0_i32_0 : i32, i32
  }
  func.func @transform_10(%arg0: i32) -> (i32, i32) {
    %c0_i32 = arith.constant 0 : i32
    %c0_i32_0 = arith.constant 0 : i32
    %c0_i32_1 = arith.constant 0 : i32
    return %c0_i32, %c0_i32_0 : i32, i32
  }
  func.func @transform_11(%arg0: i32) -> (i32, i32) {
    %c0_i32 = arith.constant 0 : i32
    %c0_i32_0 = arith.constant 0 : i32
    %c0_i32_1 = arith.constant 0 : i32
    return %c0_i32, %c0_i32_0 : i32, i32
  }
}

</mosaic_0001>

<llo_original>
// kernel: discriminator_forward.1
$region0: #{discriminator_forward.1}
  #allocation0 [shape = 'u32[]', space=smem, size = 0x4, offset = 0x4, fixed_abs, tag = 'smem constant byte address 0x4 - core index']
  #allocation1 [shape = 'u32[144,128]{1,0:T(1,128)}', space=vmem, size = 0x12000, scoped, tag = 'internal scratch']
  %s0 = inlined_call_operand.vmem [shape: bf16[16,2048], index: 0, kind: input, shape index: {}]
  %s1 = inlined_call_operand.vmem [shape: bf16[8,16], index: 1, kind: input, shape index: {}]
  %s2 = inlined_call_operand.vmem [shape: bf16[16,128], index: 2, kind: input, shape index: {}]
  %s3 = inlined_call_operand.vmem [shape: bf16[32,256], index: 3, kind: input, shape index: {}]
  %s4 = inlined_call_operand.vmem [shape: bf16[64,512], index: 4, kind: input, shape index: {}]
  %s5 = inlined_call_operand.vmem [shape: f32[64,16], index: 5, kind: input, shape index: {}]
  %s6 = inlined_call_operand.vmem [shape: f32[16,2], index: 6, kind: input, shape index: {}]
  %s7 = inlined_call_operand.vmem [shape: f32[32,2], index: 7, kind: input, shape index: {}]
  %s8 = inlined_call_operand.vmem [shape: f32[64,2], index: 8, kind: input, shape index: {}]
  %s9 = inlined_call_operand.vmem [shape: bf16[512,512], index: 9, kind: input, shape index: {}]
  %s10 = inlined_call_operand.vmem [shape: bf16[128,128], index: 10, kind: input, shape index: {}]
  %s11 = inlined_call_operand.hbm [shape: f32[1,2], index: 11, kind: output, shape index: {}]
  %s12 = sld [smem:[#allocation0]]
  $region54: #{discriminator_forward.1} parent=0
    _
  %s14 = ssub.s32 1, %s12
  %s15 = scalar_select 0, %s14, %s12
  $region1: #{discriminator_forward.1} parent=0
    #allocation2 [shape = 'u8[512]{0}', space=vmem, size = 0x400, scoped, tag = 'output window, operand 0, single buffered']
    #allocation3 [shape = 's32[1]{0}', space=sflag, size = 0x4, scoped, tag = 'scoped memory for discriminator_forward.1']
    %16 = vsyncpa [#allocation3], 0
    // Predicated region
    $region2: #{discriminator_forward.1} parent=1 // pred_check
      _
    $region3: #{discriminator_forward.1} parent=1 // pred_check_branch
      %18 = sbr.rel (0) target = $region5
    $region4: #{discriminator_forward.1} parent=1 // pred_region
      _
    $region5: #{discriminator_forward.1} parent=1 // pred_fallthru
      _
    // Predicated region
    $region6: #{discriminator_forward.1} parent=1 // pred_check
      _
    $region7: #{discriminator_forward.1} parent=1 // pred_check_branch
      %20 = sbr.rel (0) target = $region9
    $region8: #{discriminator_forward.1} parent=1 // pred_region
      _
    $region9: #{discriminator_forward.1} parent=1 // pred_fallthru
      _
    // Predicated region
    $region10: #{discriminator_forward.1} parent=1 // pred_check
      _
    $region11: #{discriminator_forward.1} parent=1 // pred_check_branch
      %22 = sbr.rel (0) target = $region13
    $region12: #{discriminator_forward.1} parent=1 // pred_region
      _
    $region13: #{discriminator_forward.1} parent=1 // pred_fallthru
      _
    // Predicated region
    $region14: #{discriminator_forward.1} parent=1 // pred_check
      _
    $region15: #{discriminator_forward.1} parent=1 // pred_check_branch
      %24 = sbr.rel (0) target = $region17
    $region16: #{discriminator_forward.1} parent=1 // pred_region
      _
    $region17: #{discriminator_forward.1} parent=1 // pred_fallthru
      _
    // Predicated region
    $region18: #{discriminator_forward.1} parent=1 // pred_check
      _
    $region19: #{discriminator_forward.1} parent=1 // pred_check_branch
      %26 = sbr.rel (0) target = $region21
    $region20: #{discriminator_forward.1} parent=1 // pred_region
      _
    $region21: #{discriminator_forward.1} parent=1 // pred_fallthru
      _
    // Predicated region
    $region22: #{discriminator_forward.1} parent=1 // pred_check
      _
    $region23: #{discriminator_forward.1} parent=1 // pred_check_branch
      %28 = sbr.rel (0) target = $region25
    $region24: #{discriminator_forward.1} parent=1 // pred_region
      _
    $region25: #{discriminator_forward.1} parent=1 // pred_fallthru
      _
    // Predicated region
    $region26: #{discriminator_forward.1} parent=1 // pred_check
      _
    $region27: #{discriminator_forward.1} parent=1 // pred_check_branch
      %30 = sbr.rel (0) target = $region29
    $region28: #{discriminator_forward.1} parent=1 // pred_region
      _
    $region29: #{discriminator_forward.1} parent=1 // pred_fallthru
      _
    // Predicated region
    $region30: #{discriminator_forward.1} parent=1 // pred_check
      _
    $region31: #{discriminator_forward.1} parent=1 // pred_check_branch
      %32 = sbr.rel (0) target = $region33
    $region32: #{discriminator_forward.1} parent=1 // pred_region
      _
    $region33: #{discriminator_forward.1} parent=1 // pred_fallthru
      _
    // Predicated region
    $region34: #{discriminator_forward.1} parent=1 // pred_check
      _
    $region35: #{discriminator_forward.1} parent=1 // pred_check_branch
      %34 = sbr.rel (0) target = $region37
    $region36: #{discriminator_forward.1} parent=1 // pred_region
      _
    $region37: #{discriminator_forward.1} parent=1 // pred_fallthru
      _
    // Predicated region
    $region38: #{discriminator_forward.1} parent=1 // pred_check
      _
    $region39: #{discriminator_forward.1} parent=1 // pred_check_branch
      %36 = sbr.rel (0) target = $region41
    $region40: #{discriminator_forward.1} parent=1 // pred_region
      _
    $region41: #{discriminator_forward.1} parent=1 // pred_fallthru
      _
    // Predicated region
    $region42: #{discriminator_forward.1} parent=1 // pred_check
      _
    $region43: #{discriminator_forward.1} parent=1 // pred_check_branch
      %38 = sbr.rel (0) target = $region45
    $region44: #{discriminator_forward.1} parent=1 // pred_region
      _
    $region45: #{discriminator_forward.1} parent=1 // pred_fallthru
      _
    %v42 = vld [vmem:[%s1] sm:$0xf]
    %v43 = vld [vmem:[%s0] sm:$0xff]
    %v44 = vld [vmem:[%s0 + $0x8] sm:$0xff]
    %v45 = vld [vmem:[%s0 + $0x10] sm:$0xff]
    %v46 = vld [vmem:[%s0 + $0x18] sm:$0xff]
    %v47 = vld [vmem:[%s0 + $0x20] sm:$0xff]
    %v48 = vld [vmem:[%s0 + $0x28] sm:$0xff]
    %v49 = vld [vmem:[%s0 + $0x30] sm:$0xff]
    %v50 = vld [vmem:[%s0 + $0x38] sm:$0xff]
    %v51 = vld [vmem:[%s0 + $0x40] sm:$0xff]
    %v52 = vld [vmem:[%s0 + $0x48] sm:$0xff]
    %v53 = vld [vmem:[%s0 + $0x50] sm:$0xff]
    %v54 = vld [vmem:[%s0 + $0x58] sm:$0xff]
    %v55 = vld [vmem:[%s0 + $0x60] sm:$0xff]
    %v56 = vld [vmem:[%s0 + $0x68] sm:$0xff]
    %v57 = vld [vmem:[%s0 + $0x70] sm:$0xff]
    %v58 = vld [vmem:[%s0 + $0x78] sm:$0xff]
    %v75 = vunpack.c.l.b16 %v43
    %v76 = vunpack.c.h.b16 %v43
    %v77 = vunpack.c.l.b16 %v44
    %v78 = vunpack.c.h.b16 %v44
    %v79 = vunpack.c.l.b16 %v45
    %v80 = vunpack.c.h.b16 %v45
    %v81 = vunpack.c.l.b16 %v46
    %v82 = vunpack.c.h.b16 %v46
    %v83 = vunpack.c.l.b16 %v47
    %v84 = vunpack.c.h.b16 %v47
    %v85 = vunpack.c.l.b16 %v48
    %v86 = vunpack.c.h.b16 %v48
    %v87 = vunpack.c.l.b16 %v49
    %v88 = vunpack.c.h.b16 %v49
    %v89 = vunpack.c.l.b16 %v50
    %v90 = vunpack.c.h.b16 %v50
    %v91 = vunpack.c.l.b16 %v51
    %v92 = vunpack.c.h.b16 %v51
    %v93 = vunpack.c.l.b16 %v52
    %v94 = vunpack.c.h.b16 %v52
    %v95 = vunpack.c.l.b16 %v53
    %v96 = vunpack.c.h.b16 %v53
    %v97 = vunpack.c.l.b16 %v54
    %v98 = vunpack.c.h.b16 %v54
    %v99 = vunpack.c.l.b16 %v55
    %v100 = vunpack.c.h.b16 %v55
    %v101 = vunpack.c.l.b16 %v56
    %v102 = vunpack.c.h.b16 %v56
    %v103 = vunpack.c.l.b16 %v57
    %v104 = vunpack.c.h.b16 %v57
    %v105 = vunpack.c.l.b16 %v58
    %v106 = vunpack.c.h.b16 %v58
    %v107 = vpack.c.b16 %v91, %v75
    %v108 = vpack.c.b16 %v92, %v76
    %v109 = vpack.c.b16 %v93, %v77
    %v110 = vpack.c.b16 %v94, %v78
    %v111 = vpack.c.b16 %v95, %v79
    %v112 = vpack.c.b16 %v96, %v80
    %v113 = vpack.c.b16 %v97, %v81
    %v114 = vpack.c.b16 %v98, %v82
    %v115 = vpack.c.b16 %v99, %v83
    %v116 = vpack.c.b16 %v100, %v84
    %v117 = vpack.c.b16 %v101, %v85
    %v118 = vpack.c.b16 %v102, %v86
    %v119 = vpack.c.b16 %v103, %v87
    %v120 = vpack.c.b16 %v104, %v88
    %v121 = vpack.c.b16 %v105, %v89
    %v122 = vpack.c.b16 %v106, %v90
    %vm139 = vcmask 130048
    %v141 = vsel %vm139, %v42, 0
    %143 = vmatprep.subr.bf16.mxu0 %v108
    %144 = vmatpush1.bf16.msra.mxu0 %v107
    %145 = vmatprep.subr.bf16.mxu0 0
    %146 = vmatpush1.bf16.msra.mxu0 0
    %147 = vmatprep.subr.bf16.mxu0 0
    %148 = vmatpush1.bf16.msra.mxu0 0
    %149 = vmatprep.subr.bf16.mxu0 0
    %150 = vmatpush1.bf16.msra.mxu0 0
    %151 = vmatprep.subr.bf16.mxu0 0
    %152 = vmatpush1.bf16.msra.mxu0 0
    %153 = vmatprep.subr.bf16.mxu0 0
    %154 = vmatpush1.bf16.msra.mxu0 0
    %155 = vmatprep.subr.bf16.mxu0 0
    %156 = vmatpush1.bf16.msra.mxu0 0
    %157 = vmatprep.subr.bf16.mxu0 0
    %158 = vmatpush1.bf16.msra.mxu0 0
    %159 = vmatprep.subr.bf16.mxu0 0
    %160 = vmatpush1.bf16.msra.mxu0 0
    %161 = vmatprep.subr.bf16.mxu0 0
    %162 = vmatpush1.bf16.msra.mxu0 0
    %163 = vmatprep.subr.bf16.mxu0 0
    %164 = vmatpush1.bf16.msra.mxu0 0
    %165 = vmatprep.subr.bf16.mxu0 0
    %166 = vmatpush1.bf16.msra.mxu0 0
    %167 = vmatprep.subr.bf16.mxu0 0
    %168 = vmatpush1.bf16.msra.mxu0 0
    %169 = vmatprep.subr.bf16.mxu0 0
    %170 = vmatpush1.bf16.msra.mxu0 0
    %171 = vmatprep.subr.bf16.mxu0 0
    %172 = vmatpush1.bf16.msra.mxu0 0
    %173 = vmatprep.subr.bf16.mxu0 0
    %174 = vmatpush1.bf16.msra.mxu0 0
    %175 = vmatprep.mubr.bf16.mxu0 0
    %176 = vmatmul.mubr.bf16.gmra.mrb[0].mxu0 %v141
    %v177 = vpop.f32.mrb[0].mxu0
    %v178 = vadd.f32 0.0, %v177
    %v179 = vpop.f32.mrb[0].mxu0
    %v180 = vadd.f32 0.0, %v179
    %v181 = vpop.f32.mrb[0].mxu0
    %v182 = vpop.f32.mrb[0].mxu0
    %183 = vdwg.mxu0
    %184 = vmatprep.subr.bf16.mxu0 %v110
    %185 = vmatpush1.bf16.msra.mxu0 %v109
    %186 = vmatprep.subr.bf16.mxu0 0
    %187 = vmatpush1.bf16.msra.mxu0 0
    %188 = vmatprep.subr.bf16.mxu0 0
    %189 = vmatpush1.bf16.msra.mxu0 0
    %190 = vmatprep.subr.bf16.mxu0 0
    %191 = vmatpush1.bf16.msra.mxu0 0
    %192 = vmatprep.subr.bf16.mxu0 0
    %193 = vmatpush1.bf16.msra.mxu0 0
    %194 = vmatprep.subr.bf16.mxu0 0
    %195 = vmatpush1.bf16.msra.mxu0 0
    %196 = vmatprep.subr.bf16.mxu0 0
    %197 = vmatpush1.bf16.msra.mxu0 0
    %198 = vmatprep.subr.bf16.mxu0 0
    %199 = vmatpush1.bf16.msra.mxu0 0
    %200 = vmatprep.subr.bf16.mxu0 0
    %201 = vmatpush1.bf16.msra.mxu0 0
    %202 = vmatprep.subr.bf16.mxu0 0
    %203 = vmatpush1.bf16.msra.mxu0 0
    %204 = vmatprep.subr.bf16.mxu0 0
    %205 = vmatpush1.bf16.msra.mxu0 0
    %206 = vmatprep.subr.bf16.mxu0 0
    %207 = vmatpush1.bf16.msra.mxu0 0
    %208 = vmatprep.subr.bf16.mxu0 0
    %209 = vmatpush1.bf16.msra.mxu0 0
    %210 = vmatprep.subr.bf16.mxu0 0
    %211 = vmatpush1.bf16.msra.mxu0 0
    %212 = vmatprep.subr.bf16.mxu0 0
    %213 = vmatpush1.bf16.msra.mxu0 0
    %214 = vmatprep.subr.bf16.mxu0 0
    %215 = vmatpush1.bf16.msra.mxu0 0
    %216 = vmatprep.mubr.bf16.mxu0 0
    %217 = vmatmul.mubr.bf16.gmra.mrb[0].mxu0 %v141
    %v218 = vpop.f32.mrb[0].mxu0
    %v219 = vadd.f32 0.0, %v218
    %v220 = vpop.f32.mrb[0].mxu0
    %v221 = vadd.f32 0.0, %v220
    %v222 = vpop.f32.mrb[0].mxu0
    %v223 = vpop.f32.mrb[0].mxu0
    %224 = vdwg.mxu0
    %225 = vmatprep.subr.bf16.mxu0 %v112
    %226 = vmatpush1.bf16.msra.mxu0 %v111
    %227 = vmatprep.subr.bf16.mxu0 0
    %228 = vmatpush1.bf16.msra.mxu0 0
    %229 = vmatprep.subr.bf16.mxu0 0
    %230 = vmatpush1.bf16.msra.mxu0 0
    %231 = vmatprep.subr.bf16.mxu0 0
    %232 = vmatpush1.bf16.msra.mxu0 0
    %233 = vmatprep.subr.bf16.mxu0 0
    %234 = vmatpush1.bf16.msra.mxu0 0
    %235 = vmatprep.subr.bf16.mxu0 0
    %236 = vmatpush1.bf16.msra.mxu0 0
    %237 = vmatprep.subr.bf16.mxu0 0
    %238 = vmatpush1.bf16.msra.mxu0 0
    %239 = vmatprep.subr.bf16.mxu0 0
    %240 = vmatpush1.bf16.msra.mxu0 0
    %241 = vmatprep.subr.bf16.mxu0 0
    %242 = vmatpush1.bf16.msra.mxu0 0
    %243 = vmatprep.subr.bf16.mxu0 0
    %244 = vmatpush1.bf16.msra.mxu0 0
    %245 = vmatprep.subr.bf16.mxu0 0
    %246 = vmatpush1.bf16.msra.mxu0 0
    %247 = vmatprep.subr.bf16.mxu0 0
    %248 = vmatpush1.bf16.msra.mxu0 0
    %249 = vmatprep.subr.bf16.mxu0 0
    %250 = vmatpush1.bf16.msra.mxu0 0
    %251 = vmatprep.subr.bf16.mxu0 0
    %252 = vmatpush1.bf16.msra.mxu0 0
    %253 = vmatprep.subr.bf16.mxu0 0
    %254 = vmatpush1.bf16.msra.mxu0 0
    %255 = vmatprep.subr.bf16.mxu0 0
    %256 = vmatpush1.bf16.msra.mxu0 0
    %257 = vmatprep.mubr.bf16.mxu0 0
    %258 = vmatmul.mubr.bf16.gmra.mrb[0].mxu0 %v141
    %v259 = vpop.f32.mrb[0].mxu0
    %v260 = vadd.f32 0.0, %v259
    %v261 = vpop.f32.mrb[0].mxu0
    %v262 = vadd.f32 0.0, %v261
    %v263 = vpop.f32.mrb[0].mxu0
    %v264 = vpop.f32.mrb[0].mxu0
    %265 = vdwg.mxu0
    %266 = vmatprep.subr.bf16.mxu0 %v114
    %267 = vmatpush1.bf16.msra.mxu0 %v113
    %268 = vmatprep.subr.bf16.mxu0 0
    %269 = vmatpush1.bf16.msra.mxu0 0
    %270 = vmatprep.subr.bf16.mxu0 0
    %271 = vmatpush1.bf16.msra.mxu0 0
    %272 = vmatprep.subr.bf16.mxu0 0
    %273 = vmatpush1.bf16.msra.mxu0 0
    %274 = vmatprep.subr.bf16.mxu0 0
    %275 = vmatpush1.bf16.msra.mxu0 0
    %276 = vmatprep.subr.bf16.mxu0 0
    %277 = vmatpush1.bf16.msra.mxu0 0
    %278 = vmatprep.subr.bf16.mxu0 0
    %279 = vmatpush1.bf16.msra.mxu0 0
    %280 = vmatprep.subr.bf16.mxu0 0
    %281 = vmatpush1.bf16.msra.mxu0 0
    %282 = vmatprep.subr.bf16.mxu0 0
    %283 = vmatpush1.bf16.msra.mxu0 0
    %284 = vmatprep.subr.bf16.mxu0 0
    %285 = vmatpush1.bf16.msra.mxu0 0
    %286 = vmatprep.subr.bf16.mxu0 0
    %287 = vmatpush1.bf16.msra.mxu0 0
    %288 = vmatprep.subr.bf16.mxu0 0
    %289 = vmatpush1.bf16.msra.mxu0 0
    %290 = vmatprep.subr.bf16.mxu0 0
    %291 = vmatpush1.bf16.msra.mxu0 0
    %292 = vmatprep.subr.bf16.mxu0 0
    %293 = vmatpush1.bf16.msra.mxu0 0
    %294 = vmatprep.subr.bf16.mxu0 0
    %295 = vmatpush1.bf16.msra.mxu0 0
    %296 = vmatprep.subr.bf16.mxu0 0
    %297 = vmatpush1.bf16.msra.mxu0 0
    %298 = vmatprep.mubr.bf16.mxu0 0
    %299 = vmatmul.mubr.bf16.gmra.mrb[0].mxu0 %v141
    %v300 = vpop.f32.mrb[0].mxu0
    %v301 = vadd.f32 0.0, %v300
    %v302 = vpop.f32.mrb[0].mxu0
    %v303 = vadd.f32 0.0, %v302
    %v304 = vpop.f32.mrb[0].mxu0
    %v305 = vpop.f32.mrb[0].mxu0
    %306 = vdwg.mxu0
    %307 = vmatprep.subr.bf16.mxu0 %v116
    %308 = vmatpush1.bf16.msra.mxu0 %v115
    %309 = vmatprep.subr.bf16.mxu0 0
    %310 = vmatpush1.bf16.msra.mxu0 0
    %311 = vmatprep.subr.bf16.mxu0 0
    %312 = vmatpush1.bf16.msra.mxu0 0
    %313 = vmatprep.subr.bf16.mxu0 0
    %314 = vmatpush1.bf16.msra.mxu0 0
    %315 = vmatprep.subr.bf16.mxu0 0
    %316 = vmatpush1.bf16.msra.mxu0 0
    %317 = vmatprep.subr.bf16.mxu0 0
    %318 = vmatpush1.bf16.msra.mxu0 0
    %319 = vmatprep.subr.bf16.mxu0 0
    %320 = vmatpush1.bf16.msra.mxu0 0
    %321 = vmatprep.subr.bf16.mxu0 0
    %322 = vmatpush1.bf16.msra.mxu0 0
    %323 = vmatprep.subr.bf16.mxu0 0
    %324 = vmatpush1.bf16.msra.mxu0 0
    %325 = vmatprep.subr.bf16.mxu0 0
    %326 = vmatpush1.bf16.msra.mxu0 0
    %327 = vmatprep.subr.bf16.mxu0 0
    %328 = vmatpush1.bf16.msra.mxu0 0
    %329 = vmatprep.subr.bf16.mxu0 0
    %330 = vmatpush1.bf16.msra.mxu0 0
    %331 = vmatprep.subr.bf16.mxu0 0
    %332 = vmatpush1.bf16.msra.mxu0 0
    %333 = vmatprep.subr.bf16.mxu0 0
    %334 = vmatpush1.bf16.msra.mxu0 0
    %335 = vmatprep.subr.bf16.mxu0 0
    %336 = vmatpush1.bf16.msra.mxu0 0
    %337 = vmatprep.subr.bf16.mxu0 0
    %338 = vmatpush1.bf16.msra.mxu0 0
    %339 = vmatprep.mubr.bf16.mxu0 0
    %340 = vmatmul.mubr.bf16.gmra.mrb[0].mxu0 %v141
    %v341 = vpop.f32.mrb[0].mxu0
    %v342 = vadd.f32 0.0, %v341
    %v343 = vpop.f32.mrb[0].mxu0
    %v344 = vadd.f32 0.0, %v343
    %v345 = vpop.f32.mrb[0].mxu0
    %v346 = vpop.f32.mrb[0].mxu0
    %347 = vdwg.mxu0
    %348 = vmatprep.subr.bf16.mxu0 %v118
    %349 = vmatpush1.bf16.msra.mxu0 %v117
    %350 = vmatprep.subr.bf16.mxu0 0
    %351 = vmatpush1.bf16.msra.mxu0 0
    %352 = vmatprep.subr.bf16.mxu0 0
    %353 = vmatpush1.bf16.msra.mxu0 0
    %354 = vmatprep.subr.bf16.mxu0 0
    %355 = vmatpush1.bf16.msra.mxu0 0
    %356 = vmatprep.subr.bf16.mxu0 0
    %357 = vmatpush1.bf16.msra.mxu0 0
    %358 = vmatprep.subr.bf16.mxu0 0
    %359 = vmatpush1.bf16.msra.mxu0 0
    %360 = vmatprep.subr.bf16.mxu0 0
    %361 = vmatpush1.bf16.msra.mxu0 0
    %362 = vmatprep.subr.bf16.mxu0 0
    %363 = vmatpush1.bf16.msra.mxu0 0
    %364 = vmatprep.subr.bf16.mxu0 0
    %365 = vmatpush1.bf16.msra.mxu0 0
    %366 = vmatprep.subr.bf16.mxu0 0
    %367 = vmatpush1.bf16.msra.mxu0 0
    %368 = vmatprep.subr.bf16.mxu0 0
    %369 = vmatpush1.bf16.msra.mxu0 0
    %370 = vmatprep.subr.bf16.mxu0 0
    %371 = vmatpush1.bf16.msra.mxu0 0
    %372 = vmatprep.subr.bf16.mxu0 0
    %373 = vmatpush1.bf16.msra.mxu0 0
    %374 = vmatprep.subr.bf16.mxu0 0
    %375 = vmatpush1.bf16.msra.mxu0 0
    %376 = vmatprep.subr.bf16.mxu0 0
    %377 = vmatpush1.bf16.msra.mxu0 0
    %378 = vmatprep.subr.bf16.mxu0 0
    %379 = vmatpush1.bf16.msra.mxu0 0
    %380 = vmatprep.mubr.bf16.mxu0 0
    %381 = vmatmul.mubr.bf16.gmra.mrb[0].mxu0 %v141
    %v382 = vpop.f32.mrb[0].mxu0
    %v383 = vadd.f32 0.0, %v382
    %v384 = vpop.f32.mrb[0].mxu0
    %v385 = vadd.f32 0.0, %v384
    %v386 = vpop.f32.mrb[0].mxu0
    %v387 = vpop.f32.mrb[0].mxu0
    %388 = vdwg.mxu0
    %389 = vmatprep.subr.bf16.mxu0 %v120
    %390 = vmatpush1.bf16.msra.mxu0 %v119
    %391 = vmatprep.subr.bf16.mxu0 0
    %392 = vmatpush1.bf16.msra.mxu0 0
    %393 = vmatprep.subr.bf16.mxu0 0
    %394 = vmatpush1.bf16.msra.mxu0 0
    %395 = vmatprep.subr.bf16.mxu0 0
    %396 = vmatpush1.bf16.msra.mxu0 0
    %397 = vmatprep.subr.bf16.mxu0 0
    %398 = vmatpush1.bf16.msra.mxu0 0
    %399 = vmatprep.subr.bf16.mxu0 0
    %400 = vmatpush1.bf16.msra.mxu0 0
    %401 = vmatprep.subr.bf16.mxu0 0
    %402 = vmatpush1.bf16.msra.mxu0 0
    %403 = vmatprep.subr.bf16.mxu0 0
    %404 = vmatpush1.bf16.msra.mxu0 0
    %405 = vmatprep.subr.bf16.mxu0 0
    %406 = vmatpush1.bf16.msra.mxu0 0
    %407 = vmatprep.subr.bf16.mxu0 0
    %408 = vmatpush1.bf16.msra.mxu0 0
    %409 = vmatprep.subr.bf16.mxu0 0
    %410 = vmatpush1.bf16.msra.mxu0 0
    %411 = vmatprep.subr.bf16.mxu0 0
    %412 = vmatpush1.bf16.msra.mxu0 0
    %413 = vmatprep.subr.bf16.mxu0 0
    %414 = vmatpush1.bf16.msra.mxu0 0
    %415 = vmatprep.subr.bf16.mxu0 0
    %416 = vmatpush1.bf16.msra.mxu0 0
    %417 = vmatprep.subr.bf16.mxu0 0
    %418 = vmatpush1.bf16.msra.mxu0 0
    %419 = vmatprep.subr.bf16.mxu0 0
    %420 = vmatpush1.bf16.msra.mxu0 0
    %421 = vmatprep.mubr.bf16.mxu0 0
    %422 = vmatmul.mubr.bf16.gmra.mrb[0].mxu0 %v141
    %v423 = vpop.f32.mrb[0].mxu0
    %v424 = vadd.f32 0.0, %v423
    %v425 = vpop.f32.mrb[0].mxu0
    %v426 = vadd.f32 0.0, %v425
    %v427 = vpop.f32.mrb[0].mxu0
    %v428 = vpop.f32.mrb[0].mxu0
    %429 = vdwg.mxu0
    %430 = vmatprep.subr.bf16.mxu0 %v122
    %431 = vmatpush1.bf16.msra.mxu0 %v121
    %432 = vmatprep.subr.bf16.mxu0 0
    %433 = vmatpush1.bf16.msra.mxu0 0
    %434 = vmatprep.subr.bf16.mxu0 0
    %435 = vmatpush1.bf16.msra.mxu0 0
    %436 = vmatprep.subr.bf16.mxu0 0
    %437 = vmatpush1.bf16.msra.mxu0 0
    %438 = vmatprep.subr.bf16.mxu0 0
    %439 = vmatpush1.bf16.msra.mxu0 0
    %440 = vmatprep.subr.bf16.mxu0 0
    %441 = vmatpush1.bf16.msra.mxu0 0
    %442 = vmatprep.subr.bf16.mxu0 0
    %443 = vmatpush1.bf16.msra.mxu0 0
    %444 = vmatprep.subr.bf16.mxu0 0
    %445 = vmatpush1.bf16.msra.mxu0 0
    %446 = vmatprep.subr.bf16.mxu0 0
    %447 = vmatpush1.bf16.msra.mxu0 0
    %448 = vmatprep.subr.bf16.mxu0 0
    %449 = vmatpush1.bf16.msra.mxu0 0
    %450 = vmatprep.subr.bf16.mxu0 0
    %451 = vmatpush1.bf16.msra.mxu0 0
    %452 = vmatprep.subr.bf16.mxu0 0
    %453 = vmatpush1.bf16.msra.mxu0 0
    %454 = vmatprep.subr.bf16.mxu0 0
    %455 = vmatpush1.bf16.msra.mxu0 0
    %456 = vmatprep.subr.bf16.mxu0 0
    %457 = vmatpush1.bf16.msra.mxu0 0
    %458 = vmatprep.subr.bf16.mxu0 0
    %459 = vmatpush1.bf16.msra.mxu0 0
    %460 = vmatprep.subr.bf16.mxu0 0
    %461 = vmatpush1.bf16.msra.mxu0 0
    %462 = vmatprep.mubr.bf16.mxu0 0
    %463 = vmatmul.mubr.bf16.gmra.mrb[0].mxu0 %v141
    %v464 = vpop.f32.mrb[0].mxu0
    %v465 = vadd.f32 0.0, %v464
    %v466 = vpop.f32.mrb[0].mxu0
    %v467 = vadd.f32 0.0, %v466
    %v468 = vpop.f32.mrb[0].mxu0
    %v469 = vpop.f32.mrb[0].mxu0
    %470 = vdwg.mxu0
    %v471 = vmul.f32 %v178, 0.2
    %v472 = vmul.f32 %v180, 0.2
    %v473 = vmul.f32 %v219, 0.2
    %v474 = vmul.f32 %v221, 0.2
    %v475 = vmul.f32 %v260, 0.2
    %v476 = vmul.f32 %v262, 0.2
    %v477 = vmul.f32 %v301, 0.2
    %v478 = vmul.f32 %v303, 0.2
    %v479 = vmul.f32 %v342, 0.2
    %v480 = vmul.f32 %v344, 0.2
    %v481 = vmul.f32 %v383, 0.2
    %v482 = vmul.f32 %v385, 0.2
    %v483 = vmul.f32 %v424, 0.2
    %v484 = vmul.f32 %v426, 0.2
    %v485 = vmul.f32 %v465, 0.2
    %v486 = vmul.f32 %v467, 0.2
    %v487 = vmax.f32 %v178, %v471
    %v488 = vmax.f32 %v180, %v472
    %v489 = vmax.f32 %v219, %v473
    %v490 = vmax.f32 %v221, %v474
    %v491 = vmax.f32 %v260, %v475
    %v492 = vmax.f32 %v262, %v476
    %v493 = vmax.f32 %v301, %v477
    %v494 = vmax.f32 %v303, %v478
    %v495 = vmax.f32 %v342, %v479
    %v496 = vmax.f32 %v344, %v480
    %v497 = vmax.f32 %v383, %v481
    %v498 = vmax.f32 %v385, %v482
    %v499 = vmax.f32 %v424, %v483
    %v500 = vmax.f32 %v426, %v484
    %v501 = vmax.f32 %v465, %v485
    %v502 = vmax.f32 %v467, %v486
    %v503 = vpack.c.bf16 %v487, %v487
    %v504 = vpack.c.bf16 %v488, %v488
    %v505 = vpack.c.bf16 %v489, %v489
    %v506 = vpack.c.bf16 %v490, %v490
    %v507 = vpack.c.bf16 %v491, %v491
    %v508 = vpack.c.bf16 %v492, %v492
    %v509 = vpack.c.bf16 %v493, %v493
    %v510 = vpack.c.bf16 %v494, %v494
    %v511 = vpack.c.bf16 %v495, %v495
    %v512 = vpack.c.bf16 %v496, %v496
    %v513 = vpack.c.bf16 %v497, %v497
    %v514 = vpack.c.bf16 %v498, %v498
    %v515 = vpack.c.bf16 %v499, %v499
    %v516 = vpack.c.bf16 %v500, %v500
    %v517 = vpack.c.bf16 %v501, %v501
    %v518 = vpack.c.bf16 %v502, %v502
    %v519 = vlaneseq
    %v520 = vand.u32 %v519, 127
    %v521 = vadd.s32 %v520, 128
    %v522 = vadd.s32 %v520, 256
    %v523 = vadd.s32 %v520, 384
    %v524 = vand.u32 %v520, 15
    %v525 = vand.u32 %v521, 15
    %v526 = vand.u32 %v522, 15
    %v527 = vand.u32 %v523, 15
    %v528 = vshra.s32 %v520, 4
    %v529 = vshra.s32 %v521, 4
    %v530 = vshra.s32 %v522, 4
    %v531 = vshra.s32 %v523, 4
    %v532 = vand.u32 %v528, 15
    %v533 = vand.u32 %v529, 15
    %v534 = vand.u32 %v530, 15
    %v535 = vand.u32 %v531, 15
    %537 = vrot.lane.b32.xlu0 %v518, 17
    %v538 = vpop.permute.xlu0 %537
    %542 = vrot.lane.b32.xlu0 %v515, 17
    %v543 = vpop.permute.xlu0 %542
    %544 = vrot.lane.b32.xlu0 %v516, 17
    %v545 = vpop.permute.xlu0 %544
    %546 = vrot.lane.b32.xlu0 %v517, 17
    %v547 = vpop.permute.xlu0 %546
    %vm548 = vcmask 138240
    %v549 = vsel %vm548, %v543, %v545
    %v550 = vsel %vm548, %v545, %v547
    %v551 = vsel %vm548, %v547, %v538
    %vm555 = vcmask 138240
    %v558 = vsel %vm555, %v538, %v543
    %v560 = vadd.s32 %v532, 4294967295
    %v561 = vadd.s32 %v533, 4294967295
    %v562 = vadd.s32 %v534, 4294967295
    %v563 = vadd.s32 %v535, 4294967295
    %vm564 = vcmp.ge.s32.totalorder %v560, 0
    %vm565 = vcmp.ge.s32.totalorder %v561, 0
    %vm566 = vcmp.ge.s32.totalorder %v562, 0
    %vm567 = vcmp.ge.s32.totalorder %v563, 0
    %vm568 = vcmp.lt.s32.totalorder %v560, 16
    %vm569 = vcmp.lt.s32.totalorder %v561, 16
    %vm570 = vcmp.lt.s32.totalorder %v562, 16
    %vm571 = vcmp.lt.s32.totalorder %v563, 16
    %vm572 = vmand %vm564, %vm568
    %vm573 = vmand %vm565, %vm569
    %vm574 = vmand %vm566, %vm570
    %vm575 = vmand %vm567, %vm571
    %v576 = vadd.s32 %v524, 4294967295
    %v577 = vadd.s32 %v525, 4294967295
    %v578 = vadd.s32 %v526, 4294967295
    %v579 = vadd.s32 %v527, 4294967295
    %vm580 = vcmp.ge.s32.totalorder %v576, 0
    %vm581 = vcmp.ge.s32.totalorder %v577, 0
    %vm582 = vcmp.ge.s32.totalorder %v578, 0
    %vm583 = vcmp.ge.s32.totalorder %v579, 0
    %vm584 = vcmp.lt.s32.totalorder %v576, 16
    %vm585 = vcmp.lt.s32.totalorder %v577, 16
    %vm586 = vcmp.lt.s32.totalorder %v578, 16
    %vm587 = vcmp.lt.s32.totalorder %v579, 16
    %vm588 = vmand %vm580, %vm584
    %vm589 = vmand %vm581, %vm585
    %vm590 = vmand %vm582, %vm586
    %vm591 = vmand %vm583, %vm587
    %vm592 = vmand %vm572, %vm588
    %vm593 = vmand %vm573, %vm589
    %vm594 = vmand %vm574, %vm590
    %vm595 = vmand %vm575, %vm591
    %v596 = vsel %vm592, 1, 0
    %v597 = vsel %vm593, 1, 0
    %v598 = vsel %vm594, 1, 0
    %v599 = vsel %vm595, 1, 0
    %vm600 = vcmp.eq.s32.totalorder %v596, 1
    %vm601 = vcmp.eq.s32.totalorder %v597, 1
    %vm602 = vcmp.eq.s32.totalorder %v598, 1
    %vm603 = vcmp.eq.s32.totalorder %v599, 1
    %vm604 = vmpackc.low %vm601, %vm600
    %vm605 = vmpackc.low %vm603, %vm602
    %v606 = vsel %vm604, 65537, 0
    %v607 = vsel %vm605, 65537, 0
    %v608 = vlaneseq
    %v609 = vshrl.u32 %v608, 7
    %v610 = vsub.s32 0, %v609
    %v611 = vrot.slane %v606, %v610
    %v612 = vlaneseq
    %v613 = vshrl.u32 %v612, 7
    %v614 = vsub.s32 4, %v613
    %v615 = vrot.slane %v606, %v614
    %v616 = vlaneseq
    %v617 = vshrl.u32 %v616, 7
    %v618 = vsub.s32 0, %v617
    %v619 = vrot.slane %v607, %v618
    %v620 = vlaneseq
    %v621 = vshrl.u32 %v620, 7
    %v622 = vsub.s32 4, %v621
    %v623 = vrot.slane %v607, %v622
    %vm624 = vcmp.ne.s16.totalorder %v611, 0
    %vm625 = vcmp.ne.s16.totalorder %v615, 0
    %vm626 = vcmp.ne.s16.totalorder %v619, 0
    %vm627 = vcmp.ne.s16.totalorder %v623, 0
    %v628 = vsel %vm624, %v558, 0
    %v629 = vsel %vm625, %v549, 0
    %v630 = vsel %vm626, %v550, 0
    %v631 = vsel %vm627, %v551, 0
    %633 = vrot.lane.b32.xlu0 %v514, 16
    %v634 = vpop.permute.xlu0 %633
    %638 = vrot.lane.b32.xlu0 %v511, 16
    %v639 = vpop.permute.xlu0 %638
    %640 = vrot.lane.b32.xlu0 %v512, 16
    %v641 = vpop.permute.xlu0 %640
    %642 = vrot.lane.b32.xlu0 %v513, 16
    %v643 = vpop.permute.xlu0 %642
    %vm644 = vcmask 130048
    %v645 = vsel %vm644, %v639, %v641
    %v646 = vsel %vm644, %v641, %v643
    %v647 = vsel %vm644, %v643, %v634
    %v653 = vsel %vm139, %v634, %v639
    %v655 = vsel %vm572, 1, 0
    %v656 = vsel %vm573, 1, 0
    %v657 = vsel %vm574, 1, 0
    %v658 = vsel %vm575, 1, 0
    %vm659 = vcmp.eq.s32.totalorder %v655, 1
    %vm660 = vcmp.eq.s32.totalorder %v656, 1
    %vm661 = vcmp.eq.s32.totalorder %v657, 1
    %vm662 = vcmp.eq.s32.totalorder %v658, 1
    %vm663 = vmpackc.low %vm660, %vm659
    %vm664 = vmpackc.low %vm662, %vm661
    %v665 = vsel %vm663, 65537, 0
    %v666 = vsel %vm664, 65537, 0
    %v667 = vlaneseq
    %v668 = vshrl.u32 %v667, 7
    %v669 = vsub.s32 0, %v668
    %v670 = vrot.slane %v665, %v669
    %v671 = vlaneseq
    %v672 = vshrl.u32 %v671, 7
    %v673 = vsub.s32 4, %v672
    %v674 = vrot.slane %v665, %v673
    %v675 = vlaneseq
    %v676 = vshrl.u32 %v675, 7
    %v677 = vsub.s32 0, %v676
    %v678 = vrot.slane %v666, %v677
    %v679 = vlaneseq
    %v680 = vshrl.u32 %v679, 7
    %v681 = vsub.s32 4, %v680
    %v682 = vrot.slane %v666, %v681
    %vm683 = vcmp.ne.s16.totalorder %v670, 0
    %vm684 = vcmp.ne.s16.totalorder %v674, 0
    %vm685 = vcmp.ne.s16.totalorder %v678, 0
    %vm686 = vcmp.ne.s16.totalorder %v682, 0
    %v687 = vsel %vm683, %v653, 0
    %v688 = vsel %vm684, %v645, 0
    %v689 = vsel %vm685, %v646, 0
    %v690 = vsel %vm686, %v647, 0
    %691 = vrot.lane.b32.xlu0 %v518, 16
    %v692 = vpop.permute.xlu0 %691
    %693 = vrot.lane.b32.xlu0 %v515, 16
    %v694 = vpop.permute.xlu0 %693
    %695 = vrot.lane.b32.xlu0 %v516, 16
    %v696 = vpop.permute.xlu0 %695
    %697 = vrot.lane.b32.xlu0 %v517, 16
    %v698 = vpop.permute.xlu0 %697
    %v699 = vsel %vm644, %v694, %v696
    %v700 = vsel %vm644, %v696, %v698
    %v701 = vsel %vm644, %v698, %v692
    %v707 = vsel %vm139, %v692, %v694
    %v709 = vsel %vm683, %v707, 0
    %v710 = vsel %vm684, %v699, 0
    %v711 = vsel %vm685, %v700, 0
    %v712 = vsel %vm686, %v701, 0
    %713 = vrot.lane.b32.xlu0 %v514, 15
    %v714 = vpop.permute.xlu0 %713
    %715 = vrot.lane.b32.xlu0 %v511, 15
    %v716 = vpop.permute.xlu0 %715
    %717 = vrot.lane.b32.xlu0 %v512, 15
    %v718 = vpop.permute.xlu0 %717
    %719 = vrot.lane.b32.xlu0 %v513, 15
    %v720 = vpop.permute.xlu0 %719
    %vm721 = vcmask 121856
    %v722 = vsel %vm721, %v716, %v718
    %v723 = vsel %vm721, %v718, %v720
    %v724 = vsel %vm721, %v720, %v714
    %vm728 = vcmask 121856
    %v731 = vsel %vm728, %v714, %v716
    %v733 = vadd.s32 %v524, 1
    %v734 = vadd.s32 %v525, 1
    %v735 = vadd.s32 %v526, 1
    %v736 = vadd.s32 %v527, 1
    %vm737 = vcmp.ge.s32.totalorder %v733, 0
    %vm738 = vcmp.ge.s32.totalorder %v734, 0
    %vm739 = vcmp.ge.s32.totalorder %v735, 0
    %vm740 = vcmp.ge.s32.totalorder %v736, 0
    %vm741 = vcmp.lt.s32.totalorder %v733, 16
    %vm742 = vcmp.lt.s32.totalorder %v734, 16
    %vm743 = vcmp.lt.s32.totalorder %v735, 16
    %vm744 = vcmp.lt.s32.totalorder %v736, 16
    %vm745 = vmand %vm737, %vm741
    %vm746 = vmand %vm738, %vm742
    %vm747 = vmand %vm739, %vm743
    %vm748 = vmand %vm740, %vm744
    %vm749 = vmand %vm572, %vm745
    %vm750 = vmand %vm573, %vm746
    %vm751 = vmand %vm574, %vm747
    %vm752 = vmand %vm575, %vm748
    %v753 = vsel %vm749, 1, 0
    %v754 = vsel %vm750, 1, 0
    %v755 = vsel %vm751, 1, 0
    %v756 = vsel %vm752, 1, 0
    %vm757 = vcmp.eq.s32.totalorder %v753, 1
    %vm758 = vcmp.eq.s32.totalorder %v754, 1
    %vm759 = vcmp.eq.s32.totalorder %v755, 1
    %vm760 = vcmp.eq.s32.totalorder %v756, 1
    %vm761 = vmpackc.low %vm758, %vm757
    %vm762 = vmpackc.low %vm760, %vm759
    %v763 = vsel %vm761, 65537, 0
    %v764 = vsel %vm762, 65537, 0
    %v765 = vlaneseq
    %v766 = vshrl.u32 %v765, 7
    %v767 = vsub.s32 0, %v766
    %v768 = vrot.slane %v763, %v767
    %v769 = vlaneseq
    %v770 = vshrl.u32 %v769, 7
    %v771 = vsub.s32 4, %v770
    %v772 = vrot.slane %v763, %v771
    %v773 = vlaneseq
    %v774 = vshrl.u32 %v773, 7
    %v775 = vsub.s32 0, %v774
    %v776 = vrot.slane %v764, %v775
    %v777 = vlaneseq
    %v778 = vshrl.u32 %v777, 7
    %v779 = vsub.s32 4, %v778
    %v780 = vrot.slane %v764, %v779
    %vm781 = vcmp.ne.s16.totalorder %v768, 0
    %vm782 = vcmp.ne.s16.totalorder %v772, 0
    %vm783 = vcmp.ne.s16.totalorder %v776, 0
    %vm784 = vcmp.ne.s16.totalorder %v780, 0
    %v785 = vsel %vm781, %v731, 0
    %v786 = vsel %vm782, %v722, 0
    %v787 = vsel %vm783, %v723, 0
    %v788 = vsel %vm784, %v724, 0
    %790 = vrot.lane.b32.xlu0 %v510, 1
    %v791 = vpop.permute.xlu0 %790
    %795 = vrot.lane.b32.xlu0 %v507, 1
    %v796 = vpop.permute.xlu0 %795
    %797 = vrot.lane.b32.xlu0 %v508, 1
    %v798 = vpop.permute.xlu0 %797
    %799 = vrot.lane.b32.xlu0 %v509, 1
    %v800 = vpop.permute.xlu0 %799
    %vm801 = vcmask 7168
    %v802 = vsel %vm801, %v796, %v798
    %v803 = vsel %vm801, %v798, %v800
    %v804 = vsel %vm801, %v800, %v791
    %vm808 = vcmask 7168
    %v811 = vsel %vm808, %v791, %v796
    %v813 = vsel %vm588, 1, 0
    %v814 = vsel %vm589, 1, 0
    %v815 = vsel %vm590, 1, 0
    %v816 = vsel %vm591, 1, 0
    %vm817 = vcmp.eq.s32.totalorder %v813, 1
    %vm818 = vcmp.eq.s32.totalorder %v814, 1
    %vm819 = vcmp.eq.s32.totalorder %v815, 1
    %vm820 = vcmp.eq.s32.totalorder %v816, 1
    %vm821 = vmpackc.low %vm818, %vm817
    %vm822 = vmpackc.low %vm820, %vm819
    %v823 = vsel %vm821, 65537, 0
    %v824 = vsel %vm822, 65537, 0
    %v825 = vlaneseq
    %v826 = vshrl.u32 %v825, 7
    %v827 = vsub.s32 0, %v826
    %v828 = vrot.slane %v823, %v827
    %v829 = vlaneseq
    %v830 = vshrl.u32 %v829, 7
    %v831 = vsub.s32 4, %v830
    %v832 = vrot.slane %v823, %v831
    %v833 = vlaneseq
    %v834 = vshrl.u32 %v833, 7
    %v835 = vsub.s32 0, %v834
    %v836 = vrot.slane %v824, %v835
    %v837 = vlaneseq
    %v838 = vshrl.u32 %v837, 7
    %v839 = vsub.s32 4, %v838
    %v840 = vrot.slane %v824, %v839
    %vm841 = vcmp.ne.s16.totalorder %v828, 0
    %vm842 = vcmp.ne.s16.totalorder %v832, 0
    %vm843 = vcmp.ne.s16.totalorder %v836, 0
    %vm844 = vcmp.ne.s16.totalorder %v840, 0
    %v845 = vsel %vm841, %v811, 0
    %v846 = vsel %vm842, %v802, 0
    %v847 = vsel %vm843, %v803, 0
    %v848 = vsel %vm844, %v804, 0
    %853 = vrot.lane.b32.xlu0 %v503, 127
    %v854 = vpop.permute.xlu0 %853
    %855 = vrot.lane.b32.xlu0 %v504, 127
    %v856 = vpop.permute.xlu0 %855
    %857 = vrot.lane.b32.xlu0 %v505, 127
    %v858 = vpop.permute.xlu0 %857
    %859 = vrot.lane.b32.xlu0 %v506, 127
    %v860 = vpop.permute.xlu0 %859
    %vm861 = vcmask 1039360
    %v862 = vsel %vm861, %v854, %v856
    %v863 = vsel %vm861, %v856, %v858
    %v864 = vsel %vm861, %v858, %v860
    %vm868 = vcmask 1039360
    %v871 = vsel %vm868, %v860, %v854
    %v873 = vsel %vm745, 1, 0
    %v874 = vsel %vm746, 1, 0
    %v875 = vsel %vm747, 1, 0
    %v876 = vsel %vm748, 1, 0
    %vm877 = vcmp.eq.s32.totalorder %v873, 1
    %vm878 = vcmp.eq.s32.totalorder %v874, 1
    %vm879 = vcmp.eq.s32.totalorder %v875, 1
    %vm880 = vcmp.eq.s32.totalorder %v876, 1
    %vm881 = vmpackc.low %vm878, %vm877
    %vm882 = vmpackc.low %vm880, %vm879
    %v883 = vsel %vm881, 65537, 0
    %v884 = vsel %vm882, 65537, 0
    %v885 = vlaneseq
    %v886 = vshrl.u32 %v885, 7
    %v887 = vsub.s32 0, %v886
    %v888 = vrot.slane %v883, %v887
    %v889 = vlaneseq
    %v890 = vshrl.u32 %v889, 7
    %v891 = vsub.s32 4, %v890
    %v892 = vrot.slane %v883, %v891
    %v893 = vlaneseq
    %v894 = vshrl.u32 %v893, 7
    %v895 = vsub.s32 0, %v894
    %v896 = vrot.slane %v884, %v895
    %v897 = vlaneseq
    %v898 = vshrl.u32 %v897, 7
    %v899 = vsub.s32 4, %v898
    %v900 = vrot.slane %v884, %v899
    %vm901 = vcmp.ne.s16.totalorder %v888, 0
    %vm902 = vcmp.ne.s16.totalorder %v892, 0
    %vm903 = vcmp.ne.s16.totalorder %v896, 0
    %vm904 = vcmp.ne.s16.totalorder %v900, 0
    %v905 = vsel %vm901, %v862, 0
    %v906 = vsel %vm902, %v863, 0
    %v907 = vsel %vm903, %v864, 0
    %v908 = vsel %vm904, %v871, 0
    %909 = vrot.lane.b32.xlu0 %v518, 1
    %v910 = vpop.permute.xlu0 %909
    %911 = vrot.lane.b32.xlu0 %v515, 1
    %v912 = vpop.permute.xlu0 %911
    %913 = vrot.lane.b32.xlu0 %v516, 1
    %v914 = vpop.permute.xlu0 %913
    %915 = vrot.lane.b32.xlu0 %v517, 1
    %v916 = vpop.permute.xlu0 %915
    %v917 = vsel %vm801, %v912, %v914
    %v918 = vsel %vm801, %v914, %v916
    %v919 = vsel %vm801, %v916, %v910
    %v925 = vsel %vm808, %v910, %v912
    %v927 = vsel %vm841, %v925, 0
    %v928 = vsel %vm842, %v917, 0
    %v929 = vsel %vm843, %v918, 0
    %v930 = vsel %vm844, %v919, 0
    %931 = vrot.lane.b32.xlu0 %v511, 127
    %v932 = vpop.permute.xlu0 %931
    %933 = vrot.lane.b32.xlu0 %v512, 127
    %v934 = vpop.permute.xlu0 %933
    %935 = vrot.lane.b32.xlu0 %v513, 127
    %v936 = vpop.permute.xlu0 %935
    %937 = vrot.lane.b32.xlu0 %v514, 127
    %v938 = vpop.permute.xlu0 %937
    %v939 = vsel %vm861, %v932, %v934
    %v940 = vsel %vm861, %v934, %v936
    %v941 = vsel %vm861, %v936, %v938
    %v947 = vsel %vm868, %v938, %v932
    %v949 = vsel %vm901, %v939, 0
    %v950 = vsel %vm902, %v940, 0
    %v951 = vsel %vm903, %v941, 0
    %v952 = vsel %vm904, %v947, 0
    %953 = vrot.lane.b32.xlu0 %v507, 113
    %v954 = vpop.permute.xlu0 %953
    %955 = vrot.lane.b32.xlu0 %v508, 113
    %v956 = vpop.permute.xlu0 %955
    %957 = vrot.lane.b32.xlu0 %v509, 113
    %v958 = vpop.permute.xlu0 %957
    %959 = vrot.lane.b32.xlu0 %v510, 113
    %v960 = vpop.permute.xlu0 %959
    %vm961 = vcmask 924672
    %v962 = vsel %vm961, %v954, %v956
    %v963 = vsel %vm961, %v956, %v958
    %v964 = vsel %vm961, %v958, %v960
    %vm968 = vcmask 924672
    %v971 = vsel %vm968, %v960, %v954
    %v973 = vadd.s32 %v532, 1
    %v974 = vadd.s32 %v533, 1
    %v975 = vadd.s32 %v534, 1
    %v976 = vadd.s32 %v535, 1
    %vm977 = vcmp.ge.s32.totalorder %v973, 0
    %vm978 = vcmp.ge.s32.totalorder %v974, 0
    %vm979 = vcmp.ge.s32.totalorder %v975, 0
    %vm980 = vcmp.ge.s32.totalorder %v976, 0
    %vm981 = vcmp.lt.s32.totalorder %v973, 16
    %vm982 = vcmp.lt.s32.totalorder %v974, 16
    %vm983 = vcmp.lt.s32.totalorder %v975, 16
    %vm984 = vcmp.lt.s32.totalorder %v976, 16
    %vm985 = vmand %vm977, %vm981
    %vm986 = vmand %vm978, %vm982
    %vm987 = vmand %vm979, %vm983
    %vm988 = vmand %vm980, %vm984
    %vm989 = vmand %vm985, %vm588
    %vm990 = vmand %vm986, %vm589
    %vm991 = vmand %vm987, %vm590
    %vm992 = vmand %vm988, %vm591
    %v993 = vsel %vm989, 1, 0
    %v994 = vsel %vm990, 1, 0
    %v995 = vsel %vm991, 1, 0
    %v996 = vsel %vm992, 1, 0
    %vm997 = vcmp.eq.s32.totalorder %v993, 1
    %vm998 = vcmp.eq.s32.totalorder %v994, 1
    %vm999 = vcmp.eq.s32.totalorder %v995, 1
    %vm1000 = vcmp.eq.s32.totalorder %v996, 1
    %vm1001 = vmpackc.low %vm998, %vm997
    %vm1002 = vmpackc.low %vm1000, %vm999
    %v1003 = vsel %vm1001, 65537, 0
    %v1004 = vsel %vm1002, 65537, 0
    %v1005 = vlaneseq
    %v1006 = vshrl.u32 %v1005, 7
    %v1007 = vsub.s32 0, %v1006
    %v1008 = vrot.slane %v1003, %v1007
    %v1009 = vlaneseq
    %v1010 = vshrl.u32 %v1009, 7
    %v1011 = vsub.s32 4, %v1010
    %v1012 = vrot.slane %v1003, %v1011
    %v1013 = vlaneseq
    %v1014 = vshrl.u32 %v1013, 7
    %v1015 = vsub.s32 0, %v1014
    %v1016 = vrot.slane %v1004, %v1015
    %v1017 = vlaneseq
    %v1018 = vshrl.u32 %v1017, 7
    %v1019 = vsub.s32 4, %v1018
    %v1020 = vrot.slane %v1004, %v1019
    %vm1021 = vcmp.ne.s16.totalorder %v1008, 0
    %vm1022 = vcmp.ne.s16.totalorder %v1012, 0
    %vm1023 = vcmp.ne.s16.totalorder %v1016, 0
    %vm1024 = vcmp.ne.s16.totalorder %v1020, 0
    %v1025 = vsel %vm1021, %v962, 0
    %v1026 = vsel %vm1022, %v963, 0
    %v1027 = vsel %vm1023, %v964, 0
    %v1028 = vsel %vm1024, %v971, 0
    %1029 = vrot.lane.b32.xlu0 %v503, 112
    %v1030 = vpop.permute.xlu0 %1029
    %1031 = vrot.lane.b32.xlu0 %v504, 112
    %v1032 = vpop.permute.xlu0 %1031
    %1033 = vrot.lane.b32.xlu0 %v505, 112
    %v1034 = vpop.permute.xlu0 %1033
    %1035 = vrot.lane.b32.xlu0 %v506, 112
    %v1036 = vpop.permute.xlu0 %1035
    %vm1037 = vcmask 916480
    %v1038 = vsel %vm1037, %v1030, %v1032
    %v1039 = vsel %vm1037, %v1032, %v1034
    %v1040 = vsel %vm1037, %v1034, %v1036
    %vm1044 = vcmask 916480
    %v1047 = vsel %vm1044, %v1036, %v1030
    %v1049 = vsel %vm985, 1, 0
    %v1050 = vsel %vm986, 1, 0
    %v1051 = vsel %vm987, 1, 0
    %v1052 = vsel %vm988, 1, 0
    %vm1053 = vcmp.eq.s32.totalorder %v1049, 1
    %vm1054 = vcmp.eq.s32.totalorder %v1050, 1
    %vm1055 = vcmp.eq.s32.totalorder %v1051, 1
    %vm1056 = vcmp.eq.s32.totalorder %v1052, 1
    %vm1057 = vmpackc.low %vm1054, %vm1053
    %vm1058 = vmpackc.low %vm1056, %vm1055
    %v1059 = vsel %vm1057, 65537, 0
    %v1060 = vsel %vm1058, 65537, 0
    %v1061 = vlaneseq
    %v1062 = vshrl.u32 %v1061, 7
    %v1063 = vsub.s32 0, %v1062
    %v1064 = vrot.slane %v1059, %v1063
    %v1065 = vlaneseq
    %v1066 = vshrl.u32 %v1065, 7
    %v1067 = vsub.s32 4, %v1066
    %v1068 = vrot.slane %v1059, %v1067
    %v1069 = vlaneseq
    %v1070 = vshrl.u32 %v1069, 7
    %v1071 = vsub.s32 0, %v1070
    %v1072 = vrot.slane %v1060, %v1071
    %v1073 = vlaneseq
    %v1074 = vshrl.u32 %v1073, 7
    %v1075 = vsub.s32 4, %v1074
    %v1076 = vrot.slane %v1060, %v1075
    %vm1077 = vcmp.ne.s16.totalorder %v1064, 0
    %vm1078 = vcmp.ne.s16.totalorder %v1068, 0
    %vm1079 = vcmp.ne.s16.totalorder %v1072, 0
    %vm1080 = vcmp.ne.s16.totalorder %v1076, 0
    %v1081 = vsel %vm1077, %v1038, 0
    %v1082 = vsel %vm1078, %v1039, 0
    %v1083 = vsel %vm1079, %v1040, 0
    %v1084 = vsel %vm1080, %v1047, 0
    %1085 = vrot.lane.b32.xlu0 %v507, 112
    %v1086 = vpop.permute.xlu0 %1085
    %1087 = vrot.lane.b32.xlu0 %v508, 112
    %v1088 = vpop.permute.xlu0 %1087
    %1089 = vrot.lane.b32.xlu0 %v509, 112
    %v1090 = vpop.permute.xlu0 %1089
    %1091 = vrot.lane.b32.xlu0 %v510, 112
    %v1092 = vpop.permute.xlu0 %1091
    %v1093 = vsel %vm1037, %v1086, %v1088
    %v1094 = vsel %vm1037, %v1088, %v1090
    %v1095 = vsel %vm1037, %v1090, %v1092
    %v1101 = vsel %vm1044, %v1092, %v1086
    %v1103 = vsel %vm1077, %v1093, 0
    %v1104 = vsel %vm1078, %v1094, 0
    %v1105 = vsel %vm1079, %v1095, 0
    %v1106 = vsel %vm1080, %v1101, 0
    %1107 = vrot.lane.b32.xlu0 %v503, 111
    %v1108 = vpop.permute.xlu0 %1107
    %1109 = vrot.lane.b32.xlu0 %v504, 111
    %v1110 = vpop.permute.xlu0 %1109
    %1111 = vrot.lane.b32.xlu0 %v505, 111
    %v1112 = vpop.permute.xlu0 %1111
    %1113 = vrot.lane.b32.xlu0 %v506, 111
    %v1114 = vpop.permute.xlu0 %1113
    %vm1115 = vcmask 908288
    %v1116 = vsel %vm1115, %v1108, %v1110
    %v1117 = vsel %vm1115, %v1110, %v1112
    %v1118 = vsel %vm1115, %v1112, %v1114
    %vm1122 = vcmask 908288
    %v1125 = vsel %vm1122, %v1114, %v1108
    %vm1127 = vmand %vm985, %vm745
    %vm1128 = vmand %vm986, %vm746
    %vm1129 = vmand %vm987, %vm747
    %vm1130 = vmand %vm988, %vm748
    %v1131 = vsel %vm1127, 1, 0
    %v1132 = vsel %vm1128, 1, 0
    %v1133 = vsel %vm1129, 1, 0
    %v1134 = vsel %vm1130, 1, 0
    %vm1135 = vcmp.eq.s32.totalorder %v1131, 1
    %vm1136 = vcmp.eq.s32.totalorder %v1132, 1
    %vm1137 = vcmp.eq.s32.totalorder %v1133, 1
    %vm1138 = vcmp.eq.s32.totalorder %v1134, 1
    %vm1139 = vmpackc.low %vm1136, %vm1135
    %vm1140 = vmpackc.low %vm1138, %vm1137
    %v1141 = vsel %vm1139, 65537, 0
    %v1142 = vsel %vm1140, 65537, 0
    %v1143 = vlaneseq
    %v1144 = vshrl.u32 %v1143, 7
    %v1145 = vsub.s32 0, %v1144
    %v1146 = vrot.slane %v1141, %v1145
    %v1147 = vlaneseq
    %v1148 = vshrl.u32 %v1147, 7
    %v1149 = vsub.s32 4, %v1148
    %v1150 = vrot.slane %v1141, %v1149
    %v1151 = vlaneseq
    %v1152 = vshrl.u32 %v1151, 7
    %v1153 = vsub.s32 0, %v1152
    %v1154 = vrot.slane %v1142, %v1153
    %v1155 = vlaneseq
    %v1156 = vshrl.u32 %v1155, 7
    %v1157 = vsub.s32 4, %v1156
    %v1158 = vrot.slane %v1142, %v1157
    %vm1159 = vcmp.ne.s16.totalorder %v1146, 0
    %vm1160 = vcmp.ne.s16.totalorder %v1150, 0
    %vm1161 = vcmp.ne.s16.totalorder %v1154, 0
    %vm1162 = vcmp.ne.s16.totalorder %v1158, 0
    %v1163 = vsel %vm1159, %v1116, 0
    %v1164 = vsel %vm1160, %v1117, 0
    %v1165 = vsel %vm1161, %v1118, 0
    %v1166 = vsel %vm1162, %v1125, 0
    %v1171 = vrot.slane %v687, 4
    %v1172 = vrot.slane %v688, 4
    %v1173 = vrot.slane %v689, 4
    %v1174 = vrot.slane %v690, 4
    %v1179 = vrot.slane %v785, 4
    %v1180 = vrot.slane %v786, 4
    %v1181 = vrot.slane %v787, 4
    %v1182 = vrot.slane %v788, 4
    %v1183 = vrot.slane %v503, 4
    %v1184 = vrot.slane %v504, 4
    %v1185 = vrot.slane %v505, 4
    %v1186 = vrot.slane %v506, 4
    %v1191 = vrot.slane %v905, 4
    %v1192 = vrot.slane %v906, 4
    %v1193 = vrot.slane %v907, 4
    %v1194 = vrot.slane %v908, 4
    %v1195 = vrot.slane %v511, 4
    %v1196 = vrot.slane %v512, 4
    %v1197 = vrot.slane %v513, 4
    %v1198 = vrot.slane %v514, 4
    %v1203 = vrot.slane %v949, 4
    %v1204 = vrot.slane %v950, 4
    %v1205 = vrot.slane %v951, 4
    %v1206 = vrot.slane %v952, 4
    %v1211 = vrot.slane %v1081, 4
    %v1212 = vrot.slane %v1082, 4
    %v1213 = vrot.slane %v1083, 4
    %v1214 = vrot.slane %v1084, 4
    %v1219 = vrot.slane %v1163, 4
    %v1220 = vrot.slane %v1164, 4
    %v1221 = vrot.slane %v1165, 4
    %v1222 = vrot.slane %v1166, 4
    %vm1223 = vcmask 1043456
    %v1226 = vsel %vm1223, %v628, %v1171
    %v1230 = vsel %vm1223, %v629, %v1172
    %v1234 = vsel %vm1223, %v630, %v1173
    %v1238 = vsel %vm1223, %v631, %v1174
    %v1242 = vsel %vm1223, %v709, %v1179
    %v1246 = vsel %vm1223, %v710, %v1180
    %v1250 = vsel %vm1223, %v711, %v1181
    %v1254 = vsel %vm1223, %v712, %v1182
    %v1258 = vsel %vm1223, %v845, %v1183
    %v1262 = vsel %vm1223, %v846, %v1184
    %v1266 = vsel %vm1223, %v847, %v1185
    %v1270 = vsel %vm1223, %v848, %v1186
    %v1274 = vsel %vm1223, %v507, %v1191
    %v1278 = vsel %vm1223, %v508, %v1192
    %v1282 = vsel %vm1223, %v509, %v1193
    %v1286 = vsel %vm1223, %v510, %v1194
    %v1290 = vsel %vm1223, %v927, %v1195
    %v1294 = vsel %vm1223, %v928, %v1196
    %v1298 = vsel %vm1223, %v929, %v1197
    %v1302 = vsel %vm1223, %v930, %v1198
    %v1306 = vsel %vm1223, %v515, %v1203
    %v1310 = vsel %vm1223, %v516, %v1204
    %v1314 = vsel %vm1223, %v517, %v1205
    %v1318 = vsel %vm1223, %v518, %v1206
    %v1322 = vsel %vm1223, %v1025, %v1211
    %v1326 = vsel %vm1223, %v1026, %v1212
    %v1330 = vsel %vm1223, %v1027, %v1213
    %v1334 = vsel %vm1223, %v1028, %v1214
    %v1338 = vsel %vm1223, %v1103, %v1219
    %v1342 = vsel %vm1223, %v1104, %v1220
    %v1346 = vsel %vm1223, %v1105, %v1221
    %v1350 = vsel %vm1223, %v1106, %v1222
    %v1352 = vld [vmem:[%s2] sm:$0xf]
    %v1353 = vld [vmem:[%s2 + $0x4] sm:$0xf]
    %v1356 = vunpack.c.l.b16 %v1352
    %v1357 = vunpack.c.l.b16 %v1353
    %v1358 = vpack.c.b16 %v1357, %v1356
    %1360 = vmatprep.subr.bf16.mxu0 %v1230
    %1361 = vmatpush1.bf16.msra.mxu0 %v1226
    %1362 = vmatprep.subr.bf16.mxu0 %v1246
    %1363 = vmatpush1.bf16.msra.mxu0 %v1242
    %1364 = vmatprep.subr.bf16.mxu0 %v1262
    %1365 = vmatpush1.bf16.msra.mxu0 %v1258
    %1366 = vmatprep.subr.bf16.mxu0 %v1278
    %1367 = vmatpush1.bf16.msra.mxu0 %v1274
    %1368 = vmatprep.subr.bf16.mxu0 %v1294
    %1369 = vmatpush1.bf16.msra.mxu0 %v1290
    %1370 = vmatprep.subr.bf16.mxu0 %v1310
    %1371 = vmatpush1.bf16.msra.mxu0 %v1306
    %1372 = vmatprep.subr.bf16.mxu0 %v1326
    %1373 = vmatpush1.bf16.msra.mxu0 %v1322
    %1374 = vmatprep.subr.bf16.mxu0 %v1342
    %1375 = vmatpush1.bf16.msra.mxu0 %v1338
    %1376 = vmatprep.subr.bf16.mxu0 0
    %1377 = vmatpush1.bf16.msra.mxu0 0
    %1378 = vmatprep.subr.bf16.mxu0 0
    %1379 = vmatpush1.bf16.msra.mxu0 0
    %1380 = vmatprep.subr.bf16.mxu0 0
    %1381 = vmatpush1.bf16.msra.mxu0 0
    %1382 = vmatprep.subr.bf16.mxu0 0
    %1383 = vmatpush1.bf16.msra.mxu0 0
    %1384 = vmatprep.subr.bf16.mxu0 0
    %1385 = vmatpush1.bf16.msra.mxu0 0
    %1386 = vmatprep.subr.bf16.mxu0 0
    %1387 = vmatpush1.bf16.msra.mxu0 0
    %1388 = vmatprep.subr.bf16.mxu0 0
    %1389 = vmatpush1.bf16.msra.mxu0 0
    %1390 = vmatprep.subr.bf16.mxu0 0
    %1391 = vmatpush1.bf16.msra.mxu0 0
    %1392 = vmatprep.mubr.bf16.mxu0 0
    %1393 = vmatmul.mubr.bf16.gmra.mrb[0].mxu0 %v1358
    %v1394 = vpop.f32.mrb[0].mxu0
    %v1395 = vadd.f32 0.0, %v1394
    %v1396 = vpop.f32.mrb[0].mxu0
    %v1397 = vadd.f32 0.0, %v1396
    %v1398 = vpop.f32.mrb[0].mxu0
    %v1399 = vadd.f32 0.0, %v1398
    %v1400 = vpop.f32.mrb[0].mxu0
    %v1401 = vadd.f32 0.0, %v1400
    %1402 = vdwg.mxu0
    %1403 = vmatprep.subr.bf16.mxu0 %v1238
    %1404 = vmatpush1.bf16.msra.mxu0 %v1234
    %1405 = vmatprep.subr.bf16.mxu0 %v1254
    %1406 = vmatpush1.bf16.msra.mxu0 %v1250
    %1407 = vmatprep.subr.bf16.mxu0 %v1270
    %1408 = vmatpush1.bf16.msra.mxu0 %v1266
    %1409 = vmatprep.subr.bf16.mxu0 %v1286
    %1410 = vmatpush1.bf16.msra.mxu0 %v1282
    %1411 = vmatprep.subr.bf16.mxu0 %v1302
    %1412 = vmatpush1.bf16.msra.mxu0 %v1298
    %1413 = vmatprep.subr.bf16.mxu0 %v1318
    %1414 = vmatpush1.bf16.msra.mxu0 %v1314
    %1415 = vmatprep.subr.bf16.mxu0 %v1334
    %1416 = vmatpush1.bf16.msra.mxu0 %v1330
    %1417 = vmatprep.subr.bf16.mxu0 %v1350
    %1418 = vmatpush1.bf16.msra.mxu0 %v1346
    %1419 = vmatprep.subr.bf16.mxu0 0
    %1420 = vmatpush1.bf16.msra.mxu0 0
    %1421 = vmatprep.subr.bf16.mxu0 0
    %1422 = vmatpush1.bf16.msra.mxu0 0
    %1423 = vmatprep.subr.bf16.mxu0 0
    %1424 = vmatpush1.bf16.msra.mxu0 0
    %1425 = vmatprep.subr.bf16.mxu0 0
    %1426 = vmatpush1.bf16.msra.mxu0 0
    %1427 = vmatprep.subr.bf16.mxu0 0
    %1428 = vmatpush1.bf16.msra.mxu0 0
    %1429 = vmatprep.subr.bf16.mxu0 0
    %1430 = vmatpush1.bf16.msra.mxu0 0
    %1431 = vmatprep.subr.bf16.mxu0 0
    %1432 = vmatpush1.bf16.msra.mxu0 0
    %1433 = vmatprep.subr.bf16.mxu0 0
    %1434 = vmatpush1.bf16.msra.mxu0 0
    %1435 = vmatprep.mubr.bf16.mxu0 0
    %1436 = vmatmul.mubr.bf16.gmra.mrb[0].mxu0 %v1358
    %v1437 = vpop.f32.mrb[0].mxu0
    %v1438 = vadd.f32 0.0, %v1437
    %v1439 = vpop.f32.mrb[0].mxu0
    %v1440 = vadd.f32 0.0, %v1439
    %v1441 = vpop.f32.mrb[0].mxu0
    %v1442 = vadd.f32 0.0, %v1441
    %v1443 = vpop.f32.mrb[0].mxu0
    %v1444 = vadd.f32 0.0, %v1443
    %1445 = vdwg.mxu0
    %v1446 = vadd.f32 %v1395, %v1397
    %v1447 = vadd.f32 %v1446, %v1438
    %v1448 = vadd.f32 %v1447, %v1440
    %1449 = vadd.xlane.f32.xlu0 %v1448
    %v1450 = vpop.xlane.xlu0 %1449
    %v1451 = vadd.f32 %v1399, %v1401
    %v1452 = vadd.f32 %v1451, %v1442
    %v1453 = vadd.f32 %v1452, %v1444
    %1454 = vadd.xlane.f32.xlu0 %v1453
    %v1455 = vpop.xlane.xlu0 %1454
    %v1456 = vrcp.pop 512.0
    %v1457 = vmul.f32 %v1450, %v1456
    %v1458 = vmul.f32 %v1455, %v1456
    %v1459 = vmul.f32 %v1395, %v1395
    %v1460 = vmul.f32 %v1397, %v1397
    %v1461 = vmul.f32 %v1438, %v1438
    %v1462 = vmul.f32 %v1440, %v1440
    %v1463 = vmul.f32 %v1399, %v1399
    %v1464 = vmul.f32 %v1401, %v1401
    %v1465 = vmul.f32 %v1442, %v1442
    %v1466 = vmul.f32 %v1444, %v1444
    %v1467 = vadd.f32 %v1459, %v1460
    %v1468 = vadd.f32 %v1467, %v1461
    %v1469 = vadd.f32 %v1468, %v1462
    %1470 = vadd.xlane.f32.xlu0 %v1469
    %v1471 = vpop.xlane.xlu0 %1470
    %v1472 = vadd.f32 %v1463, %v1464
    %v1473 = vadd.f32 %v1472, %v1465
    %v1474 = vadd.f32 %v1473, %v1466
    %1475 = vadd.xlane.f32.xlu0 %v1474
    %v1476 = vpop.xlane.xlu0 %1475
    %v1477 = vmul.f32 %v1471, %v1456
    %v1478 = vmul.f32 %v1476, %v1456
    %v1479 = vmul.f32 %v1457, %v1457
    %v1480 = vmul.f32 %v1458, %v1458
    %v1481 = vsub.f32 %v1477, %v1479
    %v1482 = vsub.f32 %v1478, %v1480
    %v1483 = vmax.f32 %v1481, 0.0
    %v1484 = vmax.f32 %v1482, 0.0
    %v1485 = vld [vmem:[%s6] sm:$0xff]
    %v1486 = vld [vmem:[%s6 + $0x8] sm:$0xff]
    %v1487 = vsub.f32 %v1395, %v1457
    %v1488 = vsub.f32 %v1397, %v1457
    %v1489 = vsub.f32 %v1438, %v1457
    %v1490 = vsub.f32 %v1440, %v1457
    %v1491 = vsub.f32 %v1399, %v1458
    %v1492 = vsub.f32 %v1401, %v1458
    %v1493 = vsub.f32 %v1442, %v1458
    %v1494 = vsub.f32 %v1444, %v1458
    %v1495 = vadd.f32 %v1483, 1e-05
    %v1496 = vadd.f32 %v1484, 1e-05
    %v1497 = vrsqrt.pop %v1495
    %v1498 = vrsqrt.pop %v1496
    %v1499 = vmul.f32 %v1487, %v1497
    %v1500 = vmul.f32 %v1488, %v1497
    %v1501 = vmul.f32 %v1489, %v1497
    %v1502 = vmul.f32 %v1490, %v1497
    %v1503 = vmul.f32 %v1491, %v1498
    %v1504 = vmul.f32 %v1492, %v1498
    %v1505 = vmul.f32 %v1493, %v1498
    %v1506 = vmul.f32 %v1494, %v1498
    %1508 = vset.pattern.permute.xlu0 0
    %1509 = vperm.xlu0 %1508, %v1485
    %v1510 = vpop.permute.xlu0 %1509
    %1513 = vset.pattern.permute.xlu0 0
    %1514 = vperm.xlu0 %1513, %v1486
    %v1515 = vpop.permute.xlu0 %1514
    %v1517 = vmul.f32 %v1499, %v1510
    %v1518 = vmul.f32 %v1500, %v1510
    %v1519 = vmul.f32 %v1501, %v1510
    %v1520 = vmul.f32 %v1502, %v1510
    %v1521 = vmul.f32 %v1503, %v1515
    %v1522 = vmul.f32 %v1504, %v1515
    %v1523 = vmul.f32 %v1505, %v1515
    %v1524 = vmul.f32 %v1506, %v1515
    %1525 = vset.pattern.permute.xlu0 1
    %1526 = vperm.xlu0 %1525, %v1485
    %v1527 = vpop.permute.xlu0 %1526
    %1529 = vset.pattern.permute.xlu0 1
    %1530 = vperm.xlu0 %1529, %v1486
    %v1531 = vpop.permute.xlu0 %1530
    %v1533 = vadd.f32 %v1517, %v1527
    %v1534 = vadd.f32 %v1518, %v1527
    %v1535 = vadd.f32 %v1519, %v1527
    %v1536 = vadd.f32 %v1520, %v1527
    %v1537 = vadd.f32 %v1521, %v1531
    %v1538 = vadd.f32 %v1522, %v1531
    %v1539 = vadd.f32 %v1523, %v1531
    %v1540 = vadd.f32 %v1524, %v1531
    %v1541 = vmul.f32 %v1533, 0.2
    %v1542 = vmul.f32 %v1534, 0.2
    %v1543 = vmul.f32 %v1535, 0.2
    %v1544 = vmul.f32 %v1536, 0.2
    %v1545 = vmul.f32 %v1537, 0.2
    %v1546 = vmul.f32 %v1538, 0.2
    %v1547 = vmul.f32 %v1539, 0.2
    %v1548 = vmul.f32 %v1540, 0.2
    %v1549 = vmax.f32 %v1533, %v1541
    %v1550 = vmax.f32 %v1534, %v1542
    %v1551 = vmax.f32 %v1535, %v1543
    %v1552 = vmax.f32 %v1536, %v1544
    %v1553 = vmax.f32 %v1537, %v1545
    %v1554 = vmax.f32 %v1538, %v1546
    %v1555 = vmax.f32 %v1539, %v1547
    %v1556 = vmax.f32 %v1540, %v1548
    %v1557 = vpack.c.bf16 %v1553, %v1549
    %v1558 = vpack.c.bf16 %v1554, %v1550
    %v1559 = vpack.c.bf16 %v1555, %v1551
    %v1560 = vpack.c.bf16 %v1556, %v1552
    %v1561 = vld [vmem:[%s9] sm:$0xff]
    %v1562 = vld [vmem:[%s9 + $0x8] sm:$0xff]
    %v1563 = vld [vmem:[%s9 + $0x10] sm:$0xff]
    %v1564 = vld [vmem:[%s9 + $0x18] sm:$0xff]
    %v1565 = vld [vmem:[%s9 + $0x20] sm:$0xff]
    %v1566 = vld [vmem:[%s9 + $0x28] sm:$0xff]
    %v1567 = vld [vmem:[%s9 + $0x30] sm:$0xff]
    %v1568 = vld [vmem:[%s9 + $0x38] sm:$0xff]
    %v1569 = vld [vmem:[%s9 + $0x40] sm:$0xff]
    %v1570 = vld [vmem:[%s9 + $0x48] sm:$0xff]
    %v1571 = vld [vmem:[%s9 + $0x50] sm:$0xff]
    %v1572 = vld [vmem:[%s9 + $0x58] sm:$0xff]
    %v1573 = vld [vmem:[%s9 + $0x60] sm:$0xff]
    %v1574 = vld [vmem:[%s9 + $0x68] sm:$0xff]
    %v1575 = vld [vmem:[%s9 + $0x70] sm:$0xff]
    %v1576 = vld [vmem:[%s9 + $0x78] sm:$0xff]
    %v1577 = vld [vmem:[%s9 + $0x80] sm:$0xff]
    %v1578 = vld [vmem:[%s9 + $0x88] sm:$0xff]
    %v1579 = vld [vmem:[%s9 + $0x90] sm:$0xff]
    %v1580 = vld [vmem:[%s9 + $0x98] sm:$0xff]
    %v1581 = vld [vmem:[%s9 + $0xa0] sm:$0xff]
    %v1582 = vld [vmem:[%s9 + $0xa8] sm:$0xff]
    %v1583 = vld [vmem:[%s9 + $0xb0] sm:$0xff]
    %v1584 = vld [vmem:[%s9 + $0xb8] sm:$0xff]
    %v1585 = vld [vmem:[%s9 + $0xc0] sm:$0xff]
    %v1586 = vld [vmem:[%s9 + $0xc8] sm:$0xff]
    %v1587 = vld [vmem:[%s9 + $0xd0] sm:$0xff]
    %v1588 = vld [vmem:[%s9 + $0xd8] sm:$0xff]
    %v1589 = vld [vmem:[%s9 + $0xe0] sm:$0xff]
    %v1590 = vld [vmem:[%s9 + $0xe8] sm:$0xff]
    %v1591 = vld [vmem:[%s9 + $0xf0] sm:$0xff]
    %v1592 = vld [vmem:[%s9 + $0xf8] sm:$0xff]
    %v1593 = vld [vmem:[%s9 + $0x100] sm:$0xff]
    %v1594 = vld [vmem:[%s9 + $0x108] sm:$0xff]
    %v1595 = vld [vmem:[%s9 + $0x110] sm:$0xff]
    %v1596 = vld [vmem:[%s9 + $0x118] sm:$0xff]
    %v1597 = vld [vmem:[%s9 + $0x120] sm:$0xff]
    %v1598 = vld [vmem:[%s9 + $0x128] sm:$0xff]
    %v1599 = vld [vmem:[%s9 + $0x130] sm:$0xff]
    %v1600 = vld [vmem:[%s9 + $0x138] sm:$0xff]
    %v1601 = vld [vmem:[%s9 + $0x140] sm:$0xff]
    %v1602 = vld [vmem:[%s9 + $0x148] sm:$0xff]
    %v1603 = vld [vmem:[%s9 + $0x150] sm:$0xff]
    %v1604 = vld [vmem:[%s9 + $0x158] sm:$0xff]
    %v1605 = vld [vmem:[%s9 + $0x160] sm:$0xff]
    %v1606 = vld [vmem:[%s9 + $0x168] sm:$0xff]
    %v1607 = vld [vmem:[%s9 + $0x170] sm:$0xff]
    %v1608 = vld [vmem:[%s9 + $0x178] sm:$0xff]
    %v1609 = vld [vmem:[%s9 + $0x180] sm:$0xff]
    %v1610 = vld [vmem:[%s9 + $0x188] sm:$0xff]
    %v1611 = vld [vmem:[%s9 + $0x190] sm:$0xff]
    %v1612 = vld [vmem:[%s9 + $0x198] sm:$0xff]
    %v1613 = vld [vmem:[%s9 + $0x1a0] sm:$0xff]
    %v1614 = vld [vmem:[%s9 + $0x1a8] sm:$0xff]
    %v1615 = vld [vmem:[%s9 + $0x1b0] sm:$0xff]
    %v1616 = vld [vmem:[%s9 + $0x1b8] sm:$0xff]
    %v1617 = vld [vmem:[%s9 + $0x1c0] sm:$0xff]
    %v1618 = vld [vmem:[%s9 + $0x1c8] sm:$0xff]
    %v1619 = vld [vmem:[%s9 + $0x1d0] sm:$0xff]
    %v1620 = vld [vmem:[%s9 + $0x1d8] sm:$0xff]
    %v1621 = vld [vmem:[%s9 + $0x1e0] sm:$0xff]
    %v1622 = vld [vmem:[%s9 + $0x1e8] sm:$0xff]
    %v1623 = vld [vmem:[%s9 + $0x1f0] sm:$0xff]
    %v1624 = vld [vmem:[%s9 + $0x1f8] sm:$0xff]
    %v1625 = vld [vmem:[%s9 + $0x200] sm:$0xff]
    %v1626 = vld [vmem:[%s9 + $0x208] sm:$0xff]
    %v1627 = vld [vmem:[%s9 + $0x210] sm:$0xff]
    %v1628 = vld [vmem:[%s9 + $0x218] sm:$0xff]
    %v1629 = vld [vmem:[%s9 + $0x220] sm:$0xff]
    %v1630 = vld [vmem:[%s9 + $0x228] sm:$0xff]
    %v1631 = vld [vmem:[%s9 + $0x230] sm:$0xff]
    %v1632 = vld [vmem:[%s9 + $0x238] sm:$0xff]
    %v1633 = vld [vmem:[%s9 + $0x240] sm:$0xff]
    %v1634 = vld [vmem:[%s9 + $0x248] sm:$0xff]
    %v1635 = vld [vmem:[%s9 + $0x250] sm:$0xff]
    %v1636 = vld [vmem:[%s9 + $0x258] sm:$0xff]
    %v1637 = vld [vmem:[%s9 + $0x260] sm:$0xff]
    %v1638 = vld [vmem:[%s9 + $0x268] sm:$0xff]
    %v1639 = vld [vmem:[%s9 + $0x270] sm:$0xff]
    %v1640 = vld [vmem:[%s9 + $0x278] sm:$0xff]
    %v1641 = vld [vmem:[%s9 + $0x280] sm:$0xff]
    %v1642 = vld [vmem:[%s9 + $0x288] sm:$0xff]
    %v1643 = vld [vmem:[%s9 + $0x290] sm:$0xff]
    %v1644 = vld [vmem:[%s9 + $0x298] sm:$0xff]
    %v1645 = vld [vmem:[%s9 + $0x2a0] sm:$0xff]
    %v1646 = vld [vmem:[%s9 + $0x2a8] sm:$0xff]
    %v1647 = vld [vmem:[%s9 + $0x2b0] sm:$0xff]
    %v1648 = vld [vmem:[%s9 + $0x2b8] sm:$0xff]
    %v1649 = vld [vmem:[%s9 + $0x2c0] sm:$0xff]
    %v1650 = vld [vmem:[%s9 + $0x2c8] sm:$0xff]
    %v1651 = vld [vmem:[%s9 + $0x2d0] sm:$0xff]
    %v1652 = vld [vmem:[%s9 + $0x2d8] sm:$0xff]
    %v1653 = vld [vmem:[%s9 + $0x2e0] sm:$0xff]
    %v1654 = vld [vmem:[%s9 + $0x2e8] sm:$0xff]
    %v1655 = vld [vmem:[%s9 + $0x2f0] sm:$0xff]
    %v1656 = vld [vmem:[%s9 + $0x2f8] sm:$0xff]
    %v1657 = vld [vmem:[%s9 + $0x300] sm:$0xff]
    %v1658 = vld [vmem:[%s9 + $0x308] sm:$0xff]
    %v1659 = vld [vmem:[%s9 + $0x310] sm:$0xff]
    %v1660 = vld [vmem:[%s9 + $0x318] sm:$0xff]
    %v1661 = vld [vmem:[%s9 + $0x320] sm:$0xff]
    %v1662 = vld [vmem:[%s9 + $0x328] sm:$0xff]
    %v1663 = vld [vmem:[%s9 + $0x330] sm:$0xff]
    %v1664 = vld [vmem:[%s9 + $0x338] sm:$0xff]
    %v1665 = vld [vmem:[%s9 + $0x340] sm:$0xff]
    %v1666 = vld [vmem:[%s9 + $0x348] sm:$0xff]
    %v1667 = vld [vmem:[%s9 + $0x350] sm:$0xff]
    %v1668 = vld [vmem:[%s9 + $0x358] sm:$0xff]
    %v1669 = vld [vmem:[%s9 + $0x360] sm:$0xff]
    %v1670 = vld [vmem:[%s9 + $0x368] sm:$0xff]
    %v1671 = vld [vmem:[%s9 + $0x370] sm:$0xff]
    %v1672 = vld [vmem:[%s9 + $0x378] sm:$0xff]
    %v1673 = vld [vmem:[%s9 + $0x380] sm:$0xff]
    %v1674 = vld [vmem:[%s9 + $0x388] sm:$0xff]
    %v1675 = vld [vmem:[%s9 + $0x390] sm:$0xff]
    %v1676 = vld [vmem:[%s9 + $0x398] sm:$0xff]
    %v1677 = vld [vmem:[%s9 + $0x3a0] sm:$0xff]
    %v1678 = vld [vmem:[%s9 + $0x3a8] sm:$0xff]
    %v1679 = vld [vmem:[%s9 + $0x3b0] sm:$0xff]
    %v1680 = vld [vmem:[%s9 + $0x3b8] sm:$0xff]
    %v1681 = vld [vmem:[%s9 + $0x3c0] sm:$0xff]
    %v1682 = vld [vmem:[%s9 + $0x3c8] sm:$0xff]
    %v1683 = vld [vmem:[%s9 + $0x3d0] sm:$0xff]
    %v1684 = vld [vmem:[%s9 + $0x3d8] sm:$0xff]
    %v1685 = vld [vmem:[%s9 + $0x3e0] sm:$0xff]
    %v1686 = vld [vmem:[%s9 + $0x3e8] sm:$0xff]
    %v1687 = vld [vmem:[%s9 + $0x3f0] sm:$0xff]
    %v1688 = vld [vmem:[%s9 + $0x3f8] sm:$0xff]
    %v1817 = vunpack.c.l.b16 %v1561
    %v1818 = vunpack.c.h.b16 %v1561
    %v1819 = vunpack.c.l.b16 %v1562
    %v1820 = vunpack.c.h.b16 %v1562
    %v1821 = vunpack.c.l.b16 %v1563
    %v1822 = vunpack.c.h.b16 %v1563
    %v1823 = vunpack.c.l.b16 %v1564
    %v1824 = vunpack.c.h.b16 %v1564
    %v1825 = vunpack.c.l.b16 %v1565
    %v1826 = vunpack.c.h.b16 %v1565
    %v1827 = vunpack.c.l.b16 %v1566
    %v1828 = vunpack.c.h.b16 %v1566
    %v1829 = vunpack.c.l.b16 %v1567
    %v1830 = vunpack.c.h.b16 %v1567
    %v1831 = vunpack.c.l.b16 %v1568
    %v1832 = vunpack.c.h.b16 %v1568
    %v1833 = vunpack.c.l.b16 %v1569
    %v1834 = vunpack.c.h.b16 %v1569
    %v1835 = vunpack.c.l.b16 %v1570
    %v1836 = vunpack.c.h.b16 %v1570
    %v1837 = vunpack.c.l.b16 %v1571
    %v1838 = vunpack.c.h.b16 %v1571
    %v1839 = vunpack.c.l.b16 %v1572
    %v1840 = vunpack.c.h.b16 %v1572
    %v1841 = vunpack.c.l.b16 %v1573
    %v1842 = vunpack.c.h.b16 %v1573
    %v1843 = vunpack.c.l.b16 %v1574
    %v1844 = vunpack.c.h.b16 %v1574
    %v1845 = vunpack.c.l.b16 %v1575
    %v1846 = vunpack.c.h.b16 %v1575
    %v1847 = vunpack.c.l.b16 %v1576
    %v1848 = vunpack.c.h.b16 %v1576
    %v1849 = vunpack.c.l.b16 %v1577
    %v1850 = vunpack.c.h.b16 %v1577
    %v1851 = vunpack.c.l.b16 %v1578
    %v1852 = vunpack.c.h.b16 %v1578
    %v1853 = vunpack.c.l.b16 %v1579
    %v1854 = vunpack.c.h.b16 %v1579
    %v1855 = vunpack.c.l.b16 %v1580
    %v1856 = vunpack.c.h.b16 %v1580
    %v1857 = vunpack.c.l.b16 %v1581
    %v1858 = vunpack.c.h.b16 %v1581
    %v1859 = vunpack.c.l.b16 %v1582
    %v1860 = vunpack.c.h.b16 %v1582
    %v1861 = vunpack.c.l.b16 %v1583
    %v1862 = vunpack.c.h.b16 %v1583
    %v1863 = vunpack.c.l.b16 %v1584
    %v1864 = vunpack.c.h.b16 %v1584
    %v1865 = vunpack.c.l.b16 %v1585
    %v1866 = vunpack.c.h.b16 %v1585
    %v1867 = vunpack.c.l.b16 %v1586
    %v1868 = vunpack.c.h.b16 %v1586
    %v1869 = vunpack.c.l.b16 %v1587
    %v1870 = vunpack.c.h.b16 %v1587
    %v1871 = vunpack.c.l.b16 %v1588
    %v1872 = vunpack.c.h.b16 %v1588
    %v1873 = vunpack.c.l.b16 %v1589
    %v1874 = vunpack.c.h.b16 %v1589
    %v1875 = vunpack.c.l.b16 %v1590
    %v1876 = vunpack.c.h.b16 %v1590
    %v1877 = vunpack.c.l.b16 %v1591
    %v1878 = vunpack.c.h.b16 %v1591
    %v1879 = vunpack.c.l.b16 %v1592
    %v1880 = vunpack.c.h.b16 %v1592
    %v1881 = vunpack.c.l.b16 %v1593
    %v1882 = vunpack.c.h.b16 %v1593
    %v1883 = vunpack.c.l.b16 %v1594
    %v1884 = vunpack.c.h.b16 %v1594
    %v1885 = vunpack.c.l.b16 %v1595
    %v1886 = vunpack.c.h.b16 %v1595
    %v1887 = vunpack.c.l.b16 %v1596
    %v1888 = vunpack.c.h.b16 %v1596
    %v1889 = vunpack.c.l.b16 %v1597
    %v1890 = vunpack.c.h.b16 %v1597
    %v1891 = vunpack.c.l.b16 %v1598
    %v1892 = vunpack.c.h.b16 %v1598
    %v1893 = vunpack.c.l.b16 %v1599
    %v1894 = vunpack.c.h.b16 %v1599
    %v1895 = vunpack.c.l.b16 %v1600
    %v1896 = vunpack.c.h.b16 %v1600
    %v1897 = vunpack.c.l.b16 %v1601
    %v1898 = vunpack.c.h.b16 %v1601
    %v1899 = vunpack.c.l.b16 %v1602
    %v1900 = vunpack.c.h.b16 %v1602
    %v1901 = vunpack.c.l.b16 %v1603
    %v1902 = vunpack.c.h.b16 %v1603
    %v1903 = vunpack.c.l.b16 %v1604
    %v1904 = vunpack.c.h.b16 %v1604
    %v1905 = vunpack.c.l.b16 %v1605
    %v1906 = vunpack.c.h.b16 %v1605
    %v1907 = vunpack.c.l.b16 %v1606
    %v1908 = vunpack.c.h.b16 %v1606
    %v1909 = vunpack.c.l.b16 %v1607
    %v1910 = vunpack.c.h.b16 %v1607
    %v1911 = vunpack.c.l.b16 %v1608
    %v1912 = vunpack.c.h.b16 %v1608
    %v1913 = vunpack.c.l.b16 %v1609
    %v1914 = vunpack.c.h.b16 %v1609
    %v1915 = vunpack.c.l.b16 %v1610
    %v1916 = vunpack.c.h.b16 %v1610
    %v1917 = vunpack.c.l.b16 %v1611
    %v1918 = vunpack.c.h.b16 %v1611
    %v1919 = vunpack.c.l.b16 %v1612
    %v1920 = vunpack.c.h.b16 %v1612
    %v1921 = vunpack.c.l.b16 %v1613
    %v1922 = vunpack.c.h.b16 %v1613
    %v1923 = vunpack.c.l.b16 %v1614
    %v1924 = vunpack.c.h.b16 %v1614
    %v1925 = vunpack.c.l.b16 %v1615
    %v1926 = vunpack.c.h.b16 %v1615
    %v1927 = vunpack.c.l.b16 %v1616
    %v1928 = vunpack.c.h.b16 %v1616
    %v1929 = vunpack.c.l.b16 %v1617
    %v1930 = vunpack.c.h.b16 %v1617
    %v1931 = vunpack.c.l.b16 %v1618
    %v1932 = vunpack.c.h.b16 %v1618
    %v1933 = vunpack.c.l.b16 %v1619
    %v1934 = vunpack.c.h.b16 %v1619
    %v1935 = vunpack.c.l.b16 %v1620
    %v1936 = vunpack.c.h.b16 %v1620
    %v1937 = vunpack.c.l.b16 %v1621
    %v1938 = vunpack.c.h.b16 %v1621
    %v1939 = vunpack.c.l.b16 %v1622
    %v1940 = vunpack.c.h.b16 %v1622
    %v1941 = vunpack.c.l.b16 %v1623
    %v1942 = vunpack.c.h.b16 %v1623
    %v1943 = vunpack.c.l.b16 %v1624
    %v1944 = vunpack.c.h.b16 %v1624
    %v1945 = vunpack.c.l.b16 %v1625
    %v1946 = vunpack.c.h.b16 %v1625
    %v1947 = vunpack.c.l.b16 %v1626
    %v1948 = vunpack.c.h.b16 %v1626
    %v1949 = vunpack.c.l.b16 %v1627
    %v1950 = vunpack.c.h.b16 %v1627
    %v1951 = vunpack.c.l.b16 %v1628
    %v1952 = vunpack.c.h.b16 %v1628
    %v1953 = vunpack.c.l.b16 %v1629
    %v1954 = vunpack.c.h.b16 %v1629
    %v1955 = vunpack.c.l.b16 %v1630
    %v1956 = vunpack.c.h.b16 %v1630
    %v1957 = vunpack.c.l.b16 %v1631
    %v1958 = vunpack.c.h.b16 %v1631
    %v1959 = vunpack.c.l.b16 %v1632
    %v1960 = vunpack.c.h.b16 %v1632
    %v1961 = vunpack.c.l.b16 %v1633
    %v1962 = vunpack.c.h.b16 %v1633
    %v1963 = vunpack.c.l.b16 %v1634
    %v1964 = vunpack.c.h.b16 %v1634
    %v1965 = vunpack.c.l.b16 %v1635
    %v1966 = vunpack.c.h.b16 %v1635
    %v1967 = vunpack.c.l.b16 %v1636
    %v1968 = vunpack.c.h.b16 %v1636
    %v1969 = vunpack.c.l.b16 %v1637
    %v1970 = vunpack.c.h.b16 %v1637
    %v1971 = vunpack.c.l.b16 %v1638
    %v1972 = vunpack.c.h.b16 %v1638
    %v1973 = vunpack.c.l.b16 %v1639
    %v1974 = vunpack.c.h.b16 %v1639
    %v1975 = vunpack.c.l.b16 %v1640
    %v1976 = vunpack.c.h.b16 %v1640
    %v1977 = vunpack.c.l.b16 %v1641
    %v1978 = vunpack.c.h.b16 %v1641
    %v1979 = vunpack.c.l.b16 %v1642
    %v1980 = vunpack.c.h.b16 %v1642
    %v1981 = vunpack.c.l.b16 %v1643
    %v1982 = vunpack.c.h.b16 %v1643
    %v1983 = vunpack.c.l.b16 %v1644
    %v1984 = vunpack.c.h.b16 %v1644
    %v1985 = vunpack.c.l.b16 %v1645
    %v1986 = vunpack.c.h.b16 %v1645
    %v1987 = vunpack.c.l.b16 %v1646
    %v1988 = vunpack.c.h.b16 %v1646
    %v1989 = vunpack.c.l.b16 %v1647
    %v1990 = vunpack.c.h.b16 %v1647
    %v1991 = vunpack.c.l.b16 %v1648
    %v1992 = vunpack.c.h.b16 %v1648
    %v1993 = vunpack.c.l.b16 %v1649
    %v1994 = vunpack.c.h.b16 %v1649
    %v1995 = vunpack.c.l.b16 %v1650
    %v1996 = vunpack.c.h.b16 %v1650
    %v1997 = vunpack.c.l.b16 %v1651
    %v1998 = vunpack.c.h.b16 %v1651
    %v1999 = vunpack.c.l.b16 %v1652
    %v2000 = vunpack.c.h.b16 %v1652
    %v2001 = vunpack.c.l.b16 %v1653
    %v2002 = vunpack.c.h.b16 %v1653
    %v2003 = vunpack.c.l.b16 %v1654
    %v2004 = vunpack.c.h.b16 %v1654
    %v2005 = vunpack.c.l.b16 %v1655
    %v2006 = vunpack.c.h.b16 %v1655
    %v2007 = vunpack.c.l.b16 %v1656
    %v2008 = vunpack.c.h.b16 %v1656
    %v2009 = vunpack.c.l.b16 %v1657
    %v2010 = vunpack.c.h.b16 %v1657
    %v2011 = vunpack.c.l.b16 %v1658
    %v2012 = vunpack.c.h.b16 %v1658
    %v2013 = vunpack.c.l.b16 %v1659
    %v2014 = vunpack.c.h.b16 %v1659
    %v2015 = vunpack.c.l.b16 %v1660
    %v2016 = vunpack.c.h.b16 %v1660
    %v2017 = vunpack.c.l.b16 %v1661
    %v2018 = vunpack.c.h.b16 %v1661
    %v2019 = vunpack.c.l.b16 %v1662
    %v2020 = vunpack.c.h.b16 %v1662
    %v2021 = vunpack.c.l.b16 %v1663
    %v2022 = vunpack.c.h.b16 %v1663
    %v2023 = vunpack.c.l.b16 %v1664
    %v2024 = vunpack.c.h.b16 %v1664
    %v2025 = vunpack.c.l.b16 %v1665
    %v2026 = vunpack.c.h.b16 %v1665
    %v2027 = vunpack.c.l.b16 %v1666
    %v2028 = vunpack.c.h.b16 %v1666
    %v2029 = vunpack.c.l.b16 %v1667
    %v2030 = vunpack.c.h.b16 %v1667
    %v2031 = vunpack.c.l.b16 %v1668
    %v2032 = vunpack.c.h.b16 %v1668
    %v2033 = vunpack.c.l.b16 %v1669
    %v2034 = vunpack.c.h.b16 %v1669
    %v2035 = vunpack.c.l.b16 %v1670
    %v2036 = vunpack.c.h.b16 %v1670
    %v2037 = vunpack.c.l.b16 %v1671
    %v2038 = vunpack.c.h.b16 %v1671
    %v2039 = vunpack.c.l.b16 %v1672
    %v2040 = vunpack.c.h.b16 %v1672
    %v2041 = vunpack.c.l.b16 %v1673
    %v2042 = vunpack.c.h.b16 %v1673
    %v2043 = vunpack.c.l.b16 %v1674
    %v2044 = vunpack.c.h.b16 %v1674
    %v2045 = vunpack.c.l.b16 %v1675
    %v2046 = vunpack.c.h.b16 %v1675
    %v2047 = vunpack.c.l.b16 %v1676
    %v2048 = vunpack.c.h.b16 %v1676
    %v2049 = vunpack.c.l.b16 %v1677
    %v2050 = vunpack.c.h.b16 %v1677
    %v2051 = vunpack.c.l.b16 %v1678
    %v2052 = vunpack.c.h.b16 %v1678
    %v2053 = vunpack.c.l.b16 %v1679
    %v2054 = vunpack.c.h.b16 %v1679
    %v2055 = vunpack.c.l.b16 %v1680
    %v2056 = vunpack.c.h.b16 %v1680
    %v2057 = vunpack.c.l.b16 %v1681
    %v2058 = vunpack.c.h.b16 %v1681
    %v2059 = vunpack.c.l.b16 %v1682
    %v2060 = vunpack.c.h.b16 %v1682
    %v2061 = vunpack.c.l.b16 %v1683
    %v2062 = vunpack.c.h.b16 %v1683
    %v2063 = vunpack.c.l.b16 %v1684
    %v2064 = vunpack.c.h.b16 %v1684
    %v2065 = vunpack.c.l.b16 %v1685
    %v2066 = vunpack.c.h.b16 %v1685
    %v2067 = vunpack.c.l.b16 %v1686
    %v2068 = vunpack.c.h.b16 %v1686
    %v2069 = vunpack.c.l.b16 %v1687
    %v2070 = vunpack.c.h.b16 %v1687
    %v2071 = vunpack.c.l.b16 %v1688
    %v2072 = vunpack.c.h.b16 %v1688
    %v2073 = vpack.c.b16 %v1821, %v1817
    %v2074 = vpack.c.b16 %v1822, %v1818
    %v2075 = vpack.c.b16 %v1823, %v1819
    %v2076 = vpack.c.b16 %v1824, %v1820
    %v2077 = vpack.c.b16 %v1829, %v1825
    %v2078 = vpack.c.b16 %v1830, %v1826
    %v2079 = vpack.c.b16 %v1831, %v1827
    %v2080 = vpack.c.b16 %v1832, %v1828
    %v2081 = vpack.c.b16 %v1837, %v1833
    %v2082 = vpack.c.b16 %v1838, %v1834
    %v2083 = vpack.c.b16 %v1839, %v1835
    %v2084 = vpack.c.b16 %v1840, %v1836
    %v2085 = vpack.c.b16 %v1845, %v1841
    %v2086 = vpack.c.b16 %v1846, %v1842
    %v2087 = vpack.c.b16 %v1847, %v1843
    %v2088 = vpack.c.b16 %v1848, %v1844
    %v2089 = vpack.c.b16 %v1853, %v1849
    %v2090 = vpack.c.b16 %v1854, %v1850
    %v2091 = vpack.c.b16 %v1855, %v1851
    %v2092 = vpack.c.b16 %v1856, %v1852
    %v2093 = vpack.c.b16 %v1861, %v1857
    %v2094 = vpack.c.b16 %v1862, %v1858
    %v2095 = vpack.c.b16 %v1863, %v1859
    %v2096 = vpack.c.b16 %v1864, %v1860
    %v2097 = vpack.c.b16 %v1869, %v1865
    %v2098 = vpack.c.b16 %v1870, %v1866
    %v2099 = vpack.c.b16 %v1871, %v1867
    %v2100 = vpack.c.b16 %v1872, %v1868
    %v2101 = vpack.c.b16 %v1877, %v1873
    %v2102 = vpack.c.b16 %v1878, %v1874
    %v2103 = vpack.c.b16 %v1879, %v1875
    %v2104 = vpack.c.b16 %v1880, %v1876
    %v2105 = vpack.c.b16 %v1885, %v1881
    %v2106 = vpack.c.b16 %v1886, %v1882
    %v2107 = vpack.c.b16 %v1887, %v1883
    %v2108 = vpack.c.b16 %v1888, %v1884
    %v2109 = vpack.c.b16 %v1893, %v1889
    %v2110 = vpack.c.b16 %v1894, %v1890
    %v2111 = vpack.c.b16 %v1895, %v1891
    %v2112 = vpack.c.b16 %v1896, %v1892
    %v2113 = vpack.c.b16 %v1901, %v1897
    %v2114 = vpack.c.b16 %v1902, %v1898
    %v2115 = vpack.c.b16 %v1903, %v1899
    %v2116 = vpack.c.b16 %v1904, %v1900
    %v2117 = vpack.c.b16 %v1909, %v1905
    %v2118 = vpack.c.b16 %v1910, %v1906
    %v2119 = vpack.c.b16 %v1911, %v1907
    %v2120 = vpack.c.b16 %v1912, %v1908
    %v2121 = vpack.c.b16 %v1917, %v1913
    %v2122 = vpack.c.b16 %v1918, %v1914
    %v2123 = vpack.c.b16 %v1919, %v1915
    %v2124 = vpack.c.b16 %v1920, %v1916
    %v2125 = vpack.c.b16 %v1925, %v1921
    %v2126 = vpack.c.b16 %v1926, %v1922
    %v2127 = vpack.c.b16 %v1927, %v1923
    %v2128 = vpack.c.b16 %v1928, %v1924
    %v2129 = vpack.c.b16 %v1933, %v1929
    %v2130 = vpack.c.b16 %v1934, %v1930
    %v2131 = vpack.c.b16 %v1935, %v1931
    %v2132 = vpack.c.b16 %v1936, %v1932
    %v2133 = vpack.c.b16 %v1941, %v1937
    %v2134 = vpack.c.b16 %v1942, %v1938
    %v2135 = vpack.c.b16 %v1943, %v1939
    %v2136 = vpack.c.b16 %v1944, %v1940
    %v2137 = vpack.c.b16 %v1949, %v1945
    %v2138 = vpack.c.b16 %v1950, %v1946
    %v2139 = vpack.c.b16 %v1951, %v1947
    %v2140 = vpack.c.b16 %v1952, %v1948
    %v2141 = vpack.c.b16 %v1957, %v1953
    %v2142 = vpack.c.b16 %v1958, %v1954
    %v2143 = vpack.c.b16 %v1959, %v1955
    %v2144 = vpack.c.b16 %v1960, %v1956
    %v2145 = vpack.c.b16 %v1965, %v1961
    %v2146 = vpack.c.b16 %v1966, %v1962
    %v2147 = vpack.c.b16 %v1967, %v1963
    %v2148 = vpack.c.b16 %v1968, %v1964
    %v2149 = vpack.c.b16 %v1973, %v1969
    %v2150 = vpack.c.b16 %v1974, %v1970
    %v2151 = vpack.c.b16 %v1975, %v1971
    %v2152 = vpack.c.b16 %v1976, %v1972
    %v2153 = vpack.c.b16 %v1981, %v1977
    %v2154 = vpack.c.b16 %v1982, %v1978
    %v2155 = vpack.c.b16 %v1983, %v1979
    %v2156 = vpack.c.b16 %v1984, %v1980
    %v2157 = vpack.c.b16 %v1989, %v1985
    %v2158 = vpack.c.b16 %v1990, %v1986
    %v2159 = vpack.c.b16 %v1991, %v1987
    %v2160 = vpack.c.b16 %v1992, %v1988
    %v2161 = vpack.c.b16 %v1997, %v1993
    %v2162 = vpack.c.b16 %v1998, %v1994
    %v2163 = vpack.c.b16 %v1999, %v1995
    %v2164 = vpack.c.b16 %v2000, %v1996
    %v2165 = vpack.c.b16 %v2005, %v2001
    %v2166 = vpack.c.b16 %v2006, %v2002
    %v2167 = vpack.c.b16 %v2007, %v2003
    %v2168 = vpack.c.b16 %v2008, %v2004
    %v2169 = vpack.c.b16 %v2013, %v2009
    %v2170 = vpack.c.b16 %v2014, %v2010
    %v2171 = vpack.c.b16 %v2015, %v2011
    %v2172 = vpack.c.b16 %v2016, %v2012
    %v2173 = vpack.c.b16 %v2021, %v2017
    %v2174 = vpack.c.b16 %v2022, %v2018
    %v2175 = vpack.c.b16 %v2023, %v2019
    %v2176 = vpack.c.b16 %v2024, %v2020
    %v2177 = vpack.c.b16 %v2029, %v2025
    %v2178 = vpack.c.b16 %v2030, %v2026
    %v2179 = vpack.c.b16 %v2031, %v2027
    %v2180 = vpack.c.b16 %v2032, %v2028
    %v2181 = vpack.c.b16 %v2037, %v2033
    %v2182 = vpack.c.b16 %v2038, %v2034
    %v2183 = vpack.c.b16 %v2039, %v2035
    %v2184 = vpack.c.b16 %v2040, %v2036
    %v2185 = vpack.c.b16 %v2045, %v2041
    %v2186 = vpack.c.b16 %v2046, %v2042
    %v2187 = vpack.c.b16 %v2047, %v2043
    %v2188 = vpack.c.b16 %v2048, %v2044
    %v2189 = vpack.c.b16 %v2053, %v2049
    %v2190 = vpack.c.b16 %v2054, %v2050
    %v2191 = vpack.c.b16 %v2055, %v2051
    %v2192 = vpack.c.b16 %v2056, %v2052
    %v2193 = vpack.c.b16 %v2061, %v2057
    %v2194 = vpack.c.b16 %v2062, %v2058
    %v2195 = vpack.c.b16 %v2063, %v2059
    %v2196 = vpack.c.b16 %v2064, %v2060
    %v2197 = vpack.c.b16 %v2069, %v2065
    %v2198 = vpack.c.b16 %v2070, %v2066
    %v2199 = vpack.c.b16 %v2071, %v2067
    %v2200 = vpack.c.b16 %v2072, %v2068
    %2329 = vmatprep.subr.bf16.mxu0 %v2074
    %2330 = vmatpush1.bf16.msra.mxu0 %v2073
    %2331 = vmatprep.subr.bf16.mxu0 %v2078
    %2332 = vmatpush1.bf16.msra.mxu0 %v2077
    %2333 = vmatprep.subr.bf16.mxu0 %v2082
    %2334 = vmatpush1.bf16.msra.mxu0 %v2081
    %2335 = vmatprep.subr.bf16.mxu0 %v2086
    %2336 = vmatpush1.bf16.msra.mxu0 %v2085
    %2337 = vmatprep.subr.bf16.mxu0 %v2090
    %2338 = vmatpush1.bf16.msra.mxu0 %v2089
    %2339 = vmatprep.subr.bf16.mxu0 %v2094
    %2340 = vmatpush1.bf16.msra.mxu0 %v2093
    %2341 = vmatprep.subr.bf16.mxu0 %v2098
    %2342 = vmatpush1.bf16.msra.mxu0 %v2097
    %2343 = vmatprep.subr.bf16.mxu0 %v2102
    %2344 = vmatpush1.bf16.msra.mxu0 %v2101
    %2345 = vmatprep.subr.bf16.mxu0 %v2106
    %2346 = vmatpush1.bf16.msra.mxu0 %v2105
    %2347 = vmatprep.subr.bf16.mxu0 %v2110
    %2348 = vmatpush1.bf16.msra.mxu0 %v2109
    %2349 = vmatprep.subr.bf16.mxu0 %v2114
    %2350 = vmatpush1.bf16.msra.mxu0 %v2113
    %2351 = vmatprep.subr.bf16.mxu0 %v2118
    %2352 = vmatpush1.bf16.msra.mxu0 %v2117
    %2353 = vmatprep.subr.bf16.mxu0 %v2122
    %2354 = vmatpush1.bf16.msra.mxu0 %v2121
    %2355 = vmatprep.subr.bf16.mxu0 %v2126
    %2356 = vmatpush1.bf16.msra.mxu0 %v2125
    %2357 = vmatprep.subr.bf16.mxu0 %v2130
    %2358 = vmatpush1.bf16.msra.mxu0 %v2129
    %2359 = vmatprep.subr.bf16.mxu0 %v2134
    %2360 = vmatpush1.bf16.msra.mxu0 %v2133
    %2361 = vmatprep.mubr.bf16.mxu0 %v1558
    %2362 = vmatmul.mubr.bf16.gmra.mrb[0].mxu0 %v1557
    %v2363 = vpop.f32.mrb[0].mxu0
    %v2364 = vadd.f32 0.0, %v2363
    %v2365 = vpop.f32.mrb[0].mxu0
    %v2366 = vadd.f32 0.0, %v2365
    %v2367 = vpop.f32.mrb[0].mxu0
    %v2368 = vadd.f32 0.0, %v2367
    %v2369 = vpop.f32.mrb[0].mxu0
    %v2370 = vadd.f32 0.0, %v2369
    %2371 = vdwg.mxu0
    %2372 = vmatprep.subr.bf16.mxu0 %v2138
    %2373 = vmatpush1.bf16.msra.mxu0 %v2137
    %2374 = vmatprep.subr.bf16.mxu0 %v2142
    %2375 = vmatpush1.bf16.msra.mxu0 %v2141
    %2376 = vmatprep.subr.bf16.mxu0 %v2146
    %2377 = vmatpush1.bf16.msra.mxu0 %v2145
    %2378 = vmatprep.subr.bf16.mxu0 %v2150
    %2379 = vmatpush1.bf16.msra.mxu0 %v2149
    %2380 = vmatprep.subr.bf16.mxu0 %v2154
    %2381 = vmatpush1.bf16.msra.mxu0 %v2153
    %2382 = vmatprep.subr.bf16.mxu0 %v2158
    %2383 = vmatpush1.bf16.msra.mxu0 %v2157
    %2384 = vmatprep.subr.bf16.mxu0 %v2162
    %2385 = vmatpush1.bf16.msra.mxu0 %v2161
    %2386 = vmatprep.subr.bf16.mxu0 %v2166
    %2387 = vmatpush1.bf16.msra.mxu0 %v2165
    %2388 = vmatprep.subr.bf16.mxu0 %v2170
    %2389 = vmatpush1.bf16.msra.mxu0 %v2169
    %2390 = vmatprep.subr.bf16.mxu0 %v2174
    %2391 = vmatpush1.bf16.msra.mxu0 %v2173
    %2392 = vmatprep.subr.bf16.mxu0 %v2178
    %2393 = vmatpush1.bf16.msra.mxu0 %v2177
    %2394 = vmatprep.subr.bf16.mxu0 %v2182
    %2395 = vmatpush1.bf16.msra.mxu0 %v2181
    %2396 = vmatprep.subr.bf16.mxu0 %v2186
    %2397 = vmatpush1.bf16.msra.mxu0 %v2185
    %2398 = vmatprep.subr.bf16.mxu0 %v2190
    %2399 = vmatpush1.bf16.msra.mxu0 %v2189
    %2400 = vmatprep.subr.bf16.mxu0 %v2194
    %2401 = vmatpush1.bf16.msra.mxu0 %v2193
    %2402 = vmatprep.subr.bf16.mxu0 %v2198
    %2403 = vmatpush1.bf16.msra.mxu0 %v2197
    %2404 = vmatprep.mubr.bf16.mxu0 %v1560
    %2405 = vmatmul.mubr.bf16.gmra.mrb[0].mxu0 %v1559
    %v2406 = vpop.f32.mrb[0].mxu0
    %v2407 = vadd.f32 %v2364, %v2406
    %v2408 = vpop.f32.mrb[0].mxu0
    %v2409 = vadd.f32 %v2366, %v2408
    %v2410 = vpop.f32.mrb[0].mxu0
    %v2411 = vadd.f32 %v2368, %v2410
    %v2412 = vpop.f32.mrb[0].mxu0
    %v2413 = vadd.f32 %v2370, %v2412
    %2414 = vdwg.mxu0
    %2415 = vmatprep.subr.bf16.mxu0 %v2076
    %2416 = vmatpush1.bf16.msra.mxu0 %v2075
    %2417 = vmatprep.subr.bf16.mxu0 %v2080
    %2418 = vmatpush1.bf16.msra.mxu0 %v2079
    %2419 = vmatprep.subr.bf16.mxu0 %v2084
    %2420 = vmatpush1.bf16.msra.mxu0 %v2083
    %2421 = vmatprep.subr.bf16.mxu0 %v2088
    %2422 = vmatpush1.bf16.msra.mxu0 %v2087
    %2423 = vmatprep.subr.bf16.mxu0 %v2092
    %2424 = vmatpush1.bf16.msra.mxu0 %v2091
    %2425 = vmatprep.subr.bf16.mxu0 %v2096
    %2426 = vmatpush1.bf16.msra.mxu0 %v2095
    %2427 = vmatprep.subr.bf16.mxu0 %v2100
    %2428 = vmatpush1.bf16.msra.mxu0 %v2099
    %2429 = vmatprep.subr.bf16.mxu0 %v2104
    %2430 = vmatpush1.bf16.msra.mxu0 %v2103
    %2431 = vmatprep.subr.bf16.mxu0 %v2108
    %2432 = vmatpush1.bf16.msra.mxu0 %v2107
    %2433 = vmatprep.subr.bf16.mxu0 %v2112
    %2434 = vmatpush1.bf16.msra.mxu0 %v2111
    %2435 = vmatprep.subr.bf16.mxu0 %v2116
    %2436 = vmatpush1.bf16.msra.mxu0 %v2115
    %2437 = vmatprep.subr.bf16.mxu0 %v2120
    %2438 = vmatpush1.bf16.msra.mxu0 %v2119
    %2439 = vmatprep.subr.bf16.mxu0 %v2124
    %2440 = vmatpush1.bf16.msra.mxu0 %v2123
    %2441 = vmatprep.subr.bf16.mxu0 %v2128
    %2442 = vmatpush1.bf16.msra.mxu0 %v2127
    %2443 = vmatprep.subr.bf16.mxu0 %v2132
    %2444 = vmatpush1.bf16.msra.mxu0 %v2131
    %2445 = vmatprep.subr.bf16.mxu0 %v2136
    %2446 = vmatpush1.bf16.msra.mxu0 %v2135
    %2447 = vmatprep.mubr.bf16.mxu0 %v1558
    %2448 = vmatmul.mubr.bf16.gmra.mrb[0].mxu0 %v1557
    %v2449 = vpop.f32.mrb[0].mxu0
    %v2450 = vadd.f32 0.0, %v2449
    %v2451 = vpop.f32.mrb[0].mxu0
    %v2452 = vadd.f32 0.0, %v2451
    %v2453 = vpop.f32.mrb[0].mxu0
    %v2454 = vadd.f32 0.0, %v2453
    %v2455 = vpop.f32.mrb[0].mxu0
    %v2456 = vadd.f32 0.0, %v2455
    %2457 = vdwg.mxu0
    %2458 = vmatprep.subr.bf16.mxu0 %v2140
    %2459 = vmatpush1.bf16.msra.mxu0 %v2139
    %2460 = vmatprep.subr.bf16.mxu0 %v2144
    %2461 = vmatpush1.bf16.msra.mxu0 %v2143
    %2462 = vmatprep.subr.bf16.mxu0 %v2148
    %2463 = vmatpush1.bf16.msra.mxu0 %v2147
    %2464 = vmatprep.subr.bf16.mxu0 %v2152
    %2465 = vmatpush1.bf16.msra.mxu0 %v2151
    %2466 = vmatprep.subr.bf16.mxu0 %v2156
    %2467 = vmatpush1.bf16.msra.mxu0 %v2155
    %2468 = vmatprep.subr.bf16.mxu0 %v2160
    %2469 = vmatpush1.bf16.msra.mxu0 %v2159
    %2470 = vmatprep.subr.bf16.mxu0 %v2164
    %2471 = vmatpush1.bf16.msra.mxu0 %v2163
    %2472 = vmatprep.subr.bf16.mxu0 %v2168
    %2473 = vmatpush1.bf16.msra.mxu0 %v2167
    %2474 = vmatprep.subr.bf16.mxu0 %v2172
    %2475 = vmatpush1.bf16.msra.mxu0 %v2171
    %2476 = vmatprep.subr.bf16.mxu0 %v2176
    %2477 = vmatpush1.bf16.msra.mxu0 %v2175
    %2478 = vmatprep.subr.bf16.mxu0 %v2180
    %2479 = vmatpush1.bf16.msra.mxu0 %v2179
    %2480 = vmatprep.subr.bf16.mxu0 %v2184
    %2481 = vmatpush1.bf16.msra.mxu0 %v2183
    %2482 = vmatprep.subr.bf16.mxu0 %v2188
    %2483 = vmatpush1.bf16.msra.mxu0 %v2187
    %2484 = vmatprep.subr.bf16.mxu0 %v2192
    %2485 = vmatpush1.bf16.msra.mxu0 %v2191
    %2486 = vmatprep.subr.bf16.mxu0 %v2196
    %2487 = vmatpush1.bf16.msra.mxu0 %v2195
    %2488 = vmatprep.subr.bf16.mxu0 %v2200
    %2489 = vmatpush1.bf16.msra.mxu0 %v2199
    %2490 = vmatprep.mubr.bf16.mxu0 %v1560
    %2491 = vmatmul.mubr.bf16.gmra.mrb[0].mxu0 %v1559
    %v2492 = vpop.f32.mrb[0].mxu0
    %v2493 = vadd.f32 %v2450, %v2492
    %v2494 = vpop.f32.mrb[0].mxu0
    %v2495 = vadd.f32 %v2452, %v2494
    %v2496 = vpop.f32.mrb[0].mxu0
    %v2497 = vadd.f32 %v2454, %v2496
    %v2498 = vpop.f32.mrb[0].mxu0
    %v2499 = vadd.f32 %v2456, %v2498
    %2500 = vdwg.mxu0
    %v2501 = vpack.c.bf16 %v2411, %v2407
    %v2502 = vpack.c.bf16 %v2413, %v2409
    %v2503 = vpack.c.bf16 %v2497, %v2493
    %v2504 = vpack.c.bf16 %v2499, %v2495
    %v2505 = vand.u32 %v520, 7
    %v2506 = vshra.s32 %v520, 3
    %v2507 = vand.u32 %v2506, 7
    %2509 = vrot.lane.b32.xlu0 %v2504, 9
    %v2510 = vpop.permute.xlu0 %2509
    %v2513 = vadd.s32 %v2507, 4294967295
    %vm2514 = vcmp.ge.s32.totalorder %v2513, 0
    %vm2515 = vcmp.lt.s32.totalorder %v2513, 8
    %vm2516 = vmand %vm2514, %vm2515
    %v2517 = vadd.s32 %v2505, 4294967295
    %vm2518 = vcmp.ge.s32.totalorder %v2517, 0
    %vm2519 = vcmp.lt.s32.totalorder %v2517, 8
    %vm2520 = vmand %vm2518, %vm2519
    %vm2521 = vmand %vm2516, %vm2520
    %v2522 = vsel %vm2521, 1, 0
    %vm2523 = vcmp.eq.s32.totalorder %v2522, 1
    %vm2524 = vmpackc.low %vm2523, %vm2523
    %v2525 = vsel %vm2524, 65537, 0
    %v2526 = vlaneseq
    %v2527 = vshrl.u32 %v2526, 7
    %v2528 = vsub.s32 0, %v2527
    %v2529 = vrot.slane %v2525, %v2528
    %vm2530 = vcmp.ne.s16.totalorder %v2529, 0
    %v2531 = vsel %vm2530, %v2510, 0
    %2533 = vrot.lane.b32.xlu0 %v2503, 8
    %v2534 = vpop.permute.xlu0 %2533
    %v2537 = vsel %vm2516, 1, 0
    %vm2538 = vcmp.eq.s32.totalorder %v2537, 1
    %vm2539 = vmpackc.low %vm2538, %vm2538
    %v2540 = vsel %vm2539, 65537, 0
    %v2541 = vlaneseq
    %v2542 = vshrl.u32 %v2541, 7
    %v2543 = vsub.s32 0, %v2542
    %v2544 = vrot.slane %v2540, %v2543
    %vm2545 = vcmp.ne.s16.totalorder %v2544, 0
    %v2546 = vsel %vm2545, %v2534, 0
    %2547 = vrot.lane.b32.xlu0 %v2504, 8
    %v2548 = vpop.permute.xlu0 %2547
    %v2551 = vsel %vm2545, %v2548, 0
    %2552 = vrot.lane.b32.xlu0 %v2503, 7
    %v2553 = vpop.permute.xlu0 %2552
    %v2556 = vadd.s32 %v2505, 1
    %vm2557 = vcmp.ge.s32.totalorder %v2556, 0
    %vm2558 = vcmp.lt.s32.totalorder %v2556, 8
    %vm2559 = vmand %vm2557, %vm2558
    %vm2560 = vmand %vm2516, %vm2559
    %v2561 = vsel %vm2560, 1, 0
    %vm2562 = vcmp.eq.s32.totalorder %v2561, 1
    %vm2563 = vmpackc.low %vm2562, %vm2562
    %v2564 = vsel %vm2563, 65537, 0
    %v2565 = vlaneseq
    %v2566 = vshrl.u32 %v2565, 7
    %v2567 = vsub.s32 0, %v2566
    %v2568 = vrot.slane %v2564, %v2567
    %vm2569 = vcmp.ne.s16.totalorder %v2568, 0
    %v2570 = vsel %vm2569, %v2553, 0
    %2572 = vrot.lane.b32.xlu0 %v2502, 1
    %v2573 = vpop.permute.xlu0 %2572
    %v2576 = vsel %vm2520, 1, 0
    %vm2577 = vcmp.eq.s32.totalorder %v2576, 1
    %vm2578 = vmpackc.low %vm2577, %vm2577
    %v2579 = vsel %vm2578, 65537, 0
    %v2580 = vlaneseq
    %v2581 = vshrl.u32 %v2580, 7
    %v2582 = vsub.s32 0, %v2581
    %v2583 = vrot.slane %v2579, %v2582
    %vm2584 = vcmp.ne.s16.totalorder %v2583, 0
    %v2585 = vsel %vm2584, %v2573, 0
    %2587 = vrot.lane.b32.xlu0 %v2501, 127
    %v2588 = vpop.permute.xlu0 %2587
    %v2591 = vsel %vm2559, 1, 0
    %vm2592 = vcmp.eq.s32.totalorder %v2591, 1
    %vm2593 = vmpackc.low %vm2592, %vm2592
    %v2594 = vsel %vm2593, 65537, 0
    %v2595 = vlaneseq
    %v2596 = vshrl.u32 %v2595, 7
    %v2597 = vsub.s32 0, %v2596
    %v2598 = vrot.slane %v2594, %v2597
    %vm2599 = vcmp.ne.s16.totalorder %v2598, 0
    %v2600 = vsel %vm2599, %v2588, 0
    %2601 = vrot.lane.b32.xlu0 %v2504, 1
    %v2602 = vpop.permute.xlu0 %2601
    %v2605 = vsel %vm2584, %v2602, 0
    %2606 = vrot.lane.b32.xlu0 %v2503, 127
    %v2607 = vpop.permute.xlu0 %2606
    %v2610 = vsel %vm2599, %v2607, 0
    %2611 = vrot.lane.b32.xlu0 %v2502, 121
    %v2612 = vpop.permute.xlu0 %2611
    %v2615 = vadd.s32 %v2507, 1
    %vm2616 = vcmp.ge.s32.totalorder %v2615, 0
    %vm2617 = vcmp.lt.s32.totalorder %v2615, 8
    %vm2618 = vmand %vm2616, %vm2617
    %vm2619 = vmand %vm2618, %vm2520
    %v2620 = vsel %vm2619, 1, 0
    %vm2621 = vcmp.eq.s32.totalorder %v2620, 1
    %vm2622 = vmpackc.low %vm2621, %vm2621
    %v2623 = vsel %vm2622, 65537, 0
    %v2624 = vlaneseq
    %v2625 = vshrl.u32 %v2624, 7
    %v2626 = vsub.s32 0, %v2625
    %v2627 = vrot.slane %v2623, %v2626
    %vm2628 = vcmp.ne.s16.totalorder %v2627, 0
    %v2629 = vsel %vm2628, %v2612, 0
    %2630 = vrot.lane.b32.xlu0 %v2501, 120
    %v2631 = vpop.permute.xlu0 %2630
    %v2634 = vsel %vm2618, 1, 0
    %vm2635 = vcmp.eq.s32.totalorder %v2634, 1
    %vm2636 = vmpackc.low %vm2635, %vm2635
    %v2637 = vsel %vm2636, 65537, 0
    %v2638 = vlaneseq
    %v2639 = vshrl.u32 %v2638, 7
    %v2640 = vsub.s32 0, %v2639
    %v2641 = vrot.slane %v2637, %v2640
    %vm2642 = vcmp.ne.s16.totalorder %v2641, 0
    %v2643 = vsel %vm2642, %v2631, 0
    %2644 = vrot.lane.b32.xlu0 %v2502, 120
    %v2645 = vpop.permute.xlu0 %2644
    %v2648 = vsel %vm2642, %v2645, 0
    %2649 = vrot.lane.b32.xlu0 %v2501, 119
    %v2650 = vpop.permute.xlu0 %2649
    %vm2653 = vmand %vm2618, %vm2559
    %v2654 = vsel %vm2653, 1, 0
    %vm2655 = vcmp.eq.s32.totalorder %v2654, 1
    %vm2656 = vmpackc.low %vm2655, %vm2655
    %v2657 = vsel %vm2656, 65537, 0
    %v2658 = vlaneseq
    %v2659 = vshrl.u32 %v2658, 7
    %v2660 = vsub.s32 0, %v2659
    %v2661 = vrot.slane %v2657, %v2660
    %vm2662 = vcmp.ne.s16.totalorder %v2661, 0
    %v2663 = vsel %vm2662, %v2650, 0
    %v2664 = vld [vmem:[%s3] sm:$0xff]
    %v2665 = vld [vmem:[%s3 + $0x8] sm:$0xff]
    %v2666 = vld [vmem:[%s3 + $0x10] sm:$0xff]
    %v2667 = vld [vmem:[%s3 + $0x18] sm:$0xff]
    %v2672 = vunpack.c.l.b16 %v2664
    %v2673 = vunpack.c.h.b16 %v2664
    %v2674 = vunpack.c.l.b16 %v2665
    %v2675 = vunpack.c.h.b16 %v2665
    %v2676 = vunpack.c.l.b16 %v2666
    %v2677 = vunpack.c.h.b16 %v2666
    %v2678 = vunpack.c.l.b16 %v2667
    %v2679 = vunpack.c.h.b16 %v2667
    %v2680 = vpack.c.b16 %v2674, %v2672
    %v2681 = vpack.c.b16 %v2675, %v2673
    %v2682 = vpack.c.b16 %v2678, %v2676
    %v2683 = vpack.c.b16 %v2679, %v2677
    %2688 = vmatprep.subr.bf16.mxu0 0
    %2689 = vmatpush1.bf16.msra.mxu0 %v2531
    %2690 = vmatprep.subr.bf16.mxu0 0
    %2691 = vmatpush1.bf16.msra.mxu0 %v2546
    %2692 = vmatprep.subr.bf16.mxu0 0
    %2693 = vmatpush1.bf16.msra.mxu0 %v2551
    %2694 = vmatprep.subr.bf16.mxu0 0
    %2695 = vmatpush1.bf16.msra.mxu0 %v2570
    %2696 = vmatprep.subr.bf16.mxu0 0
    %2697 = vmatpush1.bf16.msra.mxu0 %v2585
    %2698 = vmatprep.subr.bf16.mxu0 0
    %2699 = vmatpush1.bf16.msra.mxu0 %v2501
    %2700 = vmatprep.subr.bf16.mxu0 0
    %2701 = vmatpush1.bf16.msra.mxu0 %v2502
    %2702 = vmatprep.subr.bf16.mxu0 0
    %2703 = vmatpush1.bf16.msra.mxu0 %v2600
    %2704 = vmatprep.subr.bf16.mxu0 0
    %2705 = vmatpush1.bf16.msra.mxu0 %v2605
    %2706 = vmatprep.subr.bf16.mxu0 0
    %2707 = vmatpush1.bf16.msra.mxu0 %v2503
    %2708 = vmatprep.subr.bf16.mxu0 0
    %2709 = vmatpush1.bf16.msra.mxu0 %v2504
    %2710 = vmatprep.subr.bf16.mxu0 0
    %2711 = vmatpush1.bf16.msra.mxu0 %v2610
    %2712 = vmatprep.subr.bf16.mxu0 0
    %2713 = vmatpush1.bf16.msra.mxu0 %v2629
    %2714 = vmatprep.subr.bf16.mxu0 0
    %2715 = vmatpush1.bf16.msra.mxu0 %v2643
    %2716 = vmatprep.subr.bf16.mxu0 0
    %2717 = vmatpush1.bf16.msra.mxu0 %v2648
    %2718 = vmatprep.subr.bf16.mxu0 0
    %2719 = vmatpush1.bf16.msra.mxu0 %v2663
    %2720 = vmatprep.mubr.bf16.mxu0 %v2681
    %2721 = vmatmul.mubr.bf16.gmra.mrb[0].mxu0 %v2680
    %v2722 = vpop.f32.mrb[0].mxu0
    %v2723 = vadd.f32 0.0, %v2722
    %v2724 = vpop.f32.mrb[0].mxu0
    %v2725 = vpop.f32.mrb[0].mxu0
    %v2726 = vadd.f32 0.0, %v2725
    %v2727 = vpop.f32.mrb[0].mxu0
    %2728 = vmatprep.mubr.bf16.mxu0 %v2683
    %2729 = vmatmul.mubr.bf16.gmra.mrb[0].mxu0 %v2682
    %v2730 = vpop.f32.mrb[0].mxu0
    %v2731 = vadd.f32 0.0, %v2730
    %v2732 = vpop.f32.mrb[0].mxu0
    %v2733 = vpop.f32.mrb[0].mxu0
    %v2734 = vadd.f32 0.0, %v2733
    %v2735 = vpop.f32.mrb[0].mxu0
    %2736 = vdwg.mxu0
    %2737 = vadd.xlane.f32.xlu0 %v2723
    %v2738 = vpop.xlane.xlu0 %2737
    %2739 = vadd.xlane.f32.xlu0 %v2726
    %v2740 = vpop.xlane.xlu0 %2739
    %2741 = vadd.xlane.f32.xlu0 %v2731
    %v2742 = vpop.xlane.xlu0 %2741
    %2743 = vadd.xlane.f32.xlu0 %v2734
    %v2744 = vpop.xlane.xlu0 %2743
    %v2745 = vrcp.pop 128.0
    %v2746 = vmul.f32 %v2738, %v2745
    %v2747 = vmul.f32 %v2740, %v2745
    %v2748 = vmul.f32 %v2742, %v2745
    %v2749 = vmul.f32 %v2744, %v2745
    %v2750 = vmul.f32 %v2723, %v2723
    %v2751 = vmul.f32 %v2726, %v2726
    %v2752 = vmul.f32 %v2731, %v2731
    %v2753 = vmul.f32 %v2734, %v2734
    %2754 = vadd.xlane.f32.xlu0 %v2750
    %v2755 = vpop.xlane.xlu0 %2754
    %2756 = vadd.xlane.f32.xlu0 %v2751
    %v2757 = vpop.xlane.xlu0 %2756
    %2758 = vadd.xlane.f32.xlu0 %v2752
    %v2759 = vpop.xlane.xlu0 %2758
    %2760 = vadd.xlane.f32.xlu0 %v2753
    %v2761 = vpop.xlane.xlu0 %2760
    %v2762 = vmul.f32 %v2755, %v2745
    %v2763 = vmul.f32 %v2757, %v2745
    %v2764 = vmul.f32 %v2759, %v2745
    %v2765 = vmul.f32 %v2761, %v2745
    %v2766 = vmul.f32 %v2746, %v2746
    %v2767 = vmul.f32 %v2747, %v2747
    %v2768 = vmul.f32 %v2748, %v2748
    %v2769 = vmul.f32 %v2749, %v2749
    %v2770 = vsub.f32 %v2762, %v2766
    %v2771 = vsub.f32 %v2763, %v2767
    %v2772 = vsub.f32 %v2764, %v2768
    %v2773 = vsub.f32 %v2765, %v2769
    %v2774 = vmax.f32 %v2770, 0.0
    %v2775 = vmax.f32 %v2771, 0.0
    %v2776 = vmax.f32 %v2772, 0.0
    %v2777 = vmax.f32 %v2773, 0.0
    %v2778 = vld [vmem:[%s7] sm:$0xff]
    %v2779 = vld [vmem:[%s7 + $0x8] sm:$0xff]
    %v2780 = vld [vmem:[%s7 + $0x10] sm:$0xff]
    %v2781 = vld [vmem:[%s7 + $0x18] sm:$0xff]
    %v2782 = vsub.f32 %v2723, %v2746
    %v2783 = vsub.f32 %v2726, %v2747
    %v2784 = vsub.f32 %v2731, %v2748
    %v2785 = vsub.f32 %v2734, %v2749
    %v2786 = vadd.f32 %v2774, 1e-05
    %v2787 = vadd.f32 %v2775, 1e-05
    %v2788 = vadd.f32 %v2776, 1e-05
    %v2789 = vadd.f32 %v2777, 1e-05
    %v2790 = vrsqrt.pop %v2786
    %v2791 = vrsqrt.pop %v2787
    %v2792 = vrsqrt.pop %v2788
    %v2793 = vrsqrt.pop %v2789
    %v2794 = vmul.f32 %v2782, %v2790
    %v2795 = vmul.f32 %v2783, %v2791
    %v2796 = vmul.f32 %v2784, %v2792
    %v2797 = vmul.f32 %v2785, %v2793
    %2799 = vset.pattern.permute.xlu0 0
    %2800 = vperm.xlu0 %2799, %v2778
    %v2801 = vpop.permute.xlu0 %2800
    %2804 = vset.pattern.permute.xlu0 0
    %2805 = vperm.xlu0 %2804, %v2779
    %v2806 = vpop.permute.xlu0 %2805
    %2809 = vset.pattern.permute.xlu0 0
    %2810 = vperm.xlu0 %2809, %v2780
    %v2811 = vpop.permute.xlu0 %2810
    %2814 = vset.pattern.permute.xlu0 0
    %2815 = vperm.xlu0 %2814, %v2781
    %v2816 = vpop.permute.xlu0 %2815
    %v2818 = vmul.f32 %v2794, %v2801
    %v2819 = vmul.f32 %v2795, %v2806
    %v2820 = vmul.f32 %v2796, %v2811
    %v2821 = vmul.f32 %v2797, %v2816
    %2822 = vset.pattern.permute.xlu0 1
    %2823 = vperm.xlu0 %2822, %v2778
    %v2824 = vpop.permute.xlu0 %2823
    %2826 = vset.pattern.permute.xlu0 1
    %2827 = vperm.xlu0 %2826, %v2779
    %v2828 = vpop.permute.xlu0 %2827
    %2830 = vset.pattern.permute.xlu0 1
    %2831 = vperm.xlu0 %2830, %v2780
    %v2832 = vpop.permute.xlu0 %2831
    %2834 = vset.pattern.permute.xlu0 1
    %2835 = vperm.xlu0 %2834, %v2781
    %v2836 = vpop.permute.xlu0 %2835
    %v2838 = vadd.f32 %v2818, %v2824
    %v2839 = vadd.f32 %v2819, %v2828
    %v2840 = vadd.f32 %v2820, %v2832
    %v2841 = vadd.f32 %v2821, %v2836
    %v2842 = vmul.f32 %v2838, 0.2
    %v2843 = vmul.f32 %v2839, 0.2
    %v2844 = vmul.f32 %v2840, 0.2
    %v2845 = vmul.f32 %v2841, 0.2
    %v2846 = vmax.f32 %v2838, %v2842
    %v2847 = vmax.f32 %v2839, %v2843
    %v2848 = vmax.f32 %v2840, %v2844
    %v2849 = vmax.f32 %v2841, %v2845
    %v2850 = vpack.c.bf16 %v2847, %v2846
    %v2851 = vpack.c.bf16 %v2849, %v2848
    %v2852 = vld [vmem:[%s10] sm:$0xf]
    %v2853 = vld [vmem:[%s10 + $0x4] sm:$0xf]
    %v2854 = vld [vmem:[%s10 + $0x8] sm:$0xf]
    %v2855 = vld [vmem:[%s10 + $0xc] sm:$0xf]
    %v2856 = vld [vmem:[%s10 + $0x10] sm:$0xf]
    %v2857 = vld [vmem:[%s10 + $0x14] sm:$0xf]
    %v2858 = vld [vmem:[%s10 + $0x18] sm:$0xf]
    %v2859 = vld [vmem:[%s10 + $0x1c] sm:$0xf]
    %v2860 = vld [vmem:[%s10 + $0x20] sm:$0xf]
    %v2861 = vld [vmem:[%s10 + $0x24] sm:$0xf]
    %v2862 = vld [vmem:[%s10 + $0x28] sm:$0xf]
    %v2863 = vld [vmem:[%s10 + $0x2c] sm:$0xf]
    %v2864 = vld [vmem:[%s10 + $0x30] sm:$0xf]
    %v2865 = vld [vmem:[%s10 + $0x34] sm:$0xf]
    %v2866 = vld [vmem:[%s10 + $0x38] sm:$0xf]
    %v2867 = vld [vmem:[%s10 + $0x3c] sm:$0xf]
    %v2884 = vunpack.c.l.b16 %v2852
    %v2885 = vunpack.c.l.b16 %v2853
    %v2886 = vunpack.c.l.b16 %v2854
    %v2887 = vunpack.c.l.b16 %v2855
    %v2888 = vunpack.c.l.b16 %v2856
    %v2889 = vunpack.c.l.b16 %v2857
    %v2890 = vunpack.c.l.b16 %v2858
    %v2891 = vunpack.c.l.b16 %v2859
    %v2892 = vunpack.c.l.b16 %v2860
    %v2893 = vunpack.c.l.b16 %v2861
    %v2894 = vunpack.c.l.b16 %v2862
    %v2895 = vunpack.c.l.b16 %v2863
    %v2896 = vunpack.c.l.b16 %v2864
    %v2897 = vunpack.c.l.b16 %v2865
    %v2898 = vunpack.c.l.b16 %v2866
    %v2899 = vunpack.c.l.b16 %v2867
    %v2900 = vpack.c.b16 %v2885, %v2884
    %v2901 = vpack.c.b16 %v2887, %v2886
    %v2902 = vpack.c.b16 %v2889, %v2888
    %v2903 = vpack.c.b16 %v2891, %v2890
    %v2904 = vpack.c.b16 %v2893, %v2892
    %v2905 = vpack.c.b16 %v2895, %v2894
    %v2906 = vpack.c.b16 %v2897, %v2896
    %v2907 = vpack.c.b16 %v2899, %v2898
    %2916 = vmatprep.subr.bf16.mxu0 0
    %2917 = vmatpush1.bf16.msra.mxu0 %v2900
    %2918 = vmatprep.subr.bf16.mxu0 0
    %2919 = vmatpush1.bf16.msra.mxu0 %v2901
    %2920 = vmatprep.subr.bf16.mxu0 0
    %2921 = vmatpush1.bf16.msra.mxu0 %v2902
    %2922 = vmatprep.subr.bf16.mxu0 0
    %2923 = vmatpush1.bf16.msra.mxu0 %v2903
    %2924 = vmatprep.subr.bf16.mxu0 0
    %2925 = vmatpush1.bf16.msra.mxu0 %v2904
    %2926 = vmatprep.subr.bf16.mxu0 0
    %2927 = vmatpush1.bf16.msra.mxu0 %v2905
    %2928 = vmatprep.subr.bf16.mxu0 0
    %2929 = vmatpush1.bf16.msra.mxu0 %v2906
    %2930 = vmatprep.subr.bf16.mxu0 0
    %2931 = vmatpush1.bf16.msra.mxu0 %v2907
    %2932 = vmatprep.subr.bf16.mxu0 0
    %2933 = vmatpush1.bf16.msra.mxu0 0
    %2934 = vmatprep.subr.bf16.mxu0 0
    %2935 = vmatpush1.bf16.msra.mxu0 0
    %2936 = vmatprep.subr.bf16.mxu0 0
    %2937 = vmatpush1.bf16.msra.mxu0 0
    %2938 = vmatprep.subr.bf16.mxu0 0
    %2939 = vmatpush1.bf16.msra.mxu0 0
    %2940 = vmatprep.subr.bf16.mxu0 0
    %2941 = vmatpush1.bf16.msra.mxu0 0
    %2942 = vmatprep.subr.bf16.mxu0 0
    %2943 = vmatpush1.bf16.msra.mxu0 0
    %2944 = vmatprep.subr.bf16.mxu0 0
    %2945 = vmatpush1.bf16.msra.mxu0 0
    %2946 = vmatprep.subr.bf16.mxu0 0
    %2947 = vmatpush1.bf16.msra.mxu0 0
    %2948 = vmatprep.mubr.bf16.mxu0 0
    %2949 = vmatmul.mubr.bf16.gmra.mrb[0].mxu0 %v2850
    %v2950 = vpop.f32.mrb[0].mxu0
    %v2951 = vadd.f32 0.0, %v2950
    %v2952 = vpop.f32.mrb[0].mxu0
    %v2953 = vpop.f32.mrb[0].mxu0
    %v2954 = vadd.f32 0.0, %v2953
    %v2955 = vpop.f32.mrb[0].mxu0
    %2956 = vmatprep.mubr.bf16.mxu0 0
    %2957 = vmatmul.mubr.bf16.gmra.mrb[0].mxu0 %v2851
    %v2958 = vpop.f32.mrb[0].mxu0
    %v2959 = vadd.f32 0.0, %v2958
    %v2960 = vpop.f32.mrb[0].mxu0
    %v2961 = vpop.f32.mrb[0].mxu0
    %v2962 = vadd.f32 0.0, %v2961
    %v2963 = vpop.f32.mrb[0].mxu0
    %2964 = vdwg.mxu0
    %v2965 = vpack.c.bf16 %v2954, %v2951
    %v2966 = vpack.c.bf16 %v2962, %v2959
    %v2967 = vand.u32 %v520, 3
    %v2968 = vshra.s32 %v520, 2
    %v2969 = vand.u32 %v2968, 3
    %2972 = vrot.lane.b32.xlu0 %v2965, 5
    %v2973 = vpop.permute.xlu0 %2972
    %2974 = vrot.lane.b32.xlu0 %v2966, 5
    %v2975 = vpop.permute.xlu0 %2974
    %2976 = vrot.lane.b32.xlu0 %v2965, 37
    %v2977 = vpop.permute.xlu0 %2976
    %2978 = vrot.lane.b32.xlu0 %v2966, 37
    %v2979 = vpop.permute.xlu0 %2978
    %vm2980 = vcmask 39936
    %v2983 = vsel %vm2980, %v2973, %v2977
    %v2987 = vsel %vm2980, %v2975, %v2979
    %v2989 = vadd.s32 %v2969, 4294967295
    %vm2990 = vcmp.ge.s32.totalorder %v2989, 0
    %vm2991 = vcmp.lt.s32.totalorder %v2989, 4
    %vm2992 = vmand %vm2990, %vm2991
    %v2993 = vadd.s32 %v2967, 4294967295
    %vm2994 = vcmp.ge.s32.totalorder %v2993, 0
    %vm2995 = vcmp.lt.s32.totalorder %v2993, 4
    %vm2996 = vmand %vm2994, %vm2995
    %vm2997 = vmand %vm2992, %vm2996
    %v2998 = vsel %vm2997, 1, 0
    %vm2999 = vcmp.eq.s32.totalorder %v2998, 1
    %vm3000 = vmpackc.low %vm2999, %vm2999
    %v3001 = vsel %vm3000, 65537, 0
    %v3002 = vlaneseq
    %v3003 = vshrl.u32 %v3002, 7
    %v3004 = vsub.s32 0, %v3003
    %v3005 = vrot.slane %v3001, %v3004
    %vm3006 = vcmp.ne.s16.totalorder %v3005, 0
    %v3007 = vsel %vm3006, %v2983, 0
    %v3008 = vsel %vm3006, %v2987, 0
    %3009 = vrot.lane.b32.xlu0 %v2965, 36
    %v3010 = vpop.permute.xlu0 %3009
    %3011 = vrot.lane.b32.xlu0 %v2966, 36
    %v3012 = vpop.permute.xlu0 %3011
    %3013 = vrot.lane.b32.xlu0 %v2965, 68
    %v3014 = vpop.permute.xlu0 %3013
    %3015 = vrot.lane.b32.xlu0 %v2966, 68
    %v3016 = vpop.permute.xlu0 %3015
    %vm3017 = vcmask 31744
    %v3020 = vsel %vm3017, %v3010, %v3014
    %v3024 = vsel %vm3017, %v3012, %v3016
    %v3026 = vsel %vm2992, 1, 0
    %vm3027 = vcmp.eq.s32.totalorder %v3026, 1
    %vm3028 = vmpackc.low %vm3027, %vm3027
    %v3029 = vsel %vm3028, 65537, 0
    %v3030 = vlaneseq
    %v3031 = vshrl.u32 %v3030, 7
    %v3032 = vsub.s32 0, %v3031
    %v3033 = vrot.slane %v3029, %v3032
    %vm3034 = vcmp.ne.s16.totalorder %v3033, 0
    %v3035 = vsel %vm3034, %v3020, 0
    %v3036 = vsel %vm3034, %v3024, 0
    %3037 = vrot.lane.b32.xlu0 %v2965, 4
    %v3038 = vpop.permute.xlu0 %3037
    %3039 = vrot.lane.b32.xlu0 %v2966, 4
    %v3040 = vpop.permute.xlu0 %3039
    %v3042 = vsel %vm3017, %v3038, %v3010
    %v3045 = vsel %vm3017, %v3040, %v3012
    %v3047 = vsel %vm3034, %v3042, 0
    %v3048 = vsel %vm3034, %v3045, 0
    %3049 = vrot.lane.b32.xlu0 %v2965, 35
    %v3050 = vpop.permute.xlu0 %3049
    %3051 = vrot.lane.b32.xlu0 %v2966, 35
    %v3052 = vpop.permute.xlu0 %3051
    %3053 = vrot.lane.b32.xlu0 %v2965, 67
    %v3054 = vpop.permute.xlu0 %3053
    %3055 = vrot.lane.b32.xlu0 %v2966, 67
    %v3056 = vpop.permute.xlu0 %3055
    %vm3057 = vcmask 23552
    %v3060 = vsel %vm3057, %v3050, %v3054
    %v3064 = vsel %vm3057, %v3052, %v3056
    %v3066 = vadd.s32 %v2967, 1
    %vm3067 = vcmp.ge.s32.totalorder %v3066, 0
    %vm3068 = vcmp.lt.s32.totalorder %v3066, 4
    %vm3069 = vmand %vm3067, %vm3068
    %vm3070 = vmand %vm2992, %vm3069
    %v3071 = vsel %vm3070, 1, 0
    %vm3072 = vcmp.eq.s32.totalorder %v3071, 1
    %vm3073 = vmpackc.low %vm3072, %vm3072
    %v3074 = vsel %vm3073, 65537, 0
    %v3075 = vlaneseq
    %v3076 = vshrl.u32 %v3075, 7
    %v3077 = vsub.s32 0, %v3076
    %v3078 = vrot.slane %v3074, %v3077
    %vm3079 = vcmp.ne.s16.totalorder %v3078, 0
    %v3080 = vsel %vm3079, %v3060, 0
    %v3081 = vsel %vm3079, %v3064, 0
    %3082 = vrot.lane.b32.xlu0 %v2965, 65
    %v3083 = vpop.permute.xlu0 %3082
    %3084 = vrot.lane.b32.xlu0 %v2966, 65
    %v3085 = vpop.permute.xlu0 %3084
    %3086 = vrot.lane.b32.xlu0 %v2965, 97
    %v3087 = vpop.permute.xlu0 %3086
    %3088 = vrot.lane.b32.xlu0 %v2966, 97
    %v3089 = vpop.permute.xlu0 %3088
    %v3092 = vsel %vm808, %v3083, %v3087
    %v3096 = vsel %vm808, %v3085, %v3089
    %v3098 = vsel %vm2996, 1, 0
    %vm3099 = vcmp.eq.s32.totalorder %v3098, 1
    %vm3100 = vmpackc.low %vm3099, %vm3099
    %v3101 = vsel %vm3100, 65537, 0
    %v3102 = vlaneseq
    %v3103 = vshrl.u32 %v3102, 7
    %v3104 = vsub.s32 0, %v3103
    %v3105 = vrot.slane %v3101, %v3104
    %vm3106 = vcmp.ne.s16.totalorder %v3105, 0
    %v3107 = vsel %vm3106, %v3092, 0
    %v3108 = vsel %vm3106, %v3096, 0
    %3109 = vrot.lane.b32.xlu0 %v2965, 127
    %v3110 = vpop.permute.xlu0 %3109
    %3111 = vrot.lane.b32.xlu0 %v2966, 127
    %v3112 = vpop.permute.xlu0 %3111
    %3113 = vrot.lane.b32.xlu0 %v2965, 31
    %v3114 = vpop.permute.xlu0 %3113
    %3115 = vrot.lane.b32.xlu0 %v2966, 31
    %v3116 = vpop.permute.xlu0 %3115
    %vm3117 = vcmask 252928
    %v3120 = vsel %vm3117, %v3110, %v3114
    %v3124 = vsel %vm3117, %v3112, %v3116
    %v3126 = vsel %vm3069, 1, 0
    %vm3127 = vcmp.eq.s32.totalorder %v3126, 1
    %vm3128 = vmpackc.low %vm3127, %vm3127
    %v3129 = vsel %vm3128, 65537, 0
    %v3130 = vlaneseq
    %v3131 = vshrl.u32 %v3130, 7
    %v3132 = vsub.s32 0, %v3131
    %v3133 = vrot.slane %v3129, %v3132
    %vm3134 = vcmp.ne.s16.totalorder %v3133, 0
    %v3135 = vsel %vm3134, %v3120, 0
    %v3136 = vsel %vm3134, %v3124, 0
    %3137 = vrot.lane.b32.xlu0 %v2965, 1
    %v3138 = vpop.permute.xlu0 %3137
    %3139 = vrot.lane.b32.xlu0 %v2966, 1
    %v3140 = vpop.permute.xlu0 %3139
    %3141 = vrot.lane.b32.xlu0 %v2965, 33
    %v3142 = vpop.permute.xlu0 %3141
    %3143 = vrot.lane.b32.xlu0 %v2966, 33
    %v3144 = vpop.permute.xlu0 %3143
    %v3147 = vsel %vm808, %v3138, %v3142
    %v3151 = vsel %vm808, %v3140, %v3144
    %v3153 = vsel %vm3106, %v3147, 0
    %v3154 = vsel %vm3106, %v3151, 0
    %3155 = vrot.lane.b32.xlu0 %v2965, 63
    %v3156 = vpop.permute.xlu0 %3155
    %3157 = vrot.lane.b32.xlu0 %v2966, 63
    %v3158 = vpop.permute.xlu0 %3157
    %3159 = vrot.lane.b32.xlu0 %v2965, 95
    %v3160 = vpop.permute.xlu0 %3159
    %3161 = vrot.lane.b32.xlu0 %v2966, 95
    %v3162 = vpop.permute.xlu0 %3161
    %v3165 = vsel %vm3117, %v3156, %v3160
    %v3169 = vsel %vm3117, %v3158, %v3162
    %v3171 = vsel %vm3134, %v3165, 0
    %v3172 = vsel %vm3134, %v3169, 0
    %3173 = vrot.lane.b32.xlu0 %v2965, 93
    %v3174 = vpop.permute.xlu0 %3173
    %3175 = vrot.lane.b32.xlu0 %v2966, 93
    %v3176 = vpop.permute.xlu0 %3175
    %3177 = vrot.lane.b32.xlu0 %v2965, 125
    %v3178 = vpop.permute.xlu0 %3177
    %3179 = vrot.lane.b32.xlu0 %v2966, 125
    %v3180 = vpop.permute.xlu0 %3179
    %vm3181 = vcmask 236544
    %v3184 = vsel %vm3181, %v3174, %v3178
    %v3188 = vsel %vm3181, %v3176, %v3180
    %v3190 = vadd.s32 %v2969, 1
    %vm3191 = vcmp.ge.s32.totalorder %v3190, 0
    %vm3192 = vcmp.lt.s32.totalorder %v3190, 4
    %vm3193 = vmand %vm3191, %vm3192
    %vm3194 = vmand %vm3193, %vm2996
    %v3195 = vsel %vm3194, 1, 0
    %vm3196 = vcmp.eq.s32.totalorder %v3195, 1
    %vm3197 = vmpackc.low %vm3196, %vm3196
    %v3198 = vsel %vm3197, 65537, 0
    %v3199 = vlaneseq
    %v3200 = vshrl.u32 %v3199, 7
    %v3201 = vsub.s32 0, %v3200
    %v3202 = vrot.slane %v3198, %v3201
    %vm3203 = vcmp.ne.s16.totalorder %v3202, 0
    %v3204 = vsel %vm3203, %v3184, 0
    %v3205 = vsel %vm3203, %v3188, 0
    %3206 = vrot.lane.b32.xlu0 %v2965, 124
    %v3207 = vpop.permute.xlu0 %3206
    %3208 = vrot.lane.b32.xlu0 %v2966, 124
    %v3209 = vpop.permute.xlu0 %3208
    %3210 = vrot.lane.b32.xlu0 %v2965, 28
    %v3211 = vpop.permute.xlu0 %3210
    %3212 = vrot.lane.b32.xlu0 %v2966, 28
    %v3213 = vpop.permute.xlu0 %3212
    %vm3214 = vcmask 228352
    %v3217 = vsel %vm3214, %v3207, %v3211
    %v3221 = vsel %vm3214, %v3209, %v3213
    %v3223 = vsel %vm3193, 1, 0
    %vm3224 = vcmp.eq.s32.totalorder %v3223, 1
    %vm3225 = vmpackc.low %vm3224, %vm3224
    %v3226 = vsel %vm3225, 65537, 0
    %v3227 = vlaneseq
    %v3228 = vshrl.u32 %v3227, 7
    %v3229 = vsub.s32 0, %v3228
    %v3230 = vrot.slane %v3226, %v3229
    %vm3231 = vcmp.ne.s16.totalorder %v3230, 0
    %v3232 = vsel %vm3231, %v3217, 0
    %v3233 = vsel %vm3231, %v3221, 0
    %3234 = vrot.lane.b32.xlu0 %v2965, 92
    %v3235 = vpop.permute.xlu0 %3234
    %3236 = vrot.lane.b32.xlu0 %v2966, 92
    %v3237 = vpop.permute.xlu0 %3236
    %v3239 = vsel %vm3214, %v3235, %v3207
    %v3242 = vsel %vm3214, %v3237, %v3209
    %v3244 = vsel %vm3231, %v3239, 0
    %v3245 = vsel %vm3231, %v3242, 0
    %3246 = vrot.lane.b32.xlu0 %v2965, 123
    %v3247 = vpop.permute.xlu0 %3246
    %3248 = vrot.lane.b32.xlu0 %v2966, 123
    %v3249 = vpop.permute.xlu0 %3248
    %3250 = vrot.lane.b32.xlu0 %v2965, 27
    %v3251 = vpop.permute.xlu0 %3250
    %3252 = vrot.lane.b32.xlu0 %v2966, 27
    %v3253 = vpop.permute.xlu0 %3252
    %vm3254 = vcmask 220160
    %v3257 = vsel %vm3254, %v3247, %v3251
    %v3261 = vsel %vm3254, %v3249, %v3253
    %vm3263 = vmand %vm3193, %vm3069
    %v3264 = vsel %vm3263, 1, 0
    %vm3265 = vcmp.eq.s32.totalorder %v3264, 1
    %vm3266 = vmpackc.low %vm3265, %vm3265
    %v3267 = vsel %vm3266, 65537, 0
    %v3268 = vlaneseq
    %v3269 = vshrl.u32 %v3268, 7
    %v3270 = vsub.s32 0, %v3269
    %v3271 = vrot.slane %v3267, %v3270
    %vm3272 = vcmp.ne.s16.totalorder %v3271, 0
    %v3273 = vsel %vm3272, %v3257, 0
    %v3274 = vsel %vm3272, %v3261, 0
    %3275 = vrot.lane.b32.xlu0 %v2965, 96
    %v3276 = vpop.permute.xlu0 %3275
    %3277 = vrot.lane.b32.xlu0 %v2966, 96
    %v3278 = vpop.permute.xlu0 %3277
    %3281 = vrot.lane.b32.xlu0 %v2965, 64
    %v3282 = vpop.permute.xlu0 %3281
    %3283 = vrot.lane.b32.xlu0 %v2966, 64
    %v3284 = vpop.permute.xlu0 %3283
    %3287 = vrot.lane.b32.xlu0 %v2965, 32
    %v3288 = vpop.permute.xlu0 %3287
    %3289 = vrot.lane.b32.xlu0 %v2966, 32
    %v3290 = vpop.permute.xlu0 %3289
    %v3293 = vld [vmem:[%s4] sm:$0xff]
    %v3294 = vld [vmem:[%s4 + $0x8] sm:$0xff]
    %v3295 = vld [vmem:[%s4 + $0x10] sm:$0xff]
    %v3296 = vld [vmem:[%s4 + $0x18] sm:$0xff]
    %v3297 = vld [vmem:[%s4 + $0x20] sm:$0xff]
    %v3298 = vld [vmem:[%s4 + $0x28] sm:$0xff]
    %v3299 = vld [vmem:[%s4 + $0x30] sm:$0xff]
    %v3300 = vld [vmem:[%s4 + $0x38] sm:$0xff]
    %v3301 = vld [vmem:[%s4 + $0x40] sm:$0xff]
    %v3302 = vld [vmem:[%s4 + $0x48] sm:$0xff]
    %v3303 = vld [vmem:[%s4 + $0x50] sm:$0xff]
    %v3304 = vld [vmem:[%s4 + $0x58] sm:$0xff]
    %v3305 = vld [vmem:[%s4 + $0x60] sm:$0xff]
    %v3306 = vld [vmem:[%s4 + $0x68] sm:$0xff]
    %v3307 = vld [vmem:[%s4 + $0x70] sm:$0xff]
    %v3308 = vld [vmem:[%s4 + $0x78] sm:$0xff]
    %v3325 = vunpack.c.l.b16 %v3293
    %v3326 = vunpack.c.h.b16 %v3293
    %v3327 = vunpack.c.l.b16 %v3294
    %v3328 = vunpack.c.h.b16 %v3294
    %v3329 = vunpack.c.l.b16 %v3295
    %v3330 = vunpack.c.h.b16 %v3295
    %v3331 = vunpack.c.l.b16 %v3296
    %v3332 = vunpack.c.h.b16 %v3296
    %v3333 = vunpack.c.l.b16 %v3297
    %v3334 = vunpack.c.h.b16 %v3297
    %v3335 = vunpack.c.l.b16 %v3298
    %v3336 = vunpack.c.h.b16 %v3298
    %v3337 = vunpack.c.l.b16 %v3299
    %v3338 = vunpack.c.h.b16 %v3299
    %v3339 = vunpack.c.l.b16 %v3300
    %v3340 = vunpack.c.h.b16 %v3300
    %v3341 = vunpack.c.l.b16 %v3301
    %v3342 = vunpack.c.h.b16 %v3301
    %v3343 = vunpack.c.l.b16 %v3302
    %v3344 = vunpack.c.h.b16 %v3302
    %v3345 = vunpack.c.l.b16 %v3303
    %v3346 = vunpack.c.h.b16 %v3303
    %v3347 = vunpack.c.l.b16 %v3304
    %v3348 = vunpack.c.h.b16 %v3304
    %v3349 = vunpack.c.l.b16 %v3305
    %v3350 = vunpack.c.h.b16 %v3305
    %v3351 = vunpack.c.l.b16 %v3306
    %v3352 = vunpack.c.h.b16 %v3306
    %v3353 = vunpack.c.l.b16 %v3307
    %v3354 = vunpack.c.h.b16 %v3307
    %v3355 = vunpack.c.l.b16 %v3308
    %v3356 = vunpack.c.h.b16 %v3308
    %v3357 = vpack.c.b16 %v3329, %v3325
    %v3358 = vpack.c.b16 %v3330, %v3326
    %v3359 = vpack.c.b16 %v3331, %v3327
    %v3360 = vpack.c.b16 %v3332, %v3328
    %v3361 = vpack.c.b16 %v3337, %v3333
    %v3362 = vpack.c.b16 %v3338, %v3334
    %v3363 = vpack.c.b16 %v3339, %v3335
    %v3364 = vpack.c.b16 %v3340, %v3336
    %v3365 = vpack.c.b16 %v3345, %v3341
    %v3366 = vpack.c.b16 %v3346, %v3342
    %v3367 = vpack.c.b16 %v3347, %v3343
    %v3368 = vpack.c.b16 %v3348, %v3344
    %v3369 = vpack.c.b16 %v3353, %v3349
    %v3370 = vpack.c.b16 %v3354, %v3350
    %v3371 = vpack.c.b16 %v3355, %v3351
    %v3372 = vpack.c.b16 %v3356, %v3352
    %3389 = vmatprep.subr.bf16.mxu0 0
    %3390 = vmatpush1.bf16.msra.mxu0 %v3007
    %3391 = vmatprep.subr.bf16.mxu0 0
    %3392 = vmatpush1.bf16.msra.mxu0 %v3008
    %3393 = vmatprep.subr.bf16.mxu0 0
    %3394 = vmatpush1.bf16.msra.mxu0 %v3035
    %3395 = vmatprep.subr.bf16.mxu0 0
    %3396 = vmatpush1.bf16.msra.mxu0 %v3036
    %3397 = vmatprep.subr.bf16.mxu0 0
    %3398 = vmatpush1.bf16.msra.mxu0 %v3047
    %3399 = vmatprep.subr.bf16.mxu0 0
    %3400 = vmatpush1.bf16.msra.mxu0 %v3048
    %3401 = vmatprep.subr.bf16.mxu0 0
    %3402 = vmatpush1.bf16.msra.mxu0 %v3080
    %3403 = vmatprep.subr.bf16.mxu0 0
    %3404 = vmatpush1.bf16.msra.mxu0 %v3081
    %3405 = vmatprep.subr.bf16.mxu0 0
    %3406 = vmatpush1.bf16.msra.mxu0 %v3107
    %3407 = vmatprep.subr.bf16.mxu0 0
    %3408 = vmatpush1.bf16.msra.mxu0 %v3108
    %3409 = vmatprep.subr.bf16.mxu0 0
    %3410 = vmatpush1.bf16.msra.mxu0 %v2965
    %3411 = vmatprep.subr.bf16.mxu0 0
    %3412 = vmatpush1.bf16.msra.mxu0 %v2966
    %3413 = vmatprep.subr.bf16.mxu0 0
    %3414 = vmatpush1.bf16.msra.mxu0 %v3276
    %3415 = vmatprep.subr.bf16.mxu0 0
    %3416 = vmatpush1.bf16.msra.mxu0 %v3278
    %3417 = vmatprep.subr.bf16.mxu0 0
    %3418 = vmatpush1.bf16.msra.mxu0 %v3135
    %3419 = vmatprep.subr.bf16.mxu0 0
    %3420 = vmatpush1.bf16.msra.mxu0 %v3136
    %3421 = vmatprep.mubr.bf16.mxu0 %v3358
    %3422 = vmatmul.mubr.bf16.gmra.mrb[0].mxu0 %v3357
    %v3423 = vpop.f32.mrb[0].mxu0
    %v3424 = vadd.f32 0.0, %v3423
    %v3425 = vpop.f32.mrb[0].mxu0
    %v3426 = vpop.f32.mrb[0].mxu0
    %v3427 = vadd.f32 0.0, %v3426
    %v3428 = vpop.f32.mrb[0].mxu0
    %3429 = vmatprep.mubr.bf16.mxu0 %v3362
    %3430 = vmatmul.mubr.bf16.gmra.mrb[0].mxu0 %v3361
    %v3431 = vpop.f32.mrb[0].mxu0
    %v3432 = vadd.f32 0.0, %v3431
    %v3433 = vpop.f32.mrb[0].mxu0
    %v3434 = vpop.f32.mrb[0].mxu0
    %v3435 = vadd.f32 0.0, %v3434
    %v3436 = vpop.f32.mrb[0].mxu0
    %3437 = vmatprep.mubr.bf16.mxu0 %v3366
    %3438 = vmatmul.mubr.bf16.gmra.mrb[0].mxu0 %v3365
    %v3439 = vpop.f32.mrb[0].mxu0
    %v3440 = vadd.f32 0.0, %v3439
    %v3441 = vpop.f32.mrb[0].mxu0
    %v3442 = vpop.f32.mrb[0].mxu0
    %v3443 = vadd.f32 0.0, %v3442
    %v3444 = vpop.f32.mrb[0].mxu0
    %3445 = vmatprep.mubr.bf16.mxu0 %v3370
    %3446 = vmatmul.mubr.bf16.gmra.mrb[0].mxu0 %v3369
    %v3447 = vpop.f32.mrb[0].mxu0
    %v3448 = vadd.f32 0.0, %v3447
    %v3449 = vpop.f32.mrb[0].mxu0
    %v3450 = vpop.f32.mrb[0].mxu0
    %v3451 = vadd.f32 0.0, %v3450
    %v3452 = vpop.f32.mrb[0].mxu0
    %3453 = vdwg.mxu0
    %3454 = vmatprep.subr.bf16.mxu0 0
    %3455 = vmatpush1.bf16.msra.mxu0 %v3153
    %3456 = vmatprep.subr.bf16.mxu0 0
    %3457 = vmatpush1.bf16.msra.mxu0 %v3154
    %3458 = vmatprep.subr.bf16.mxu0 0
    %3459 = vmatpush1.bf16.msra.mxu0 %v3282
    %3460 = vmatprep.subr.bf16.mxu0 0
    %3461 = vmatpush1.bf16.msra.mxu0 %v3284
    %3462 = vmatprep.subr.bf16.mxu0 0
    %3463 = vmatpush1.bf16.msra.mxu0 %v3288
    %3464 = vmatprep.subr.bf16.mxu0 0
    %3465 = vmatpush1.bf16.msra.mxu0 %v3290
    %3466 = vmatprep.subr.bf16.mxu0 0
    %3467 = vmatpush1.bf16.msra.mxu0 %v3171
    %3468 = vmatprep.subr.bf16.mxu0 0
    %3469 = vmatpush1.bf16.msra.mxu0 %v3172
    %3470 = vmatprep.subr.bf16.mxu0 0
    %3471 = vmatpush1.bf16.msra.mxu0 %v3204
    %3472 = vmatprep.subr.bf16.mxu0 0
    %3473 = vmatpush1.bf16.msra.mxu0 %v3205
    %3474 = vmatprep.subr.bf16.mxu0 0
    %3475 = vmatpush1.bf16.msra.mxu0 %v3232
    %3476 = vmatprep.subr.bf16.mxu0 0
    %3477 = vmatpush1.bf16.msra.mxu0 %v3233
    %3478 = vmatprep.subr.bf16.mxu0 0
    %3479 = vmatpush1.bf16.msra.mxu0 %v3244
    %3480 = vmatprep.subr.bf16.mxu0 0
    %3481 = vmatpush1.bf16.msra.mxu0 %v3245
    %3482 = vmatprep.subr.bf16.mxu0 0
    %3483 = vmatpush1.bf16.msra.mxu0 %v3273
    %3484 = vmatprep.subr.bf16.mxu0 0
    %3485 = vmatpush1.bf16.msra.mxu0 %v3274
    %3486 = vmatprep.mubr.bf16.mxu0 %v3360
    %3487 = vmatmul.mubr.bf16.gmra.mrb[0].mxu0 %v3359
    %v3488 = vpop.f32.mrb[0].mxu0
    %v3489 = vadd.f32 %v3424, %v3488
    %v3490 = vpop.f32.mrb[0].mxu0
    %v3491 = vpop.f32.mrb[0].mxu0
    %v3492 = vadd.f32 %v3427, %v3491
    %v3493 = vpop.f32.mrb[0].mxu0
    %3494 = vmatprep.mubr.bf16.mxu0 %v3364
    %3495 = vmatmul.mubr.bf16.gmra.mrb[0].mxu0 %v3363
    %v3496 = vpop.f32.mrb[0].mxu0
    %v3497 = vadd.f32 %v3432, %v3496
    %v3498 = vpop.f32.mrb[0].mxu0
    %v3499 = vpop.f32.mrb[0].mxu0
    %v3500 = vadd.f32 %v3435, %v3499
    %v3501 = vpop.f32.mrb[0].mxu0
    %3502 = vmatprep.mubr.bf16.mxu0 %v3368
    %3503 = vmatmul.mubr.bf16.gmra.mrb[0].mxu0 %v3367
    %v3504 = vpop.f32.mrb[0].mxu0
    %v3505 = vadd.f32 %v3440, %v3504
    %v3506 = vpop.f32.mrb[0].mxu0
    %v3507 = vpop.f32.mrb[0].mxu0
    %v3508 = vadd.f32 %v3443, %v3507
    %v3509 = vpop.f32.mrb[0].mxu0
    %3510 = vmatprep.mubr.bf16.mxu0 %v3372
    %3511 = vmatmul.mubr.bf16.gmra.mrb[0].mxu0 %v3371
    %v3512 = vpop.f32.mrb[0].mxu0
    %v3513 = vadd.f32 %v3448, %v3512
    %v3514 = vpop.f32.mrb[0].mxu0
    %v3515 = vpop.f32.mrb[0].mxu0
    %v3516 = vadd.f32 %v3451, %v3515
    %v3517 = vpop.f32.mrb[0].mxu0
    %3518 = vdwg.mxu0
    %vm3519 = vcmask 261120
    %v3520 = vsel %vm3519, %v3489, 0.0
    %3521 = vadd.xlane.f32.xlu0 %v3520
    %v3522 = vpop.xlane.xlu0 %3521
    %v3523 = vsel %vm3519, %v3492, 0.0
    %3524 = vadd.xlane.f32.xlu0 %v3523
    %v3525 = vpop.xlane.xlu0 %3524
    %v3526 = vsel %vm3519, %v3497, 0.0
    %3527 = vadd.xlane.f32.xlu0 %v3526
    %v3528 = vpop.xlane.xlu0 %3527
    %v3529 = vsel %vm3519, %v3500, 0.0
    %3530 = vadd.xlane.f32.xlu0 %v3529
    %v3531 = vpop.xlane.xlu0 %3530
    %v3532 = vsel %vm3519, %v3505, 0.0
    %3533 = vadd.xlane.f32.xlu0 %v3532
    %v3534 = vpop.xlane.xlu0 %3533
    %v3535 = vsel %vm3519, %v3508, 0.0
    %3536 = vadd.xlane.f32.xlu0 %v3535
    %v3537 = vpop.xlane.xlu0 %3536
    %v3538 = vsel %vm3519, %v3513, 0.0
    %3539 = vadd.xlane.f32.xlu0 %v3538
    %v3540 = vpop.xlane.xlu0 %3539
    %v3541 = vsel %vm3519, %v3516, 0.0
    %3542 = vadd.xlane.f32.xlu0 %v3541
    %v3543 = vpop.xlane.xlu0 %3542
    %v3544 = vrcp.pop 32.0
    %v3545 = vmul.f32 %v3522, %v3544
    %v3546 = vmul.f32 %v3525, %v3544
    %v3547 = vmul.f32 %v3528, %v3544
    %v3548 = vmul.f32 %v3531, %v3544
    %v3549 = vmul.f32 %v3534, %v3544
    %v3550 = vmul.f32 %v3537, %v3544
    %v3551 = vmul.f32 %v3540, %v3544
    %v3552 = vmul.f32 %v3543, %v3544
    %v3553 = vmul.f32 %v3489, %v3489
    %v3554 = vmul.f32 %v3492, %v3492
    %v3555 = vmul.f32 %v3497, %v3497
    %v3556 = vmul.f32 %v3500, %v3500
    %v3557 = vmul.f32 %v3505, %v3505
    %v3558 = vmul.f32 %v3508, %v3508
    %v3559 = vmul.f32 %v3513, %v3513
    %v3560 = vmul.f32 %v3516, %v3516
    %v3561 = vsel %vm3519, %v3553, 0.0
    %3562 = vadd.xlane.f32.xlu0 %v3561
    %v3563 = vpop.xlane.xlu0 %3562
    %v3564 = vsel %vm3519, %v3554, 0.0
    %3565 = vadd.xlane.f32.xlu0 %v3564
    %v3566 = vpop.xlane.xlu0 %3565
    %v3567 = vsel %vm3519, %v3555, 0.0
    %3568 = vadd.xlane.f32.xlu0 %v3567
    %v3569 = vpop.xlane.xlu0 %3568
    %v3570 = vsel %vm3519, %v3556, 0.0
    %3571 = vadd.xlane.f32.xlu0 %v3570
    %v3572 = vpop.xlane.xlu0 %3571
    %v3573 = vsel %vm3519, %v3557, 0.0
    %3574 = vadd.xlane.f32.xlu0 %v3573
    %v3575 = vpop.xlane.xlu0 %3574
    %v3576 = vsel %vm3519, %v3558, 0.0
    %3577 = vadd.xlane.f32.xlu0 %v3576
    %v3578 = vpop.xlane.xlu0 %3577
    %v3579 = vsel %vm3519, %v3559, 0.0
    %3580 = vadd.xlane.f32.xlu0 %v3579
    %v3581 = vpop.xlane.xlu0 %3580
    %v3582 = vsel %vm3519, %v3560, 0.0
    %3583 = vadd.xlane.f32.xlu0 %v3582
    %v3584 = vpop.xlane.xlu0 %3583
    %v3585 = vmul.f32 %v3563, %v3544
    %v3586 = vmul.f32 %v3566, %v3544
    %v3587 = vmul.f32 %v3569, %v3544
    %v3588 = vmul.f32 %v3572, %v3544
    %v3589 = vmul.f32 %v3575, %v3544
    %v3590 = vmul.f32 %v3578, %v3544
    %v3591 = vmul.f32 %v3581, %v3544
    %v3592 = vmul.f32 %v3584, %v3544
    %v3593 = vmul.f32 %v3545, %v3545
    %v3594 = vmul.f32 %v3546, %v3546
    %v3595 = vmul.f32 %v3547, %v3547
    %v3596 = vmul.f32 %v3548, %v3548
    %v3597 = vmul.f32 %v3549, %v3549
    %v3598 = vmul.f32 %v3550, %v3550
    %v3599 = vmul.f32 %v3551, %v3551
    %v3600 = vmul.f32 %v3552, %v3552
    %v3601 = vsub.f32 %v3585, %v3593
    %v3602 = vsub.f32 %v3586, %v3594
    %v3603 = vsub.f32 %v3587, %v3595
    %v3604 = vsub.f32 %v3588, %v3596
    %v3605 = vsub.f32 %v3589, %v3597
    %v3606 = vsub.f32 %v3590, %v3598
    %v3607 = vsub.f32 %v3591, %v3599
    %v3608 = vsub.f32 %v3592, %v3600
    %v3609 = vmax.f32 %v3601, 0.0
    %v3610 = vmax.f32 %v3602, 0.0
    %v3611 = vmax.f32 %v3603, 0.0
    %v3612 = vmax.f32 %v3604, 0.0
    %v3613 = vmax.f32 %v3605, 0.0
    %v3614 = vmax.f32 %v3606, 0.0
    %v3615 = vmax.f32 %v3607, 0.0
    %v3616 = vmax.f32 %v3608, 0.0
    %v3617 = vld [vmem:[%s8] sm:$0xff]
    %v3618 = vld [vmem:[%s8 + $0x8] sm:$0xff]
    %v3619 = vld [vmem:[%s8 + $0x10] sm:$0xff]
    %v3620 = vld [vmem:[%s8 + $0x18] sm:$0xff]
    %v3621 = vld [vmem:[%s8 + $0x20] sm:$0xff]
    %v3622 = vld [vmem:[%s8 + $0x28] sm:$0xff]
    %v3623 = vld [vmem:[%s8 + $0x30] sm:$0xff]
    %v3624 = vld [vmem:[%s8 + $0x38] sm:$0xff]
    %v3625 = vsub.f32 %v3489, %v3545
    %v3626 = vsub.f32 %v3492, %v3546
    %v3627 = vsub.f32 %v3497, %v3547
    %v3628 = vsub.f32 %v3500, %v3548
    %v3629 = vsub.f32 %v3505, %v3549
    %v3630 = vsub.f32 %v3508, %v3550
    %v3631 = vsub.f32 %v3513, %v3551
    %v3632 = vsub.f32 %v3516, %v3552
    %v3633 = vadd.f32 %v3609, 1e-05
    %v3634 = vadd.f32 %v3610, 1e-05
    %v3635 = vadd.f32 %v3611, 1e-05
    %v3636 = vadd.f32 %v3612, 1e-05
    %v3637 = vadd.f32 %v3613, 1e-05
    %v3638 = vadd.f32 %v3614, 1e-05
    %v3639 = vadd.f32 %v3615, 1e-05
    %v3640 = vadd.f32 %v3616, 1e-05
    %v3641 = vrsqrt.pop %v3633
    %v3642 = vrsqrt.pop %v3634
    %v3643 = vrsqrt.pop %v3635
    %v3644 = vrsqrt.pop %v3636
    %v3645 = vrsqrt.pop %v3637
    %v3646 = vrsqrt.pop %v3638
    %v3647 = vrsqrt.pop %v3639
    %v3648 = vrsqrt.pop %v3640
    %v3649 = vmul.f32 %v3625, %v3641
    %v3650 = vmul.f32 %v3626, %v3642
    %v3651 = vmul.f32 %v3627, %v3643
    %v3652 = vmul.f32 %v3628, %v3644
    %v3653 = vmul.f32 %v3629, %v3645
    %v3654 = vmul.f32 %v3630, %v3646
    %v3655 = vmul.f32 %v3631, %v3647
    %v3656 = vmul.f32 %v3632, %v3648
    %3658 = vset.pattern.permute.xlu0 0
    %3659 = vperm.xlu0 %3658, %v3617
    %v3660 = vpop.permute.xlu0 %3659
    %3663 = vset.pattern.permute.xlu0 0
    %3664 = vperm.xlu0 %3663, %v3618
    %v3665 = vpop.permute.xlu0 %3664
    %3668 = vset.pattern.permute.xlu0 0
    %3669 = vperm.xlu0 %3668, %v3619
    %v3670 = vpop.permute.xlu0 %3669
    %3673 = vset.pattern.permute.xlu0 0
    %3674 = vperm.xlu0 %3673, %v3620
    %v3675 = vpop.permute.xlu0 %3674
    %3678 = vset.pattern.permute.xlu0 0
    %3679 = vperm.xlu0 %3678, %v3621
    %v3680 = vpop.permute.xlu0 %3679
    %3683 = vset.pattern.permute.xlu0 0
    %3684 = vperm.xlu0 %3683, %v3622
    %v3685 = vpop.permute.xlu0 %3684
    %3688 = vset.pattern.permute.xlu0 0
    %3689 = vperm.xlu0 %3688, %v3623
    %v3690 = vpop.permute.xlu0 %3689
    %3693 = vset.pattern.permute.xlu0 0
    %3694 = vperm.xlu0 %3693, %v3624
    %v3695 = vpop.permute.xlu0 %3694
    %v3697 = vmul.f32 %v3649, %v3660
    %v3698 = vmul.f32 %v3650, %v3665
    %v3699 = vmul.f32 %v3651, %v3670
    %v3700 = vmul.f32 %v3652, %v3675
    %v3701 = vmul.f32 %v3653, %v3680
    %v3702 = vmul.f32 %v3654, %v3685
    %v3703 = vmul.f32 %v3655, %v3690
    %v3704 = vmul.f32 %v3656, %v3695
    %3705 = vset.pattern.permute.xlu0 1
    %3706 = vperm.xlu0 %3705, %v3617
    %v3707 = vpop.permute.xlu0 %3706
    %3709 = vset.pattern.permute.xlu0 1
    %3710 = vperm.xlu0 %3709, %v3618
    %v3711 = vpop.permute.xlu0 %3710
    %3713 = vset.pattern.permute.xlu0 1
    %3714 = vperm.xlu0 %3713, %v3619
    %v3715 = vpop.permute.xlu0 %3714
    %3717 = vset.pattern.permute.xlu0 1
    %3718 = vperm.xlu0 %3717, %v3620
    %v3719 = vpop.permute.xlu0 %3718
    %3721 = vset.pattern.permute.xlu0 1
    %3722 = vperm.xlu0 %3721, %v3621
    %v3723 = vpop.permute.xlu0 %3722
    %3725 = vset.pattern.permute.xlu0 1
    %3726 = vperm.xlu0 %3725, %v3622
    %v3727 = vpop.permute.xlu0 %3726
    %3729 = vset.pattern.permute.xlu0 1
    %3730 = vperm.xlu0 %3729, %v3623
    %v3731 = vpop.permute.xlu0 %3730
    %3733 = vset.pattern.permute.xlu0 1
    %3734 = vperm.xlu0 %3733, %v3624
    %v3735 = vpop.permute.xlu0 %3734
    %v3737 = vadd.f32 %v3697, %v3707
    %v3738 = vadd.f32 %v3698, %v3711
    %v3739 = vadd.f32 %v3699, %v3715
    %v3740 = vadd.f32 %v3700, %v3719
    %v3741 = vadd.f32 %v3701, %v3723
    %v3742 = vadd.f32 %v3702, %v3727
    %v3743 = vadd.f32 %v3703, %v3731
    %v3744 = vadd.f32 %v3704, %v3735
    %v3745 = vmul.f32 %v3737, 0.2
    %v3746 = vmul.f32 %v3738, 0.2
    %v3747 = vmul.f32 %v3739, 0.2
    %v3748 = vmul.f32 %v3740, 0.2
    %v3749 = vmul.f32 %v3741, 0.2
    %v3750 = vmul.f32 %v3742, 0.2
    %v3751 = vmul.f32 %v3743, 0.2
    %v3752 = vmul.f32 %v3744, 0.2
    %v3753 = vmax.f32 %v3737, %v3745
    %v3754 = vmax.f32 %v3738, %v3746
    %v3755 = vmax.f32 %v3739, %v3747
    %v3756 = vmax.f32 %v3740, %v3748
    %v3757 = vmax.f32 %v3741, %v3749
    %v3758 = vmax.f32 %v3742, %v3750
    %v3759 = vmax.f32 %v3743, %v3751
    %v3760 = vmax.f32 %v3744, %v3752
    %v3761 = vld [vmem:[%s5] sm:$0xff]
    %v3762 = vld [vmem:[%s5 + $0x8] sm:$0xff]
    %v3763 = vld [vmem:[%s5 + $0x10] sm:$0xff]
    %v3764 = vld [vmem:[%s5 + $0x18] sm:$0xff]
    %v3765 = vld [vmem:[%s5 + $0x20] sm:$0xff]
    %v3766 = vld [vmem:[%s5 + $0x28] sm:$0xff]
    %v3767 = vld [vmem:[%s5 + $0x30] sm:$0xff]
    %v3768 = vld [vmem:[%s5 + $0x38] sm:$0xff]
    %v3769 = vmul.f32 %v3753, %v3761
    %v3770 = vmul.f32 %v3754, %v3762
    %v3771 = vmul.f32 %v3755, %v3763
    %v3772 = vmul.f32 %v3756, %v3764
    %v3773 = vmul.f32 %v3757, %v3765
    %v3774 = vmul.f32 %v3758, %v3766
    %v3775 = vmul.f32 %v3759, %v3767
    %v3776 = vmul.f32 %v3760, %v3768
    %v3777 = vsel %vm139, %v3769, 0.0
    %v3778 = vsel %vm139, %v3770, 0.0
    %v3779 = vadd.f32 %v3777, %v3778
    %v3780 = vsel %vm139, %v3771, 0.0
    %v3781 = vadd.f32 %v3779, %v3780
    %v3782 = vsel %vm139, %v3772, 0.0
    %v3783 = vadd.f32 %v3781, %v3782
    %v3784 = vsel %vm139, %v3773, 0.0
    %v3785 = vadd.f32 %v3783, %v3784
    %v3786 = vsel %vm139, %v3774, 0.0
    %v3787 = vadd.f32 %v3785, %v3786
    %v3788 = vsel %vm139, %v3775, 0.0
    %v3789 = vadd.f32 %v3787, %v3788
    %v3790 = vsel %vm139, %v3776, 0.0
    %v3791 = vadd.f32 %v3789, %v3790
    %v3792 = vrot.slane %v3791, 4
    %v3793 = vadd.f32 %v3791, %v3792
    %v3794 = vrot.slane %v3793, 2
    %v3795 = vadd.f32 %v3793, %v3794
    %v3796 = vrot.slane %v3795, 1
    %v3797 = vadd.f32 %v3795, %v3796
    %v3798 = vsel %vm139, %v3797, 0.0
    %3799 = vadd.xlane.f32.xlu0 %v3798
    %v3800 = vpop.xlane.xlu0 %3799
    %3809 = vrot.lane.b32.xlu0 %v3761, 16
    %v3810 = vpop.permute.xlu0 %3809
    %3811 = vrot.lane.b32.xlu0 %v3762, 16
    %v3812 = vpop.permute.xlu0 %3811
    %3813 = vrot.lane.b32.xlu0 %v3763, 16
    %v3814 = vpop.permute.xlu0 %3813
    %3815 = vrot.lane.b32.xlu0 %v3764, 16
    %v3816 = vpop.permute.xlu0 %3815
    %3817 = vrot.lane.b32.xlu0 %v3765, 16
    %v3818 = vpop.permute.xlu0 %3817
    %3819 = vrot.lane.b32.xlu0 %v3766, 16
    %v3820 = vpop.permute.xlu0 %3819
    %3821 = vrot.lane.b32.xlu0 %v3767, 16
    %v3822 = vpop.permute.xlu0 %3821
    %3823 = vrot.lane.b32.xlu0 %v3768, 16
    %v3824 = vpop.permute.xlu0 %3823
    %v3833 = vmul.f32 %v3753, %v3810
    %v3834 = vmul.f32 %v3754, %v3812
    %v3835 = vmul.f32 %v3755, %v3814
    %v3836 = vmul.f32 %v3756, %v3816
    %v3837 = vmul.f32 %v3757, %v3818
    %v3838 = vmul.f32 %v3758, %v3820
    %v3839 = vmul.f32 %v3759, %v3822
    %v3840 = vmul.f32 %v3760, %v3824
    %vm3841 = vcmask 261248
    %v3842 = vsel %vm3841, %v3833, 0.0
    %v3843 = vsel %vm3841, %v3834, 0.0
    %v3844 = vadd.f32 %v3842, %v3843
    %v3845 = vsel %vm3841, %v3835, 0.0
    %v3846 = vadd.f32 %v3844, %v3845
    %v3847 = vsel %vm3841, %v3836, 0.0
    %v3848 = vadd.f32 %v3846, %v3847
    %v3849 = vsel %vm3841, %v3837, 0.0
    %v3850 = vadd.f32 %v3848, %v3849
    %v3851 = vsel %vm3841, %v3838, 0.0
    %v3852 = vadd.f32 %v3850, %v3851
    %v3853 = vsel %vm3841, %v3839, 0.0
    %v3854 = vadd.f32 %v3852, %v3853
    %v3855 = vsel %vm3841, %v3840, 0.0
    %v3856 = vadd.f32 %v3854, %v3855
    %v3857 = vrot.slane %v3856, 4
    %v3858 = vadd.f32 %v3856, %v3857
    %v3859 = vrot.slane %v3858, 2
    %v3860 = vadd.f32 %v3858, %v3859
    %v3861 = vrot.slane %v3860, 1
    %v3862 = vadd.f32 %v3860, %v3861
    %3864 = vrot.lane.b32.xlu0 %v3862, 112
    %v3865 = vpop.permute.xlu0 %3864
    %v3867 = vsel %vm139, %v3865, 0.0
    %3868 = vadd.xlane.f32.xlu0 %v3867
    %v3869 = vpop.xlane.xlu0 %3868
    %v3870 = vsel %vm808, %v3800, %v3869
    %v3871 = vsub.f32 0.0, %v3870
    %v3872 = vmul.f32 %v3871, 1.442695
    %v3873 = vpow.pop %v3872
    %v3874 = vadd.f32 %v3873, 1.0
    %v3875 = vrcp.pop %v3874
    %v3876 = vmul.f32 1.0, %v3875
    %vm3877 = vcmask 8192
    %3878 = vst.msk [vmem:[#allocation2] sm:$0x1] %vm3877, %v3876
    // Predicated region
    $region46: #{discriminator_forward.1} parent=1 // pred_check
      _
    $region47: #{discriminator_forward.1} parent=1 // pred_check_branch
      %3880 = sbr.rel (0) target = $region49
    $region48: #{discriminator_forward.1} parent=1 // pred_region
      %s3882 = ssub.s32 16, 16
      %3883 = vsyncadd [#allocation3], %s3882
      %s3885 = sshll.u32 [#allocation2], 4
      %s3886 = int_to_ptr.vmem [resolvable:$true] %s3885
      %3888 = dma.vmem_to_hbm [thread:$0]  %s3886, 16, %s11, [#allocation3]
    $region49: #{discriminator_forward.1} parent=1 // pred_fallthru
      _
    // Predicated region
    $region50: #{discriminator_forward.1} parent=1 // pred_check
      _
    $region51: #{discriminator_forward.1} parent=1 // pred_check_branch
      %3890 = sbr.rel (0) target = $region53
    $region52: #{discriminator_forward.1} parent=1 // pred_region
      %3891 = dma.done [#allocation3], 16
    $region53: #{discriminator_forward.1} parent=1 // pred_fallthru
      _
    %3892 = vsyncpa [#allocation3], 1

</llo_original>
